<compile_context>
chip_gen: v7x
topology: tpu7x:2x2x1
jax: 0.10.0
libtpu: 0.0.40
codegen_flags: <defaults>
</compile_context>

<pallas_src>
import functools

import jax
import jax.numpy as jnp
from jax import lax
from jax.experimental import pallas as pl
from jax.experimental.pallas import tpu as pltpu

_EPS = 1e-5      # torch.nn.InstanceNorm2d default eps (affine=False)
_LANE = 128      # TPU lane width


def _shift_down(a, k):
    """result[i] = a[i - k] (wrap-around rows are fixed up by the caller)."""
    return jnp.concatenate([a[-k:], a[:-k]], axis=0)


def _shift_up(a, k):
    """result[i] = a[i + k] (wrap-around rows are fixed up by the caller)."""
    return jnp.concatenate([a[k:], a[:k]], axis=0)


def _resblock_kernel(x_ref, w1_ref, w2_ref, o_ref, *, H, W):
    # x_ref block: (1, H*W, Cp) f32; weights: (9*Cp, Cp) bf16.
    x = x_ref[0]                                   # (HW, Cp) f32
    HW = H * W
    inv_hw = 1.0 / HW

    # Pixel-index masks for the reflection fix-ups (flat index i = y*W + x).
    pix = lax.broadcasted_iota(jnp.int32, (HW, 1), 0)
    col = pix % W
    first_col = col == 0
    last_col = col == (W - 1)
    first_row = pix < W                            # y == 0
    last_row = pix >= (H - 1) * W                  # y == H-1

    def im2col(a):
        # a: (HW, C) f32 -> (HW, 9*C) bf16 patch matrix for a 3x3 conv with
        # ReflectionPad2d(1).  Feature order is (kh, kw, c), matching the
        # (3, 3, C, Cout) -> (9*C, Cout) weight reshape done in the wrapper.
        a_m1 = _shift_down(a, 1)                   # a[y, x-1]  (x >= 1)
        a_p1 = _shift_up(a, 1)                     # a[y, x+1]  (x <= W-2)
        left = jnp.where(first_col, a_p1, a_m1)    # x == 0   -> a[y, 1]
        right = jnp.where(last_col, a_m1, a_p1)    # x == W-1 -> a[y, W-2]
        aw = jnp.concatenate([left, a, right], axis=-1)        # (HW, 3C)

        aw_mW = _shift_down(aw, W)                 # row y-1    (y >= 1)
        aw_pW = _shift_up(aw, W)                   # row y+1    (y <= H-2)
        up = jnp.where(first_row, aw_pW, aw_mW)    # y == 0   -> row 1
        down = jnp.where(last_row, aw_mW, aw_pW)   # y == H-1 -> row H-2
        patches = jnp.concatenate([up, aw, down], axis=-1)     # (HW, 9C)
        return patches.astype(jnp.bfloat16)        # bf16 operands for the MXU

    def instance_norm(y):
        # One-pass per-channel stats over spatial (biased var, eps=1e-5,
        # affine=False) -- matches torch.nn.InstanceNorm2d defaults.
        s1 = jnp.sum(y, axis=0, keepdims=True)
        s2 = jnp.sum(y * y, axis=0, keepdims=True)
        mean = s1 * inv_hw
        var = jnp.maximum(s2 * inv_hw - mean * mean, 0.0)
        return (y - mean) * lax.rsqrt(var + _EPS)

    # conv1 -> InstanceNorm -> ReLU   (single im2col matmul, f32 accumulate)
    h = jnp.dot(im2col(x), w1_ref[...], preferred_element_type=jnp.float32)
    h = jnp.maximum(instance_norm(h), 0.0)

    # conv2 -> InstanceNorm
    h2 = jnp.dot(im2col(h), w2_ref[...], preferred_element_type=jnp.float32)
    h2 = instance_norm(h2)

    # residual add -- lane-dense store (last dim = Cp, multiple of 128)
    o_ref[0] = x + h2


def resnet_block(x_nchw, w1, b1, w2, b2):
    """CycleGAN resnet block forward.

    x_nchw: (N, C, H, W) f32.  w1/w2: (3, 3, Cin, Cout) with Cin == Cout.
    b1/b2 are accepted for parity with nn.Conv2d but are not sent to the
    kernel: with InstanceNorm2d(affine=False) directly after each conv a
    per-channel bias is exactly cancelled by the mean subtraction.
    """
    del b1, b2
    x = jnp.transpose(x_nchw, (0, 2, 3, 1)).astype(jnp.float32)   # NHWC
    N, H, W, C = x.shape
    assert w1.shape[:2] == (3, 3) and w2.shape[:2] == (3, 3)
    assert w1.shape[2] == C and w1.shape[3] == C
    assert w2.shape[2] == C and w2.shape[3] == C

    # Pad channels to a lane-dense multiple of 128.  Zero weights/activations
    # in the padded channels stay exactly zero through conv/IN/ReLU/residual,
    # so slicing them off at the end is exact.
    Cp = ((C + _LANE - 1) // _LANE) * _LANE
    pad_c = Cp - C

    x_flat = jnp.pad(x, ((0, 0), (0, 0), (0, 0), (0, pad_c)))
    x_flat = x_flat.reshape(N, H * W, Cp)

    def prep_w(w):
        w = jnp.pad(w.astype(jnp.float32),
                    ((0, 0), (0, 0), (0, pad_c), (0, pad_c)))
        # (3, 3, Cp, Cp) -> (9*Cp, Cp); row order (kh, kw, cin) matches the
        # im2col feature order built in the kernel.  bf16 halves weight DMA;
        # the matmul still accumulates in f32.
        return w.reshape(9 * Cp, Cp).astype(jnp.bfloat16)

    w1p, w2p = prep_w(w1), prep_w(w2)

    kernel = functools.partial(_resblock_kernel, H=H, W=W)

    out_flat = pl.pallas_call(
        kernel,
        out_shape=jax.ShapeDtypeStruct((N, H * W, Cp), jnp.float32),
        grid_spec=pltpu.PrefetchScalarGridSpec(
            num_scalar_prefetch=0,
            grid=(N,),
            in_specs=[
                pl.BlockSpec((1, H * W, Cp), lambda b: (b, 0, 0)),
                # Constant index maps -> weights stay resident in VMEM and
                # are not re-DMA'd per batch step.
                pl.BlockSpec((9 * Cp, Cp), lambda b: (0, 0)),
                pl.BlockSpec((9 * Cp, Cp), lambda b: (0, 0)),
            ],
            out_specs=pl.BlockSpec((1, H * W, Cp), lambda b: (b, 0, 0)),
        ),
        compiler_params=pltpu.CompilerParams(
            dimension_semantics=("parallel",),      # shard batch over TCs
            vmem_limit_bytes=48 * 1024 * 1024,
        ),
    )(x_flat, w1p, w2p)

    # TODO(synk): for large CycleGAN shapes (C=256, 64^2+ spatial) tile the
    # spatial axis with cross-tile InstanceNorm stat accumulation so the
    # per-image live set fits v7x's 64 MiB VMEM and both TCs are used when
    # N == 1; at the shapes exercised here whole-image-per-step fits easily.
    out = out_flat.reshape(N, H, W, Cp)[..., :C]
    return jnp.transpose(out, (0, 3, 1, 2))          # back to NCHW


def _reference(x_nchw, w1, b1, w2, b2):
    """Pure-JAX f32 reference mirroring the PyTorch module exactly."""
    x = jnp.transpose(x_nchw, (0, 2, 3, 1)).astype(jnp.float32)   # NHWC

    def conv3x3_reflect(a, w, b):
        ap = jnp.pad(a, ((0, 0), (1, 1), (1, 1), (0, 0)), mode="reflect")
        y = lax.conv_general_dilated(
            ap, w, window_strides=(1, 1), padding="VALID",
            dimension_numbers=("NHWC", "HWIO", "NHWC"))
        return y + b

    def inorm(a):
        mu = jnp.mean(a, axis=(1, 2), keepdims=True)
        var = jnp.mean((a - mu) ** 2, axis=(1, 2), keepdims=True)
        return (a - mu) * lax.rsqrt(var + _EPS)

    h = jnp.maximum(inorm(conv3x3_reflect(x, w1, b1)), 0.0)
    h2 = inorm(conv3x3_reflect(h, w2, b2))
    return jnp.transpose(x + h2, (0, 3, 1, 2))


def _init_conv_params(key, cin, cout, k):
    # PyTorch Conv2d default init: U(-1/sqrt(fan_in), 1/sqrt(fan_in)).
    kw_, kb_ = jax.random.split(key)
    fan_in = cin * k * k
    bound = 1.0 / (fan_in ** 0.5)
    w = jax.random.uniform(kw_, (k, k, cin, cout), jnp.float32, -bound, bound)
    b = jax.random.uniform(kb_, (cout,), jnp.float32, -bound, bound)
    return w, b


if __name__ == "__main__":
    key = jax.random.PRNGKey(0)
    kx, k1, k2 = jax.random.split(key, 3)

    N, C, H, W = 2, 4, 16, 16
    x = jax.random.normal(kx, (N, C, H, W), jnp.float32)

    w1, b1 = _init_conv_params(k1, C, C, 3)
    w2, b2 = _init_conv_params(k2, C, C, 3)

    out = resnet_block(x, w1, b1, w2, b2)
    jax.block_until_ready(out)
    assert out.shape == (N, C, H, W)

    # Loose tolerance: conv operands are cast to bf16 for the MXU (f32
    # accumulation); a structural bug would produce O(1) errors.
    ref = _reference(x, w1, b1, w2, b2)
    err = float(jnp.max(jnp.abs(out - ref)))
    assert err < 1e-1, f"max abs error vs reference: {err}"

    print("KERNEL_OK")
</pallas_src>

<mosaic_0001>
module attributes {stable_mosaic.version = 11 : i64} {
  func.func @_resblock_kernel(%arg0: i32, %arg1: memref<1x256x128xf32, #tpu.memory_space<vmem>>, %arg2: memref<1152x128xbf16, #tpu.memory_space<vmem>>, %arg3: memref<1152x128xbf16, #tpu.memory_space<vmem>>, %arg4: memref<1x256x128xf32, #tpu.memory_space<vmem>>) attributes {dimension_semantics = [#tpu.dimension_semantics<parallel>], iteration_bounds = array<i64: 2>, scalar_prefetch = 0 : i64, scratch_operands = 0 : i64, tpu.core_type = #tpu.core_type<tc>, window_params = [{transform_indices = @transform_0, window_bounds = array<i64: 1, 256, 128>}, {pipeline_mode = #tpu.pipeline_mode<synchronous>, transform_indices = @transform_1, window_bounds = array<i64: 1152, 128>}, {pipeline_mode = #tpu.pipeline_mode<synchronous>, transform_indices = @transform_2, window_bounds = array<i64: 1152, 128>}, {transform_indices = @transform_3, window_bounds = array<i64: 1, 256, 128>}]} {
    %c0 = arith.constant 0 : index
    %c0_0 = arith.constant 0 : index
    %c0_1 = arith.constant 0 : index
    %0 = vector.load %arg1[%c0, %c0_0, %c0_1] : memref<1x256x128xf32, #tpu.memory_space<vmem>>, vector<1x256x128xf32>
    %1 = vector.shape_cast %0 : vector<1x256x128xf32> to vector<256x128xf32>
    %2 = tpu.iota {dimensions = array<i32: 0>} : vector<256x1xi32>
    %c16_i32 = arith.constant 16 : i32
    %c0_i32 = arith.constant 0 : i32
    %3 = arith.cmpi eq, %c16_i32, %c0_i32 : i32
    %c1_i32 = arith.constant 1 : i32
    %4 = arith.select %3, %c1_i32, %c16_i32 : i32
    %5 = vector.broadcast %4 : i32 to vector<256x1xi32>
    %6 = arith.remsi %2, %5 : vector<256x1xi32>
    %c0_i32_2 = arith.constant 0 : i32
    %7 = vector.broadcast %c0_i32_2 : i32 to vector<256x1xi32>
    %8 = arith.cmpi ne, %6, %7 : vector<256x1xi32>
    %c0_i32_3 = arith.constant 0 : i32
    %9 = vector.broadcast %c0_i32_3 : i32 to vector<256x1xi32>
    %10 = arith.cmpi slt, %6, %9 : vector<256x1xi32>
    %c0_i32_4 = arith.constant 0 : i32
    %11 = arith.cmpi slt, %4, %c0_i32_4 : i32
    %12 = vector.broadcast %11 : i1 to vector<256x1xi1>
    %13 = vector.broadcast %12 : vector<256x1xi1> to vector<256x1xi1>
    %14 = arith.xori %10, %13 : vector<256x1xi1>
    %15 = arith.andi %14, %8 : vector<256x1xi1>
    %16 = vector.broadcast %4 : i32 to vector<256x1xi32>
    %17 = arith.addi %6, %16 : vector<256x1xi32>
    %18 = arith.select %15, %17, %6 : vector<256x1xi1>, vector<256x1xi32>
    %c0_i32_5 = arith.constant 0 : i32
    %19 = vector.broadcast %c0_i32_5 : i32 to vector<256x1xi32>
    %20 = arith.cmpi eq, %18, %19 : vector<256x1xi32>
    %c15_i32 = arith.constant 15 : i32
    %21 = vector.broadcast %c15_i32 : i32 to vector<256x1xi32>
    %22 = arith.cmpi eq, %18, %21 : vector<256x1xi32>
    %c16_i32_6 = arith.constant 16 : i32
    %23 = vector.broadcast %c16_i32_6 : i32 to vector<256x1xi32>
    %24 = arith.cmpi slt, %2, %23 : vector<256x1xi32>
    %c240_i32 = arith.constant 240 : i32
    %25 = vector.broadcast %c240_i32 : i32 to vector<256x1xi32>
    %26 = arith.cmpi sge, %2, %25 : vector<256x1xi32>
    %27 = vector.extract_strided_slice %1 {offsets = [255, 0], sizes = [1, 128], strides = [1, 1]} : vector<256x128xf32> to vector<1x128xf32>
    %28 = vector.extract_strided_slice %1 {offsets = [0, 0], sizes = [255, 128], strides = [1, 1]} : vector<256x128xf32> to vector<255x128xf32>
    %29 = tpu.concatenate %27, %28 in 0 : vector<1x128xf32>, vector<255x128xf32> -> vector<256x128xf32>
    %30 = vector.extract_strided_slice %1 {offsets = [1, 0], sizes = [255, 128], strides = [1, 1]} : vector<256x128xf32> to vector<255x128xf32>
    %31 = vector.extract_strided_slice %1 {offsets = [0, 0], sizes = [1, 128], strides = [1, 1]} : vector<256x128xf32> to vector<1x128xf32>
    %32 = tpu.concatenate %30, %31 in 0 : vector<255x128xf32>, vector<1x128xf32> -> vector<256x128xf32>
    %33 = vector.shape_cast %20 : vector<256x1xi1> to vector<256x1xi1>
    %34 = vector.broadcast %33 : vector<256x1xi1> to vector<256x128xi1>
    %35 = arith.select %34, %32, %29 : vector<256x128xi1>, vector<256x128xf32>
    %36 = vector.shape_cast %22 : vector<256x1xi1> to vector<256x1xi1>
    %37 = vector.broadcast %36 : vector<256x1xi1> to vector<256x128xi1>
    %38 = arith.select %37, %29, %32 : vector<256x128xi1>, vector<256x128xf32>
    %39 = tpu.concatenate %35, %1, %38 in 1 : vector<256x128xf32>, vector<256x128xf32>, vector<256x128xf32> -> vector<256x384xf32>
    %40 = vector.extract_strided_slice %39 {offsets = [240, 0], sizes = [16, 384], strides = [1, 1]} : vector<256x384xf32> to vector<16x384xf32>
    %41 = vector.extract_strided_slice %39 {offsets = [0, 0], sizes = [240, 384], strides = [1, 1]} : vector<256x384xf32> to vector<240x384xf32>
    %42 = tpu.concatenate %40, %41 in 0 : vector<16x384xf32>, vector<240x384xf32> -> vector<256x384xf32>
    %43 = vector.extract_strided_slice %39 {offsets = [16, 0], sizes = [240, 384], strides = [1, 1]} : vector<256x384xf32> to vector<240x384xf32>
    %44 = vector.extract_strided_slice %39 {offsets = [0, 0], sizes = [16, 384], strides = [1, 1]} : vector<256x384xf32> to vector<16x384xf32>
    %45 = tpu.concatenate %43, %44 in 0 : vector<240x384xf32>, vector<16x384xf32> -> vector<256x384xf32>
    %46 = vector.shape_cast %24 : vector<256x1xi1> to vector<256x1xi1>
    %47 = vector.broadcast %46 : vector<256x1xi1> to vector<256x384xi1>
    %48 = arith.select %47, %45, %42 : vector<256x384xi1>, vector<256x384xf32>
    %49 = vector.shape_cast %26 : vector<256x1xi1> to vector<256x1xi1>
    %50 = vector.broadcast %49 : vector<256x1xi1> to vector<256x384xi1>
    %51 = arith.select %50, %42, %45 : vector<256x384xi1>, vector<256x384xf32>
    %52 = tpu.concatenate %48, %39, %51 in 1 : vector<256x384xf32>, vector<256x384xf32>, vector<256x384xf32> -> vector<256x1152xf32>
    %53 = arith.truncf %52 : vector<256x1152xf32> to vector<256x1152xbf16>
    %c0_7 = arith.constant 0 : index
    %c0_8 = arith.constant 0 : index
    %54 = vector.load %arg2[%c0_7, %c0_8] : memref<1152x128xbf16, #tpu.memory_space<vmem>>, vector<1152x128xbf16>
    %cst = arith.constant dense<0.000000e+00> : vector<256x128xf32>
    %55 = tpu.matmul %53, %54, %cst {dimension_numbers = #tpu.dot_dimension_numbers<[1], [0], [0], [1], [0, 0, 1, 1], [], []>} : vector<256x1152xbf16>, vector<1152x128xbf16>, vector<256x128xf32> -> vector<256x128xf32>
    %cst_9 = arith.constant dense<0.000000e+00> : vector<128xf32>
    %56 = vector.multi_reduction <add>, %55, %cst_9 [0] : vector<256x128xf32> to vector<128xf32>
    %57 = vector.shape_cast %56 : vector<128xf32> to vector<1x128xf32>
    %58 = arith.mulf %55, %55 : vector<256x128xf32>
    %cst_10 = arith.constant dense<0.000000e+00> : vector<128xf32>
    %59 = vector.multi_reduction <add>, %58, %cst_10 [0] : vector<256x128xf32> to vector<128xf32>
    %60 = vector.shape_cast %59 : vector<128xf32> to vector<1x128xf32>
    %cst_11 = arith.constant 3.906250e-03 : f32
    %61 = vector.broadcast %cst_11 : f32 to vector<1x128xf32>
    %62 = arith.mulf %57, %61 : vector<1x128xf32>
    %cst_12 = arith.constant 3.906250e-03 : f32
    %63 = vector.broadcast %cst_12 : f32 to vector<1x128xf32>
    %64 = arith.mulf %60, %63 : vector<1x128xf32>
    %65 = arith.mulf %62, %62 : vector<1x128xf32>
    %66 = arith.subf %64, %65 : vector<1x128xf32>
    %cst_13 = arith.constant 0.000000e+00 : f32
    %67 = vector.broadcast %cst_13 : f32 to vector<1x128xf32>
    %68 = arith.maximumf %66, %67 : vector<1x128xf32>
    %69 = vector.broadcast %62 : vector<1x128xf32> to vector<256x128xf32>
    %70 = arith.subf %55, %69 : vector<256x128xf32>
    %cst_14 = arith.constant 9.99999974E-6 : f32
    %71 = vector.broadcast %cst_14 : f32 to vector<1x128xf32>
    %72 = arith.addf %68, %71 : vector<1x128xf32>
    %73 = math.rsqrt %72 : vector<1x128xf32>
    %74 = vector.broadcast %73 : vector<1x128xf32> to vector<256x128xf32>
    %75 = arith.mulf %70, %74 : vector<256x128xf32>
    %cst_15 = arith.constant 0.000000e+00 : f32
    %76 = vector.broadcast %cst_15 : f32 to vector<256x128xf32>
    %77 = arith.maximumf %75, %76 : vector<256x128xf32>
    %78 = vector.extract_strided_slice %77 {offsets = [255, 0], sizes = [1, 128], strides = [1, 1]} : vector<256x128xf32> to vector<1x128xf32>
    %79 = vector.extract_strided_slice %77 {offsets = [0, 0], sizes = [255, 128], strides = [1, 1]} : vector<256x128xf32> to vector<255x128xf32>
    %80 = tpu.concatenate %78, %79 in 0 : vector<1x128xf32>, vector<255x128xf32> -> vector<256x128xf32>
    %81 = vector.extract_strided_slice %77 {offsets = [1, 0], sizes = [255, 128], strides = [1, 1]} : vector<256x128xf32> to vector<255x128xf32>
    %82 = vector.extract_strided_slice %77 {offsets = [0, 0], sizes = [1, 128], strides = [1, 1]} : vector<256x128xf32> to vector<1x128xf32>
    %83 = tpu.concatenate %81, %82 in 0 : vector<255x128xf32>, vector<1x128xf32> -> vector<256x128xf32>
    %84 = vector.shape_cast %20 : vector<256x1xi1> to vector<256x1xi1>
    %85 = vector.broadcast %84 : vector<256x1xi1> to vector<256x128xi1>
    %86 = arith.select %85, %83, %80 : vector<256x128xi1>, vector<256x128xf32>
    %87 = vector.shape_cast %22 : vector<256x1xi1> to vector<256x1xi1>
    %88 = vector.broadcast %87 : vector<256x1xi1> to vector<256x128xi1>
    %89 = arith.select %88, %80, %83 : vector<256x128xi1>, vector<256x128xf32>
    %90 = tpu.concatenate %86, %77, %89 in 1 : vector<256x128xf32>, vector<256x128xf32>, vector<256x128xf32> -> vector<256x384xf32>
    %91 = vector.extract_strided_slice %90 {offsets = [240, 0], sizes = [16, 384], strides = [1, 1]} : vector<256x384xf32> to vector<16x384xf32>
    %92 = vector.extract_strided_slice %90 {offsets = [0, 0], sizes = [240, 384], strides = [1, 1]} : vector<256x384xf32> to vector<240x384xf32>
    %93 = tpu.concatenate %91, %92 in 0 : vector<16x384xf32>, vector<240x384xf32> -> vector<256x384xf32>
    %94 = vector.extract_strided_slice %90 {offsets = [16, 0], sizes = [240, 384], strides = [1, 1]} : vector<256x384xf32> to vector<240x384xf32>
    %95 = vector.extract_strided_slice %90 {offsets = [0, 0], sizes = [16, 384], strides = [1, 1]} : vector<256x384xf32> to vector<16x384xf32>
    %96 = tpu.concatenate %94, %95 in 0 : vector<240x384xf32>, vector<16x384xf32> -> vector<256x384xf32>
    %97 = vector.shape_cast %24 : vector<256x1xi1> to vector<256x1xi1>
    %98 = vector.broadcast %97 : vector<256x1xi1> to vector<256x384xi1>
    %99 = arith.select %98, %96, %93 : vector<256x384xi1>, vector<256x384xf32>
    %100 = vector.shape_cast %26 : vector<256x1xi1> to vector<256x1xi1>
    %101 = vector.broadcast %100 : vector<256x1xi1> to vector<256x384xi1>
    %102 = arith.select %101, %93, %96 : vector<256x384xi1>, vector<256x384xf32>
    %103 = tpu.concatenate %99, %90, %102 in 1 : vector<256x384xf32>, vector<256x384xf32>, vector<256x384xf32> -> vector<256x1152xf32>
    %104 = arith.truncf %103 : vector<256x1152xf32> to vector<256x1152xbf16>
    %c0_16 = arith.constant 0 : index
    %c0_17 = arith.constant 0 : index
    %105 = vector.load %arg3[%c0_16, %c0_17] : memref<1152x128xbf16, #tpu.memory_space<vmem>>, vector<1152x128xbf16>
    %cst_18 = arith.constant dense<0.000000e+00> : vector<256x128xf32>
    %106 = tpu.matmul %104, %105, %cst_18 {dimension_numbers = #tpu.dot_dimension_numbers<[1], [0], [0], [1], [0, 0, 1, 1], [], []>} : vector<256x1152xbf16>, vector<1152x128xbf16>, vector<256x128xf32> -> vector<256x128xf32>
    %cst_19 = arith.constant dense<0.000000e+00> : vector<128xf32>
    %107 = vector.multi_reduction <add>, %106, %cst_19 [0] : vector<256x128xf32> to vector<128xf32>
    %108 = vector.shape_cast %107 : vector<128xf32> to vector<1x128xf32>
    %109 = arith.mulf %106, %106 : vector<256x128xf32>
    %cst_20 = arith.constant dense<0.000000e+00> : vector<128xf32>
    %110 = vector.multi_reduction <add>, %109, %cst_20 [0] : vector<256x128xf32> to vector<128xf32>
    %111 = vector.shape_cast %110 : vector<128xf32> to vector<1x128xf32>
    %cst_21 = arith.constant 3.906250e-03 : f32
    %112 = vector.broadcast %cst_21 : f32 to vector<1x128xf32>
    %113 = arith.mulf %108, %112 : vector<1x128xf32>
    %cst_22 = arith.constant 3.906250e-03 : f32
    %114 = vector.broadcast %cst_22 : f32 to vector<1x128xf32>
    %115 = arith.mulf %111, %114 : vector<1x128xf32>
    %116 = arith.mulf %113, %113 : vector<1x128xf32>
    %117 = arith.subf %115, %116 : vector<1x128xf32>
    %cst_23 = arith.constant 0.000000e+00 : f32
    %118 = vector.broadcast %cst_23 : f32 to vector<1x128xf32>
    %119 = arith.maximumf %117, %118 : vector<1x128xf32>
    %120 = vector.broadcast %113 : vector<1x128xf32> to vector<256x128xf32>
    %121 = arith.subf %106, %120 : vector<256x128xf32>
    %cst_24 = arith.constant 9.99999974E-6 : f32
    %122 = vector.broadcast %cst_24 : f32 to vector<1x128xf32>
    %123 = arith.addf %119, %122 : vector<1x128xf32>
    %124 = math.rsqrt %123 : vector<1x128xf32>
    %125 = vector.broadcast %124 : vector<1x128xf32> to vector<256x128xf32>
    %126 = arith.mulf %121, %125 : vector<256x128xf32>
    %127 = arith.addf %1, %126 : vector<256x128xf32>
    %c0_25 = arith.constant 0 : index
    %c0_26 = arith.constant 0 : index
    %c0_27 = arith.constant 0 : index
    %128 = vector.load %arg4[%c0_25, %c0_26, %c0_27] : memref<1x256x128xf32, #tpu.memory_space<vmem>>, vector<1x256x128xf32>
    %129 = vector.shape_cast %128 : vector<1x256x128xf32> to vector<256x128xf32>
    %130 = vector.shape_cast %127 : vector<256x128xf32> to vector<1x256x128xf32>
    tpu.vector_store %arg4[%c0_25, %c0_26, %c0_27], %130 {strides = array<i32>} : memref<1x256x128xf32, #tpu.memory_space<vmem>>, vector<1x256x128xf32>,
    return
  }
  func.func @transform_0(%arg0: i32) -> (i32, i32, i32) {
    %c0_i32 = arith.constant 0 : i32
    %c0_i32_0 = arith.constant 0 : i32
    %c0_i32_1 = arith.constant 0 : i32
    return %arg0, %c0_i32, %c0_i32_0 : i32, i32, i32
  }
  func.func @transform_1(%arg0: i32) -> (i32, i32) {
    %c0_i32 = arith.constant 0 : i32
    %c0_i32_0 = arith.constant 0 : i32
    %c0_i32_1 = arith.constant 0 : i32
    return %c0_i32, %c0_i32_0 : i32, i32
  }
  func.func @transform_2(%arg0: i32) -> (i32, i32) {
    %c0_i32 = arith.constant 0 : i32
    %c0_i32_0 = arith.constant 0 : i32
    %c0_i32_1 = arith.constant 0 : i32
    return %c0_i32, %c0_i32_0 : i32, i32
  }
  func.func @transform_3(%arg0: i32) -> (i32, i32, i32) {
    %c0_i32 = arith.constant 0 : i32
    %c0_i32_0 = arith.constant 0 : i32
    %c0_i32_1 = arith.constant 0 : i32
    return %arg0, %c0_i32, %c0_i32_0 : i32, i32, i32
  }
}

</mosaic_0001>

<llo_original>
// kernel: tpu_custom_call.1
$region0: #{tpu_custom_call.1}
  #allocation0 [shape = 'u32[]', space=smem, size = 0x4, offset = 0x4, fixed_abs, tag = 'smem constant byte address 0x4 - core index']
  #allocation1 [shape = 'u32[144,128]{1,0:T(1,128)}', space=vmem, size = 0x12000, scoped, tag = 'internal scratch']
  %s0 = inlined_call_operand.hbm [shape: f32[2,256,128], index: 0, kind: input, shape index: {}]
  %s1 = inlined_call_operand.hbm [shape: bf16[1152,128], index: 1, kind: input, shape index: {}]
  %s2 = inlined_call_operand.hbm [shape: bf16[1152,128], index: 2, kind: input, shape index: {}]
  %s3 = inlined_call_operand.hbm [shape: f32[2,256,128], index: 3, kind: output, shape index: {}]
  %s4 = sld [smem:[#allocation0]]
  $region57: #{tpu_custom_call.1} parent=0
    _
  %s6 = ssub.s32 1, %s4
  %s7 = scalar_select 0, %s6, %s4
  $region1: #{tpu_custom_call.1} parent=0
    #allocation2 [shape = 'u8[262144]{0}', space=vmem, size = 0x40000, scoped, tag = 'input window, operand 0']
    #allocation3 [shape = 's32[2]{0}', space=sflag, size = 0x8, scoped, tag = 'scoped memory for tpu_custom_call.1']
    #allocation4 [shape = 's32[2]{0}', space=sflag, size = 0x8, scoped, tag = 'scoped memory for tpu_custom_call.1']
    #allocation5 [shape = 'u8[294912]{0}', space=vmem, size = 0x48000, scoped, tag = 'input window, operand 1, single buffered']
    #allocation6 [shape = 's32[1]{0}', space=sflag, size = 0x4, scoped, tag = 'scoped memory for tpu_custom_call.1']
    #allocation7 [shape = 'u8[294912]{0}', space=vmem, size = 0x48000, scoped, tag = 'input window, operand 2, single buffered']
    #allocation8 [shape = 'u8[262144]{0}', space=vmem, size = 0x40000, scoped, tag = 'output window, operand 0']
    %8 = vsyncpa [#allocation3], 0
    %s9 = scalar_lea.sflag [#allocation3], 1
    %10 = vsyncpa %s9, 0
    %11 = vsyncpa [#allocation6], 0
    %12 = vsyncpa [#allocation4], 0
    %s13 = scalar_lea.sflag [#allocation4], 1
    %14 = vsyncpa %s13, 0
    loop: start=0, step=1, limit=4
    $region2: #{tpu_custom_call.1} parent=1 // loop_pre_header
      _
    $region3: #{tpu_custom_call.1} parent=1 // loop_header
      %s16 = sphi 0, %s20
      %p17 = scmp.ge.s32.totalorder %s16, 4
      %s26 = sphi 0, %s28
      %s29 = sphi 0, %s26
      %s30 = sphi 0, %s29
      %s46 = sphi 0, %s30
      %s50 = sphi 0, %s50
      %s52 = sphi 0, %s50
      %s53 = sphi 0, %s52
      %s67 = sphi 0, %s53
      %s71 = sphi 0, %s71
      %s73 = sphi 0, %s71
      %s74 = sphi 0, %s73
      %s88 = sphi 0, %s74
      %s94 = sphi 0, %s96
      %s97 = sphi 0, %s94
      %s98 = sphi 0, %s97
      %s114 = sphi 0, %s98
    $region4: #{tpu_custom_call.1} parent=1 // loop_header_branch
      %19 = sbr.rel (%p17) target = $region8
    $region5: #{tpu_custom_call.1} parent=1 // loop_body
      %s21 = ssub.s32 %s16, 1
      %s22 = ssub.s32 %s16, 2
      %s23 = sadd.s32 %s16, 1
      %s24 = ssub.s32 %s16, %s23
      %p25 = scmp.eq.s32.totalorder %s24, 0
      %s27 = sadd.s32 %s26, 1
      %s28 = scalar_select %p25, %s26, %s27
      %p31 = pneg %p25
      %p32 = scmp.eq.s32.totalorder %s16, 1
      %p33 = por %p31, %p32
      %p34 = scmp.ne.s32.totalorder %s26, %s29
      %p35 = scmp.eq.s32.totalorder %s16, 0
      %p36 = por %p34, %p35
      %p37 = scmp.ne.s32.totalorder %s26, %s29
      %p38 = scmp.eq.s32.totalorder %s21, 1
      %p39 = por %p37, %p38
      %p40 = scmp.ne.s32.totalorder %s29, %s30
      %p41 = scmp.eq.s32.totalorder %s21, 0
      %p42 = por %p40, %p41
      %p43 = scmp.ne.s32.totalorder %s29, %s30
      %p44 = scmp.eq.s32.totalorder %s22, 1
      %p45 = por %p43, %p44
      %p47 = scmp.ne.s32.totalorder %s30, %s46
      %p48 = scmp.eq.s32.totalorder %s22, 0
      %p49 = por %p47, %p48
      %s51 = sadd.s32 %s50, 1
      %p54 = scmp.eq.s32.totalorder %s16, 1
      %p55 = scmp.ne.s32.totalorder %s50, %s52
      %p56 = scmp.eq.s32.totalorder %s16, 0
      %p57 = por %p55, %p56
      %p58 = scmp.ne.s32.totalorder %s50, %s52
      %p59 = scmp.eq.s32.totalorder %s21, 1
      %p60 = por %p58, %p59
      %p61 = scmp.ne.s32.totalorder %s52, %s53
      %p62 = scmp.eq.s32.totalorder %s21, 0
      %p63 = por %p61, %p62
      %p64 = scmp.ne.s32.totalorder %s52, %s53
      %p65 = scmp.eq.s32.totalorder %s22, 1
      %p66 = por %p64, %p65
      %p68 = scmp.ne.s32.totalorder %s53, %s67
      %p69 = scmp.eq.s32.totalorder %s22, 0
      %p70 = por %p68, %p69
      %s72 = sadd.s32 %s71, 1
      %p75 = scmp.eq.s32.totalorder %s16, 1
      %p76 = scmp.ne.s32.totalorder %s71, %s73
      %p77 = scmp.eq.s32.totalorder %s16, 0
      %p78 = por %p76, %p77
      %p79 = scmp.ne.s32.totalorder %s71, %s73
      %p80 = scmp.eq.s32.totalorder %s21, 1
      %p81 = por %p79, %p80
      %p82 = scmp.ne.s32.totalorder %s73, %s74
      %p83 = scmp.eq.s32.totalorder %s21, 0
      %p84 = por %p82, %p83
      %p85 = scmp.ne.s32.totalorder %s73, %s74
      %p86 = scmp.eq.s32.totalorder %s22, 1
      %p87 = por %p85, %p86
      %p89 = scmp.ne.s32.totalorder %s74, %s88
      %p90 = scmp.eq.s32.totalorder %s22, 0
      %p91 = por %p89, %p90
      %s92 = ssub.s32 %s16, %s23
      %p93 = scmp.eq.s32.totalorder %s92, 0
      %s95 = sadd.s32 %s94, 1
      %s96 = scalar_select %p93, %s94, %s95
      %p99 = pneg %p93
      %p100 = scmp.eq.s32.totalorder %s16, 1
      %p101 = por %p99, %p100
      %p102 = scmp.ne.s32.totalorder %s94, %s97
      %p103 = scmp.eq.s32.totalorder %s16, 0
      %p104 = por %p102, %p103
      %p105 = scmp.ne.s32.totalorder %s94, %s97
      %p106 = scmp.eq.s32.totalorder %s21, 1
      %p107 = por %p105, %p106
      %p108 = scmp.ne.s32.totalorder %s97, %s98
      %p109 = scmp.eq.s32.totalorder %s21, 0
      %p110 = por %p108, %p109
      %p111 = scmp.ne.s32.totalorder %s97, %s98
      %p112 = scmp.eq.s32.totalorder %s22, 1
      %p113 = por %p111, %p112
      %p115 = scmp.ne.s32.totalorder %s98, %s114
      %p116 = scmp.eq.s32.totalorder %s22, 0
      %p117 = por %p115, %p116
      %p118 = scmp.le.s32.totalorder 1, %s16
      %p119 = scmp.lt.s32.totalorder %s16, 3
      %p120 = pnand %p118, %p119
      %p121 = pneg %p120
      // Predicated region
      $region9: #{tpu_custom_call.1} parent=5 // pred_check
        _
      $region10: #{tpu_custom_call.1} parent=5 // pred_check_branch
        %123 = sbr.rel (%p120) target = $region12
      $region11: #{tpu_custom_call.1} parent=5 // pred_region
        %s124 = ssub.s32 %s16, 1
        // Predicated region
        $region13: #{tpu_custom_call.1} parent=11 // pred_check
          %p125 = pneg %p63
        $region14: #{tpu_custom_call.1} parent=11 // pred_check_branch
          %127 = sbr.rel (%p125) target = $region16
        $region15: #{tpu_custom_call.1} parent=11 // pred_region
          %s129 = ssub.s32 9216, 9216
          %130 = vsyncadd [#allocation6], %s129
          %s131 = sshll.u32 [#allocation5], 4
          %s132 = int_to_ptr.vmem [resolvable:$true] %s131
          %137 = dma.hbm_to_vmem [thread:$0]  %s1, 9216, %s132, [#allocation6], 64, 64, 4
        $region16: #{tpu_custom_call.1} parent=11 // pred_fallthru
          _
        // Predicated region
        $region17: #{tpu_custom_call.1} parent=11 // pred_check
          %p138 = pneg %p84
        $region18: #{tpu_custom_call.1} parent=11 // pred_check_branch
          %140 = sbr.rel (%p138) target = $region20
        $region19: #{tpu_custom_call.1} parent=11 // pred_region
          %s142 = ssub.s32 9216, 9216
          %143 = vsyncadd [#allocation6], %s142
          %s144 = sshll.u32 [#allocation7], 4
          %s145 = int_to_ptr.vmem [resolvable:$true] %s144
          %150 = dma.hbm_to_vmem [thread:$0]  %s2, 9216, %s145, [#allocation6], 64, 64, 4
        $region20: #{tpu_custom_call.1} parent=11 // pred_fallthru
          _
      $region12: #{tpu_custom_call.1} parent=5 // pred_fallthru
        _
      %p151 = scmp.lt.s32.totalorder %s16, 2
      // Predicated region
      $region21: #{tpu_custom_call.1} parent=5 // pred_check
        %p152 = pneg %p151
      $region22: #{tpu_custom_call.1} parent=5 // pred_check_branch
        %154 = sbr.rel (%p152) target = $region24
      $region23: #{tpu_custom_call.1} parent=5 // pred_region
        // Predicated region
        $region25: #{tpu_custom_call.1} parent=23 // pred_check
          %p155 = pneg %p36
        $region26: #{tpu_custom_call.1} parent=23 // pred_check_branch
          %157 = sbr.rel (%p155) target = $region28
        $region27: #{tpu_custom_call.1} parent=23 // pred_region
          %s158 = sand.u32 %s26, 1
          %s159 = scalar_lea.sflag [#allocation3], %s158
          %s160 = sand.u32 %s26, 1
          %s161 = smul.addr %s160, 256
          %s162 = scalar_lea.vmem [#allocation2], %s161
          %s164 = ssub.s32 4096, 4096
          %165 = vsyncadd %s159, %s164
          %s166 = smul.addr %s16, 32
          %s167 = smul.addr %s166, 128
          %s168 = scalar_lea.hbm %s0, %s167
          %s169 = sshll.u32 %s162, 4
          %s170 = int_to_ptr.vmem [resolvable:$true] %s169
          %175 = dma.hbm_to_vmem [thread:$0]  %s168, 4096, %s170, %s159, 128, 128, 8
        $region28: #{tpu_custom_call.1} parent=23 // pred_fallthru
          _
      $region24: #{tpu_custom_call.1} parent=5 // pred_fallthru
        _
      %p176 = scmp.le.s32.totalorder 1, %s16
      %p177 = scmp.lt.s32.totalorder %s16, 3
      %p178 = pnand %p176, %p177
      %p179 = pneg %p178
      // Predicated region
      $region29: #{tpu_custom_call.1} parent=5 // pred_check
        _
      $region30: #{tpu_custom_call.1} parent=5 // pred_check_branch
        %181 = sbr.rel (%p178) target = $region32
      $region31: #{tpu_custom_call.1} parent=5 // pred_region
        %s182 = ssub.s32 %s16, 1
        %s183 = sand.u32 %s29, 1
        %s184 = scalar_lea.sflag [#allocation3], %s183
        %s185 = sand.u32 %s29, 1
        %s186 = smul.addr %s185, 256
        %s187 = scalar_lea.vmem [#allocation2], %s186
        // Predicated region
        $region33: #{tpu_custom_call.1} parent=31 // pred_check
          %p188 = pneg %p42
        $region34: #{tpu_custom_call.1} parent=31 // pred_check_branch
          %190 = sbr.rel (%p188) target = $region36
        $region35: #{tpu_custom_call.1} parent=31 // pred_region
          %191 = dma.done %s184, 4096
        $region36: #{tpu_custom_call.1} parent=31 // pred_fallthru
          _
        // Predicated region
        $region37: #{tpu_custom_call.1} parent=31 // pred_check
          %p192 = pneg %p63
        $region38: #{tpu_custom_call.1} parent=31 // pred_check_branch
          %194 = sbr.rel (%p192) target = $region40
        $region39: #{tpu_custom_call.1} parent=31 // pred_region
          %195 = dma.done [#allocation6], 9216
        $region40: #{tpu_custom_call.1} parent=31 // pred_fallthru
          _
        // Predicated region
        $region41: #{tpu_custom_call.1} parent=31 // pred_check
          %p196 = pneg %p84
        $region42: #{tpu_custom_call.1} parent=31 // pred_check_branch
          %198 = sbr.rel (%p196) target = $region44
        $region43: #{tpu_custom_call.1} parent=31 // pred_region
          %199 = dma.done [#allocation6], 9216
        $region44: #{tpu_custom_call.1} parent=31 // pred_fallthru
          _
        %s200 = sand.u32 %s29, 1
        %s201 = scalar_lea.sflag [#allocation3], %s200
        %s202 = sand.u32 %s29, 1
        %s203 = smul.addr %s202, 256
        %s204 = scalar_lea.vmem [#allocation2], %s203
        %p205 = pneg %p42
        %p206 = pneg %p39
        %p207 = pneg %p63
        %p208 = pneg %p60
        %p209 = pneg %p84
        %p210 = pneg %p81
        %p211 = pneg %p110
        %p212 = pneg %p107
        %s213 = sand.u32 %s97, 1
        %s214 = scalar_lea.sflag [#allocation4], %s213
        %s215 = sand.u32 %s97, 1
        %s216 = smul.addr %s215, 256
        %s217 = scalar_lea.vmem [#allocation8], %s216
        %v219 = vld [vmem:[%s187] sm:$0xff]
        %v220 = vld [vmem:[%s187 + $0x8] sm:$0xff]
        %v221 = vld [vmem:[%s187 + $0x10] sm:$0xff]
        %v222 = vld [vmem:[%s187 + $0x18] sm:$0xff]
        %v223 = vld [vmem:[%s187 + $0x20] sm:$0xff]
        %v224 = vld [vmem:[%s187 + $0x28] sm:$0xff]
        %v225 = vld [vmem:[%s187 + $0x30] sm:$0xff]
        %v226 = vld [vmem:[%s187 + $0x38] sm:$0xff]
        %v227 = vld [vmem:[%s187 + $0x40] sm:$0xff]
        %v228 = vld [vmem:[%s187 + $0x48] sm:$0xff]
        %v229 = vld [vmem:[%s187 + $0x50] sm:$0xff]
        %v230 = vld [vmem:[%s187 + $0x58] sm:$0xff]
        %v231 = vld [vmem:[%s187 + $0x60] sm:$0xff]
        %v232 = vld [vmem:[%s187 + $0x68] sm:$0xff]
        %v233 = vld [vmem:[%s187 + $0x70] sm:$0xff]
        %v234 = vld [vmem:[%s187 + $0x78] sm:$0xff]
        %v235 = vld [vmem:[%s187 + $0x80] sm:$0xff]
        %v236 = vld [vmem:[%s187 + $0x88] sm:$0xff]
        %v237 = vld [vmem:[%s187 + $0x90] sm:$0xff]
        %v238 = vld [vmem:[%s187 + $0x98] sm:$0xff]
        %v239 = vld [vmem:[%s187 + $0xa0] sm:$0xff]
        %v240 = vld [vmem:[%s187 + $0xa8] sm:$0xff]
        %v241 = vld [vmem:[%s187 + $0xb0] sm:$0xff]
        %v242 = vld [vmem:[%s187 + $0xb8] sm:$0xff]
        %v243 = vld [vmem:[%s187 + $0xc0] sm:$0xff]
        %v244 = vld [vmem:[%s187 + $0xc8] sm:$0xff]
        %v245 = vld [vmem:[%s187 + $0xd0] sm:$0xff]
        %v246 = vld [vmem:[%s187 + $0xd8] sm:$0xff]
        %v247 = vld [vmem:[%s187 + $0xe0] sm:$0xff]
        %v248 = vld [vmem:[%s187 + $0xe8] sm:$0xff]
        %v249 = vld [vmem:[%s187 + $0xf0] sm:$0xff]
        %v250 = vld [vmem:[%s187 + $0xf8] sm:$0xff]
        %v251 = vlaneseq
        %v252 = vshrl.u32 %v251, 7
        %v253 = vadd.s32 %v252, 8
        %v254 = vadd.s32 %v252, 16
        %v255 = vadd.s32 %v252, 24
        %v256 = vadd.s32 %v252, 32
        %v257 = vadd.s32 %v252, 40
        %v258 = vadd.s32 %v252, 48
        %v259 = vadd.s32 %v252, 56
        %v260 = vadd.s32 %v252, 64
        %v261 = vadd.s32 %v252, 72
        %v262 = vadd.s32 %v252, 80
        %v263 = vadd.s32 %v252, 88
        %v264 = vadd.s32 %v252, 96
        %v265 = vadd.s32 %v252, 104
        %v266 = vadd.s32 %v252, 112
        %v267 = vadd.s32 %v252, 120
        %v268 = vadd.s32 %v252, 128
        %v269 = vadd.s32 %v252, 136
        %v270 = vadd.s32 %v252, 144
        %v271 = vadd.s32 %v252, 152
        %v272 = vadd.s32 %v252, 160
        %v273 = vadd.s32 %v252, 168
        %v274 = vadd.s32 %v252, 176
        %v275 = vadd.s32 %v252, 184
        %v276 = vadd.s32 %v252, 192
        %v277 = vadd.s32 %v252, 200
        %v278 = vadd.s32 %v252, 208
        %v279 = vadd.s32 %v252, 216
        %v280 = vadd.s32 %v252, 224
        %v281 = vadd.s32 %v252, 232
        %v282 = vadd.s32 %v252, 240
        %v283 = vadd.s32 %v252, 248
        %vm284 = vcmp.lt.s32.totalorder %v252, 0
        %v285 = vsub.s32 0, %v252
        %v286 = vsel %vm284, %v285, %v252
        %v287 = vshrl.u32 %v286, 4
        %v288 = vand.u32 %v286, 15
        %v289 = vsub.s32 0, %v288
        %v290 = vsel %vm284, %v289, %v288
        %vm291 = vcmp.lt.s32.totalorder %v253, 0
        %v292 = vsub.s32 0, %v253
        %v293 = vsel %vm291, %v292, %v253
        %v294 = vshrl.u32 %v293, 4
        %v295 = vand.u32 %v293, 15
        %v296 = vsub.s32 0, %v295
        %v297 = vsel %vm291, %v296, %v295
        %vm298 = vcmp.lt.s32.totalorder %v254, 0
        %v299 = vsub.s32 0, %v254
        %v300 = vsel %vm298, %v299, %v254
        %v301 = vshrl.u32 %v300, 4
        %v302 = vand.u32 %v300, 15
        %v303 = vsub.s32 0, %v302
        %v304 = vsel %vm298, %v303, %v302
        %vm305 = vcmp.lt.s32.totalorder %v255, 0
        %v306 = vsub.s32 0, %v255
        %v307 = vsel %vm305, %v306, %v255
        %v308 = vshrl.u32 %v307, 4
        %v309 = vand.u32 %v307, 15
        %v310 = vsub.s32 0, %v309
        %v311 = vsel %vm305, %v310, %v309
        %vm312 = vcmp.lt.s32.totalorder %v256, 0
        %v313 = vsub.s32 0, %v256
        %v314 = vsel %vm312, %v313, %v256
        %v315 = vshrl.u32 %v314, 4
        %v316 = vand.u32 %v314, 15
        %v317 = vsub.s32 0, %v316
        %v318 = vsel %vm312, %v317, %v316
        %vm319 = vcmp.lt.s32.totalorder %v257, 0
        %v320 = vsub.s32 0, %v257
        %v321 = vsel %vm319, %v320, %v257
        %v322 = vshrl.u32 %v321, 4
        %v323 = vand.u32 %v321, 15
        %v324 = vsub.s32 0, %v323
        %v325 = vsel %vm319, %v324, %v323
        %vm326 = vcmp.lt.s32.totalorder %v258, 0
        %v327 = vsub.s32 0, %v258
        %v328 = vsel %vm326, %v327, %v258
        %v329 = vshrl.u32 %v328, 4
        %v330 = vand.u32 %v328, 15
        %v331 = vsub.s32 0, %v330
        %v332 = vsel %vm326, %v331, %v330
        %vm333 = vcmp.lt.s32.totalorder %v259, 0
        %v334 = vsub.s32 0, %v259
        %v335 = vsel %vm333, %v334, %v259
        %v336 = vshrl.u32 %v335, 4
        %v337 = vand.u32 %v335, 15
        %v338 = vsub.s32 0, %v337
        %v339 = vsel %vm333, %v338, %v337
        %vm340 = vcmp.lt.s32.totalorder %v260, 0
        %v341 = vsub.s32 0, %v260
        %v342 = vsel %vm340, %v341, %v260
        %v343 = vshrl.u32 %v342, 4
        %v344 = vand.u32 %v342, 15
        %v345 = vsub.s32 0, %v344
        %v346 = vsel %vm340, %v345, %v344
        %vm347 = vcmp.lt.s32.totalorder %v261, 0
        %v348 = vsub.s32 0, %v261
        %v349 = vsel %vm347, %v348, %v261
        %v350 = vshrl.u32 %v349, 4
        %v351 = vand.u32 %v349, 15
        %v352 = vsub.s32 0, %v351
        %v353 = vsel %vm347, %v352, %v351
        %vm354 = vcmp.lt.s32.totalorder %v262, 0
        %v355 = vsub.s32 0, %v262
        %v356 = vsel %vm354, %v355, %v262
        %v357 = vshrl.u32 %v356, 4
        %v358 = vand.u32 %v356, 15
        %v359 = vsub.s32 0, %v358
        %v360 = vsel %vm354, %v359, %v358
        %vm361 = vcmp.lt.s32.totalorder %v263, 0
        %v362 = vsub.s32 0, %v263
        %v363 = vsel %vm361, %v362, %v263
        %v364 = vshrl.u32 %v363, 4
        %v365 = vand.u32 %v363, 15
        %v366 = vsub.s32 0, %v365
        %v367 = vsel %vm361, %v366, %v365
        %vm368 = vcmp.lt.s32.totalorder %v264, 0
        %v369 = vsub.s32 0, %v264
        %v370 = vsel %vm368, %v369, %v264
        %v371 = vshrl.u32 %v370, 4
        %v372 = vand.u32 %v370, 15
        %v373 = vsub.s32 0, %v372
        %v374 = vsel %vm368, %v373, %v372
        %vm375 = vcmp.lt.s32.totalorder %v265, 0
        %v376 = vsub.s32 0, %v265
        %v377 = vsel %vm375, %v376, %v265
        %v378 = vshrl.u32 %v377, 4
        %v379 = vand.u32 %v377, 15
        %v380 = vsub.s32 0, %v379
        %v381 = vsel %vm375, %v380, %v379
        %vm382 = vcmp.lt.s32.totalorder %v266, 0
        %v383 = vsub.s32 0, %v266
        %v384 = vsel %vm382, %v383, %v266
        %v385 = vshrl.u32 %v384, 4
        %v386 = vand.u32 %v384, 15
        %v387 = vsub.s32 0, %v386
        %v388 = vsel %vm382, %v387, %v386
        %vm389 = vcmp.lt.s32.totalorder %v267, 0
        %v390 = vsub.s32 0, %v267
        %v391 = vsel %vm389, %v390, %v267
        %v392 = vshrl.u32 %v391, 4
        %v393 = vand.u32 %v391, 15
        %v394 = vsub.s32 0, %v393
        %v395 = vsel %vm389, %v394, %v393
        %vm396 = vcmp.lt.s32.totalorder %v268, 0
        %v397 = vsub.s32 0, %v268
        %v398 = vsel %vm396, %v397, %v268
        %v399 = vshrl.u32 %v398, 4
        %v400 = vand.u32 %v398, 15
        %v401 = vsub.s32 0, %v400
        %v402 = vsel %vm396, %v401, %v400
        %vm403 = vcmp.lt.s32.totalorder %v269, 0
        %v404 = vsub.s32 0, %v269
        %v405 = vsel %vm403, %v404, %v269
        %v406 = vshrl.u32 %v405, 4
        %v407 = vand.u32 %v405, 15
        %v408 = vsub.s32 0, %v407
        %v409 = vsel %vm403, %v408, %v407
        %vm410 = vcmp.lt.s32.totalorder %v270, 0
        %v411 = vsub.s32 0, %v270
        %v412 = vsel %vm410, %v411, %v270
        %v413 = vshrl.u32 %v412, 4
        %v414 = vand.u32 %v412, 15
        %v415 = vsub.s32 0, %v414
        %v416 = vsel %vm410, %v415, %v414
        %vm417 = vcmp.lt.s32.totalorder %v271, 0
        %v418 = vsub.s32 0, %v271
        %v419 = vsel %vm417, %v418, %v271
        %v420 = vshrl.u32 %v419, 4
        %v421 = vand.u32 %v419, 15
        %v422 = vsub.s32 0, %v421
        %v423 = vsel %vm417, %v422, %v421
        %vm424 = vcmp.lt.s32.totalorder %v272, 0
        %v425 = vsub.s32 0, %v272
        %v426 = vsel %vm424, %v425, %v272
        %v427 = vshrl.u32 %v426, 4
        %v428 = vand.u32 %v426, 15
        %v429 = vsub.s32 0, %v428
        %v430 = vsel %vm424, %v429, %v428
        %vm431 = vcmp.lt.s32.totalorder %v273, 0
        %v432 = vsub.s32 0, %v273
        %v433 = vsel %vm431, %v432, %v273
        %v434 = vshrl.u32 %v433, 4
        %v435 = vand.u32 %v433, 15
        %v436 = vsub.s32 0, %v435
        %v437 = vsel %vm431, %v436, %v435
        %vm438 = vcmp.lt.s32.totalorder %v274, 0
        %v439 = vsub.s32 0, %v274
        %v440 = vsel %vm438, %v439, %v274
        %v441 = vshrl.u32 %v440, 4
        %v442 = vand.u32 %v440, 15
        %v443 = vsub.s32 0, %v442
        %v444 = vsel %vm438, %v443, %v442
        %vm445 = vcmp.lt.s32.totalorder %v275, 0
        %v446 = vsub.s32 0, %v275
        %v447 = vsel %vm445, %v446, %v275
        %v448 = vshrl.u32 %v447, 4
        %v449 = vand.u32 %v447, 15
        %v450 = vsub.s32 0, %v449
        %v451 = vsel %vm445, %v450, %v449
        %vm452 = vcmp.lt.s32.totalorder %v276, 0
        %v453 = vsub.s32 0, %v276
        %v454 = vsel %vm452, %v453, %v276
        %v455 = vshrl.u32 %v454, 4
        %v456 = vand.u32 %v454, 15
        %v457 = vsub.s32 0, %v456
        %v458 = vsel %vm452, %v457, %v456
        %vm459 = vcmp.lt.s32.totalorder %v277, 0
        %v460 = vsub.s32 0, %v277
        %v461 = vsel %vm459, %v460, %v277
        %v462 = vshrl.u32 %v461, 4
        %v463 = vand.u32 %v461, 15
        %v464 = vsub.s32 0, %v463
        %v465 = vsel %vm459, %v464, %v463
        %vm466 = vcmp.lt.s32.totalorder %v278, 0
        %v467 = vsub.s32 0, %v278
        %v468 = vsel %vm466, %v467, %v278
        %v469 = vshrl.u32 %v468, 4
        %v470 = vand.u32 %v468, 15
        %v471 = vsub.s32 0, %v470
        %v472 = vsel %vm466, %v471, %v470
        %vm473 = vcmp.lt.s32.totalorder %v279, 0
        %v474 = vsub.s32 0, %v279
        %v475 = vsel %vm473, %v474, %v279
        %v476 = vshrl.u32 %v475, 4
        %v477 = vand.u32 %v475, 15
        %v478 = vsub.s32 0, %v477
        %v479 = vsel %vm473, %v478, %v477
        %vm480 = vcmp.lt.s32.totalorder %v280, 0
        %v481 = vsub.s32 0, %v280
        %v482 = vsel %vm480, %v481, %v280
        %v483 = vshrl.u32 %v482, 4
        %v484 = vand.u32 %v482, 15
        %v485 = vsub.s32 0, %v484
        %v486 = vsel %vm480, %v485, %v484
        %vm487 = vcmp.lt.s32.totalorder %v281, 0
        %v488 = vsub.s32 0, %v281
        %v489 = vsel %vm487, %v488, %v281
        %v490 = vshrl.u32 %v489, 4
        %v491 = vand.u32 %v489, 15
        %v492 = vsub.s32 0, %v491
        %v493 = vsel %vm487, %v492, %v491
        %vm494 = vcmp.lt.s32.totalorder %v282, 0
        %v495 = vsub.s32 0, %v282
        %v496 = vsel %vm494, %v495, %v282
        %v497 = vshrl.u32 %v496, 4
        %v498 = vand.u32 %v496, 15
        %v499 = vsub.s32 0, %v498
        %v500 = vsel %vm494, %v499, %v498
        %vm501 = vcmp.lt.s32.totalorder %v283, 0
        %v502 = vsub.s32 0, %v283
        %v503 = vsel %vm501, %v502, %v283
        %v504 = vshrl.u32 %v503, 4
        %v505 = vand.u32 %v503, 15
        %v506 = vsub.s32 0, %v505
        %v507 = vsel %vm501, %v506, %v505
        %vm508 = vcmp.ne.s32.totalorder %v290, 0
        %vm509 = vcmp.ne.s32.totalorder %v297, 0
        %vm510 = vcmp.ne.s32.totalorder %v304, 0
        %vm511 = vcmp.ne.s32.totalorder %v311, 0
        %vm512 = vcmp.ne.s32.totalorder %v318, 0
        %vm513 = vcmp.ne.s32.totalorder %v325, 0
        %vm514 = vcmp.ne.s32.totalorder %v332, 0
        %vm515 = vcmp.ne.s32.totalorder %v339, 0
        %vm516 = vcmp.ne.s32.totalorder %v346, 0
        %vm517 = vcmp.ne.s32.totalorder %v353, 0
        %vm518 = vcmp.ne.s32.totalorder %v360, 0
        %vm519 = vcmp.ne.s32.totalorder %v367, 0
        %vm520 = vcmp.ne.s32.totalorder %v374, 0
        %vm521 = vcmp.ne.s32.totalorder %v381, 0
        %vm522 = vcmp.ne.s32.totalorder %v388, 0
        %vm523 = vcmp.ne.s32.totalorder %v395, 0
        %vm524 = vcmp.ne.s32.totalorder %v402, 0
        %vm525 = vcmp.ne.s32.totalorder %v409, 0
        %vm526 = vcmp.ne.s32.totalorder %v416, 0
        %vm527 = vcmp.ne.s32.totalorder %v423, 0
        %vm528 = vcmp.ne.s32.totalorder %v430, 0
        %vm529 = vcmp.ne.s32.totalorder %v437, 0
        %vm530 = vcmp.ne.s32.totalorder %v444, 0
        %vm531 = vcmp.ne.s32.totalorder %v451, 0
        %vm532 = vcmp.ne.s32.totalorder %v458, 0
        %vm533 = vcmp.ne.s32.totalorder %v465, 0
        %vm534 = vcmp.ne.s32.totalorder %v472, 0
        %vm535 = vcmp.ne.s32.totalorder %v479, 0
        %vm536 = vcmp.ne.s32.totalorder %v486, 0
        %vm537 = vcmp.ne.s32.totalorder %v493, 0
        %vm538 = vcmp.ne.s32.totalorder %v500, 0
        %vm539 = vcmp.ne.s32.totalorder %v507, 0
        %vm540 = vcmp.lt.s32.totalorder %v290, 0
        %vm541 = vcmp.lt.s32.totalorder %v297, 0
        %vm542 = vcmp.lt.s32.totalorder %v304, 0
        %vm543 = vcmp.lt.s32.totalorder %v311, 0
        %vm544 = vcmp.lt.s32.totalorder %v318, 0
        %vm545 = vcmp.lt.s32.totalorder %v325, 0
        %vm546 = vcmp.lt.s32.totalorder %v332, 0
        %vm547 = vcmp.lt.s32.totalorder %v339, 0
        %vm548 = vcmp.lt.s32.totalorder %v346, 0
        %vm549 = vcmp.lt.s32.totalorder %v353, 0
        %vm550 = vcmp.lt.s32.totalorder %v360, 0
        %vm551 = vcmp.lt.s32.totalorder %v367, 0
        %vm552 = vcmp.lt.s32.totalorder %v374, 0
        %vm553 = vcmp.lt.s32.totalorder %v381, 0
        %vm554 = vcmp.lt.s32.totalorder %v388, 0
        %vm555 = vcmp.lt.s32.totalorder %v395, 0
        %vm556 = vcmp.lt.s32.totalorder %v402, 0
        %vm557 = vcmp.lt.s32.totalorder %v409, 0
        %vm558 = vcmp.lt.s32.totalorder %v416, 0
        %vm559 = vcmp.lt.s32.totalorder %v423, 0
        %vm560 = vcmp.lt.s32.totalorder %v430, 0
        %vm561 = vcmp.lt.s32.totalorder %v437, 0
        %vm562 = vcmp.lt.s32.totalorder %v444, 0
        %vm563 = vcmp.lt.s32.totalorder %v451, 0
        %vm564 = vcmp.lt.s32.totalorder %v458, 0
        %vm565 = vcmp.lt.s32.totalorder %v465, 0
        %vm566 = vcmp.lt.s32.totalorder %v472, 0
        %vm567 = vcmp.lt.s32.totalorder %v479, 0
        %vm568 = vcmp.lt.s32.totalorder %v486, 0
        %vm569 = vcmp.lt.s32.totalorder %v493, 0
        %vm570 = vcmp.lt.s32.totalorder %v500, 0
        %vm571 = vcmp.lt.s32.totalorder %v507, 0
        %vm572 = vmand %vm540, %vm508
        %vm573 = vmand %vm541, %vm509
        %vm574 = vmand %vm542, %vm510
        %vm575 = vmand %vm543, %vm511
        %vm576 = vmand %vm544, %vm512
        %vm577 = vmand %vm545, %vm513
        %vm578 = vmand %vm546, %vm514
        %vm579 = vmand %vm547, %vm515
        %vm580 = vmand %vm548, %vm516
        %vm581 = vmand %vm549, %vm517
        %vm582 = vmand %vm550, %vm518
        %vm583 = vmand %vm551, %vm519
        %vm584 = vmand %vm552, %vm520
        %vm585 = vmand %vm553, %vm521
        %vm586 = vmand %vm554, %vm522
        %vm587 = vmand %vm555, %vm523
        %vm588 = vmand %vm556, %vm524
        %vm589 = vmand %vm557, %vm525
        %vm590 = vmand %vm558, %vm526
        %vm591 = vmand %vm559, %vm527
        %vm592 = vmand %vm560, %vm528
        %vm593 = vmand %vm561, %vm529
        %vm594 = vmand %vm562, %vm530
        %vm595 = vmand %vm563, %vm531
        %vm596 = vmand %vm564, %vm532
        %vm597 = vmand %vm565, %vm533
        %vm598 = vmand %vm566, %vm534
        %vm599 = vmand %vm567, %vm535
        %vm600 = vmand %vm568, %vm536
        %vm601 = vmand %vm569, %vm537
        %vm602 = vmand %vm570, %vm538
        %vm603 = vmand %vm571, %vm539
        %v604 = vadd.s32 %v290, 16
        %v605 = vadd.s32 %v297, 16
        %v606 = vadd.s32 %v304, 16
        %v607 = vadd.s32 %v311, 16
        %v608 = vadd.s32 %v318, 16
        %v609 = vadd.s32 %v325, 16
        %v610 = vadd.s32 %v332, 16
        %v611 = vadd.s32 %v339, 16
        %v612 = vadd.s32 %v346, 16
        %v613 = vadd.s32 %v353, 16
        %v614 = vadd.s32 %v360, 16
        %v615 = vadd.s32 %v367, 16
        %v616 = vadd.s32 %v374, 16
        %v617 = vadd.s32 %v381, 16
        %v618 = vadd.s32 %v388, 16
        %v619 = vadd.s32 %v395, 16
        %v620 = vadd.s32 %v402, 16
        %v621 = vadd.s32 %v409, 16
        %v622 = vadd.s32 %v416, 16
        %v623 = vadd.s32 %v423, 16
        %v624 = vadd.s32 %v430, 16
        %v625 = vadd.s32 %v437, 16
        %v626 = vadd.s32 %v444, 16
        %v627 = vadd.s32 %v451, 16
        %v628 = vadd.s32 %v458, 16
        %v629 = vadd.s32 %v465, 16
        %v630 = vadd.s32 %v472, 16
        %v631 = vadd.s32 %v479, 16
        %v632 = vadd.s32 %v486, 16
        %v633 = vadd.s32 %v493, 16
        %v634 = vadd.s32 %v500, 16
        %v635 = vadd.s32 %v507, 16
        %v636 = vsel %vm572, %v604, %v290
        %v637 = vsel %vm573, %v605, %v297
        %v638 = vsel %vm574, %v606, %v304
        %v639 = vsel %vm575, %v607, %v311
        %v640 = vsel %vm576, %v608, %v318
        %v641 = vsel %vm577, %v609, %v325
        %v642 = vsel %vm578, %v610, %v332
        %v643 = vsel %vm579, %v611, %v339
        %v644 = vsel %vm580, %v612, %v346
        %v645 = vsel %vm581, %v613, %v353
        %v646 = vsel %vm582, %v614, %v360
        %v647 = vsel %vm583, %v615, %v367
        %v648 = vsel %vm584, %v616, %v374
        %v649 = vsel %vm585, %v617, %v381
        %v650 = vsel %vm586, %v618, %v388
        %v651 = vsel %vm587, %v619, %v395
        %v652 = vsel %vm588, %v620, %v402
        %v653 = vsel %vm589, %v621, %v409
        %v654 = vsel %vm590, %v622, %v416
        %v655 = vsel %vm591, %v623, %v423
        %v656 = vsel %vm592, %v624, %v430
        %v657 = vsel %vm593, %v625, %v437
        %v658 = vsel %vm594, %v626, %v444
        %v659 = vsel %vm595, %v627, %v451
        %v660 = vsel %vm596, %v628, %v458
        %v661 = vsel %vm597, %v629, %v465
        %v662 = vsel %vm598, %v630, %v472
        %v663 = vsel %vm599, %v631, %v479
        %v664 = vsel %vm600, %v632, %v486
        %v665 = vsel %vm601, %v633, %v493
        %v666 = vsel %vm602, %v634, %v500
        %v667 = vsel %vm603, %v635, %v507
        %vm668 = vcmp.eq.s32.totalorder %v636, 0
        %vm669 = vcmp.eq.s32.totalorder %v637, 0
        %vm670 = vcmp.eq.s32.totalorder %v638, 0
        %vm671 = vcmp.eq.s32.totalorder %v639, 0
        %vm672 = vcmp.eq.s32.totalorder %v640, 0
        %vm673 = vcmp.eq.s32.totalorder %v641, 0
        %vm674 = vcmp.eq.s32.totalorder %v642, 0
        %vm675 = vcmp.eq.s32.totalorder %v643, 0
        %vm676 = vcmp.eq.s32.totalorder %v644, 0
        %vm677 = vcmp.eq.s32.totalorder %v645, 0
        %vm678 = vcmp.eq.s32.totalorder %v646, 0
        %vm679 = vcmp.eq.s32.totalorder %v647, 0
        %vm680 = vcmp.eq.s32.totalorder %v648, 0
        %vm681 = vcmp.eq.s32.totalorder %v649, 0
        %vm682 = vcmp.eq.s32.totalorder %v650, 0
        %vm683 = vcmp.eq.s32.totalorder %v651, 0
        %vm684 = vcmp.eq.s32.totalorder %v652, 0
        %vm685 = vcmp.eq.s32.totalorder %v653, 0
        %vm686 = vcmp.eq.s32.totalorder %v654, 0
        %vm687 = vcmp.eq.s32.totalorder %v655, 0
        %vm688 = vcmp.eq.s32.totalorder %v656, 0
        %vm689 = vcmp.eq.s32.totalorder %v657, 0
        %vm690 = vcmp.eq.s32.totalorder %v658, 0
        %vm691 = vcmp.eq.s32.totalorder %v659, 0
        %vm692 = vcmp.eq.s32.totalorder %v660, 0
        %vm693 = vcmp.eq.s32.totalorder %v661, 0
        %vm694 = vcmp.eq.s32.totalorder %v662, 0
        %vm695 = vcmp.eq.s32.totalorder %v663, 0
        %vm696 = vcmp.eq.s32.totalorder %v664, 0
        %vm697 = vcmp.eq.s32.totalorder %v665, 0
        %vm698 = vcmp.eq.s32.totalorder %v666, 0
        %vm699 = vcmp.eq.s32.totalorder %v667, 0
        %vm700 = vcmp.eq.s32.totalorder %v636, 15
        %vm701 = vcmp.eq.s32.totalorder %v637, 15
        %vm702 = vcmp.eq.s32.totalorder %v638, 15
        %vm703 = vcmp.eq.s32.totalorder %v639, 15
        %vm704 = vcmp.eq.s32.totalorder %v640, 15
        %vm705 = vcmp.eq.s32.totalorder %v641, 15
        %vm706 = vcmp.eq.s32.totalorder %v642, 15
        %vm707 = vcmp.eq.s32.totalorder %v643, 15
        %vm708 = vcmp.eq.s32.totalorder %v644, 15
        %vm709 = vcmp.eq.s32.totalorder %v645, 15
        %vm710 = vcmp.eq.s32.totalorder %v646, 15
        %vm711 = vcmp.eq.s32.totalorder %v647, 15
        %vm712 = vcmp.eq.s32.totalorder %v648, 15
        %vm713 = vcmp.eq.s32.totalorder %v649, 15
        %vm714 = vcmp.eq.s32.totalorder %v650, 15
        %vm715 = vcmp.eq.s32.totalorder %v651, 15
        %vm716 = vcmp.eq.s32.totalorder %v652, 15
        %vm717 = vcmp.eq.s32.totalorder %v653, 15
        %vm718 = vcmp.eq.s32.totalorder %v654, 15
        %vm719 = vcmp.eq.s32.totalorder %v655, 15
        %vm720 = vcmp.eq.s32.totalorder %v656, 15
        %vm721 = vcmp.eq.s32.totalorder %v657, 15
        %vm722 = vcmp.eq.s32.totalorder %v658, 15
        %vm723 = vcmp.eq.s32.totalorder %v659, 15
        %vm724 = vcmp.eq.s32.totalorder %v660, 15
        %vm725 = vcmp.eq.s32.totalorder %v661, 15
        %vm726 = vcmp.eq.s32.totalorder %v662, 15
        %vm727 = vcmp.eq.s32.totalorder %v663, 15
        %vm728 = vcmp.eq.s32.totalorder %v664, 15
        %vm729 = vcmp.eq.s32.totalorder %v665, 15
        %vm730 = vcmp.eq.s32.totalorder %v666, 15
        %vm731 = vcmp.eq.s32.totalorder %v667, 15
        %vm732 = vcmp.lt.s32.totalorder %v252, 16
        %vm733 = vcmp.lt.s32.totalorder %v253, 16
        %vm734 = vcmp.lt.s32.totalorder %v254, 16
        %vm735 = vcmp.lt.s32.totalorder %v255, 16
        %vm736 = vcmp.lt.s32.totalorder %v256, 16
        %vm737 = vcmp.lt.s32.totalorder %v257, 16
        %vm738 = vcmp.lt.s32.totalorder %v258, 16
        %vm739 = vcmp.lt.s32.totalorder %v259, 16
        %vm740 = vcmp.lt.s32.totalorder %v260, 16
        %vm741 = vcmp.lt.s32.totalorder %v261, 16
        %vm742 = vcmp.lt.s32.totalorder %v262, 16
        %vm743 = vcmp.lt.s32.totalorder %v263, 16
        %vm744 = vcmp.lt.s32.totalorder %v264, 16
        %vm745 = vcmp.lt.s32.totalorder %v265, 16
        %vm746 = vcmp.lt.s32.totalorder %v266, 16
        %vm747 = vcmp.lt.s32.totalorder %v267, 16
        %vm748 = vcmp.lt.s32.totalorder %v268, 16
        %vm749 = vcmp.lt.s32.totalorder %v269, 16
        %vm750 = vcmp.lt.s32.totalorder %v270, 16
        %vm751 = vcmp.lt.s32.totalorder %v271, 16
        %vm752 = vcmp.lt.s32.totalorder %v272, 16
        %vm753 = vcmp.lt.s32.totalorder %v273, 16
        %vm754 = vcmp.lt.s32.totalorder %v274, 16
        %vm755 = vcmp.lt.s32.totalorder %v275, 16
        %vm756 = vcmp.lt.s32.totalorder %v276, 16
        %vm757 = vcmp.lt.s32.totalorder %v277, 16
        %vm758 = vcmp.lt.s32.totalorder %v278, 16
        %vm759 = vcmp.lt.s32.totalorder %v279, 16
        %vm760 = vcmp.lt.s32.totalorder %v280, 16
        %vm761 = vcmp.lt.s32.totalorder %v281, 16
        %vm762 = vcmp.lt.s32.totalorder %v282, 16
        %vm763 = vcmp.lt.s32.totalorder %v283, 16
        %vm764 = vcmp.ge.s32.totalorder %v252, 240
        %vm765 = vcmp.ge.s32.totalorder %v253, 240
        %vm766 = vcmp.ge.s32.totalorder %v254, 240
        %vm767 = vcmp.ge.s32.totalorder %v255, 240
        %vm768 = vcmp.ge.s32.totalorder %v256, 240
        %vm769 = vcmp.ge.s32.totalorder %v257, 240
        %vm770 = vcmp.ge.s32.totalorder %v258, 240
        %vm771 = vcmp.ge.s32.totalorder %v259, 240
        %vm772 = vcmp.ge.s32.totalorder %v260, 240
        %vm773 = vcmp.ge.s32.totalorder %v261, 240
        %vm774 = vcmp.ge.s32.totalorder %v262, 240
        %vm775 = vcmp.ge.s32.totalorder %v263, 240
        %vm776 = vcmp.ge.s32.totalorder %v264, 240
        %vm777 = vcmp.ge.s32.totalorder %v265, 240
        %vm778 = vcmp.ge.s32.totalorder %v266, 240
        %vm779 = vcmp.ge.s32.totalorder %v267, 240
        %vm780 = vcmp.ge.s32.totalorder %v268, 240
        %vm781 = vcmp.ge.s32.totalorder %v269, 240
        %vm782 = vcmp.ge.s32.totalorder %v270, 240
        %vm783 = vcmp.ge.s32.totalorder %v271, 240
        %vm784 = vcmp.ge.s32.totalorder %v272, 240
        %vm785 = vcmp.ge.s32.totalorder %v273, 240
        %vm786 = vcmp.ge.s32.totalorder %v274, 240
        %vm787 = vcmp.ge.s32.totalorder %v275, 240
        %vm788 = vcmp.ge.s32.totalorder %v276, 240
        %vm789 = vcmp.ge.s32.totalorder %v277, 240
        %vm790 = vcmp.ge.s32.totalorder %v278, 240
        %vm791 = vcmp.ge.s32.totalorder %v279, 240
        %vm792 = vcmp.ge.s32.totalorder %v280, 240
        %vm793 = vcmp.ge.s32.totalorder %v281, 240
        %vm794 = vcmp.ge.s32.totalorder %v282, 240
        %vm795 = vcmp.ge.s32.totalorder %v283, 240
        %v797 = vrot.slane %v250, 7
        %vm830 = vcmask 1040384
        %v831 = vrot.slane %v219, 7
        %v832 = vrot.slane %v220, 7
        %v833 = vsel %vm830, %v831, %v832
        %v834 = vrot.slane %v221, 7
        %v835 = vsel %vm830, %v832, %v834
        %v836 = vrot.slane %v222, 7
        %v837 = vsel %vm830, %v834, %v836
        %v838 = vrot.slane %v223, 7
        %v839 = vsel %vm830, %v836, %v838
        %v840 = vrot.slane %v224, 7
        %v841 = vsel %vm830, %v838, %v840
        %v842 = vrot.slane %v225, 7
        %v843 = vsel %vm830, %v840, %v842
        %v844 = vrot.slane %v226, 7
        %v845 = vsel %vm830, %v842, %v844
        %v846 = vrot.slane %v227, 7
        %v847 = vsel %vm830, %v844, %v846
        %v848 = vrot.slane %v228, 7
        %v849 = vsel %vm830, %v846, %v848
        %v850 = vrot.slane %v229, 7
        %v851 = vsel %vm830, %v848, %v850
        %v852 = vrot.slane %v230, 7
        %v853 = vsel %vm830, %v850, %v852
        %v854 = vrot.slane %v231, 7
        %v855 = vsel %vm830, %v852, %v854
        %v856 = vrot.slane %v232, 7
        %v857 = vsel %vm830, %v854, %v856
        %v858 = vrot.slane %v233, 7
        %v859 = vsel %vm830, %v856, %v858
        %v860 = vrot.slane %v234, 7
        %v861 = vsel %vm830, %v858, %v860
        %v862 = vrot.slane %v235, 7
        %v863 = vsel %vm830, %v860, %v862
        %v864 = vrot.slane %v236, 7
        %v865 = vsel %vm830, %v862, %v864
        %v866 = vrot.slane %v237, 7
        %v867 = vsel %vm830, %v864, %v866
        %v868 = vrot.slane %v238, 7
        %v869 = vsel %vm830, %v866, %v868
        %v870 = vrot.slane %v239, 7
        %v871 = vsel %vm830, %v868, %v870
        %v872 = vrot.slane %v240, 7
        %v873 = vsel %vm830, %v870, %v872
        %v874 = vrot.slane %v241, 7
        %v875 = vsel %vm830, %v872, %v874
        %v876 = vrot.slane %v242, 7
        %v877 = vsel %vm830, %v874, %v876
        %v878 = vrot.slane %v243, 7
        %v879 = vsel %vm830, %v876, %v878
        %v880 = vrot.slane %v244, 7
        %v881 = vsel %vm830, %v878, %v880
        %v882 = vrot.slane %v245, 7
        %v883 = vsel %vm830, %v880, %v882
        %v884 = vrot.slane %v246, 7
        %v885 = vsel %vm830, %v882, %v884
        %v886 = vrot.slane %v247, 7
        %v887 = vsel %vm830, %v884, %v886
        %v888 = vrot.slane %v248, 7
        %v889 = vsel %vm830, %v886, %v888
        %v890 = vrot.slane %v249, 7
        %v891 = vsel %vm830, %v888, %v890
        %v892 = vsel %vm830, %v890, %v797
        %v925 = vsel %vm830, %v797, %v831
        %vm926 = vcmask 1046528
        %v927 = vrot.slane %v219, 1
        %v928 = vrot.slane %v220, 1
        %v929 = vsel %vm926, %v927, %v928
        %v930 = vrot.slane %v221, 1
        %v931 = vsel %vm926, %v928, %v930
        %v932 = vrot.slane %v222, 1
        %v933 = vsel %vm926, %v930, %v932
        %v934 = vrot.slane %v223, 1
        %v935 = vsel %vm926, %v932, %v934
        %v936 = vrot.slane %v224, 1
        %v937 = vsel %vm926, %v934, %v936
        %v938 = vrot.slane %v225, 1
        %v939 = vsel %vm926, %v936, %v938
        %v940 = vrot.slane %v226, 1
        %v941 = vsel %vm926, %v938, %v940
        %v942 = vrot.slane %v227, 1
        %v943 = vsel %vm926, %v940, %v942
        %v944 = vrot.slane %v228, 1
        %v945 = vsel %vm926, %v942, %v944
        %v946 = vrot.slane %v229, 1
        %v947 = vsel %vm926, %v944, %v946
        %v948 = vrot.slane %v230, 1
        %v949 = vsel %vm926, %v946, %v948
        %v950 = vrot.slane %v231, 1
        %v951 = vsel %vm926, %v948, %v950
        %v952 = vrot.slane %v232, 1
        %v953 = vsel %vm926, %v950, %v952
        %v954 = vrot.slane %v233, 1
        %v955 = vsel %vm926, %v952, %v954
        %v956 = vrot.slane %v234, 1
        %v957 = vsel %vm926, %v954, %v956
        %v958 = vrot.slane %v235, 1
        %v959 = vsel %vm926, %v956, %v958
        %v960 = vrot.slane %v236, 1
        %v961 = vsel %vm926, %v958, %v960
        %v962 = vrot.slane %v237, 1
        %v963 = vsel %vm926, %v960, %v962
        %v964 = vrot.slane %v238, 1
        %v965 = vsel %vm926, %v962, %v964
        %v966 = vrot.slane %v239, 1
        %v967 = vsel %vm926, %v964, %v966
        %v968 = vrot.slane %v240, 1
        %v969 = vsel %vm926, %v966, %v968
        %v970 = vrot.slane %v241, 1
        %v971 = vsel %vm926, %v968, %v970
        %v972 = vrot.slane %v242, 1
        %v973 = vsel %vm926, %v970, %v972
        %v974 = vrot.slane %v243, 1
        %v975 = vsel %vm926, %v972, %v974
        %v976 = vrot.slane %v244, 1
        %v977 = vsel %vm926, %v974, %v976
        %v978 = vrot.slane %v245, 1
        %v979 = vsel %vm926, %v976, %v978
        %v980 = vrot.slane %v246, 1
        %v981 = vsel %vm926, %v978, %v980
        %v982 = vrot.slane %v247, 1
        %v983 = vsel %vm926, %v980, %v982
        %v984 = vrot.slane %v248, 1
        %v985 = vsel %vm926, %v982, %v984
        %v986 = vrot.slane %v249, 1
        %v987 = vsel %vm926, %v984, %v986
        %v988 = vrot.slane %v250, 1
        %v989 = vsel %vm926, %v986, %v988
        %v1023 = vsel %vm926, %v988, %v927
        %v1024 = vsel %vm668, 1, 0
        %v1025 = vsel %vm669, 1, 0
        %v1026 = vsel %vm670, 1, 0
        %v1027 = vsel %vm671, 1, 0
        %v1028 = vsel %vm672, 1, 0
        %v1029 = vsel %vm673, 1, 0
        %v1030 = vsel %vm674, 1, 0
        %v1031 = vsel %vm675, 1, 0
        %v1032 = vsel %vm676, 1, 0
        %v1033 = vsel %vm677, 1, 0
        %v1034 = vsel %vm678, 1, 0
        %v1035 = vsel %vm679, 1, 0
        %v1036 = vsel %vm680, 1, 0
        %v1037 = vsel %vm681, 1, 0
        %v1038 = vsel %vm682, 1, 0
        %v1039 = vsel %vm683, 1, 0
        %v1040 = vsel %vm684, 1, 0
        %v1041 = vsel %vm685, 1, 0
        %v1042 = vsel %vm686, 1, 0
        %v1043 = vsel %vm687, 1, 0
        %v1044 = vsel %vm688, 1, 0
        %v1045 = vsel %vm689, 1, 0
        %v1046 = vsel %vm690, 1, 0
        %v1047 = vsel %vm691, 1, 0
        %v1048 = vsel %vm692, 1, 0
        %v1049 = vsel %vm693, 1, 0
        %v1050 = vsel %vm694, 1, 0
        %v1051 = vsel %vm695, 1, 0
        %v1052 = vsel %vm696, 1, 0
        %v1053 = vsel %vm697, 1, 0
        %v1054 = vsel %vm698, 1, 0
        %v1055 = vsel %vm699, 1, 0
        %vm1056 = vcmp.eq.s32.totalorder %v1024, 1
        %vm1057 = vcmp.eq.s32.totalorder %v1025, 1
        %vm1058 = vcmp.eq.s32.totalorder %v1026, 1
        %vm1059 = vcmp.eq.s32.totalorder %v1027, 1
        %vm1060 = vcmp.eq.s32.totalorder %v1028, 1
        %vm1061 = vcmp.eq.s32.totalorder %v1029, 1
        %vm1062 = vcmp.eq.s32.totalorder %v1030, 1
        %vm1063 = vcmp.eq.s32.totalorder %v1031, 1
        %vm1064 = vcmp.eq.s32.totalorder %v1032, 1
        %vm1065 = vcmp.eq.s32.totalorder %v1033, 1
        %vm1066 = vcmp.eq.s32.totalorder %v1034, 1
        %vm1067 = vcmp.eq.s32.totalorder %v1035, 1
        %vm1068 = vcmp.eq.s32.totalorder %v1036, 1
        %vm1069 = vcmp.eq.s32.totalorder %v1037, 1
        %vm1070 = vcmp.eq.s32.totalorder %v1038, 1
        %vm1071 = vcmp.eq.s32.totalorder %v1039, 1
        %vm1072 = vcmp.eq.s32.totalorder %v1040, 1
        %vm1073 = vcmp.eq.s32.totalorder %v1041, 1
        %vm1074 = vcmp.eq.s32.totalorder %v1042, 1
        %vm1075 = vcmp.eq.s32.totalorder %v1043, 1
        %vm1076 = vcmp.eq.s32.totalorder %v1044, 1
        %vm1077 = vcmp.eq.s32.totalorder %v1045, 1
        %vm1078 = vcmp.eq.s32.totalorder %v1046, 1
        %vm1079 = vcmp.eq.s32.totalorder %v1047, 1
        %vm1080 = vcmp.eq.s32.totalorder %v1048, 1
        %vm1081 = vcmp.eq.s32.totalorder %v1049, 1
        %vm1082 = vcmp.eq.s32.totalorder %v1050, 1
        %vm1083 = vcmp.eq.s32.totalorder %v1051, 1
        %vm1084 = vcmp.eq.s32.totalorder %v1052, 1
        %vm1085 = vcmp.eq.s32.totalorder %v1053, 1
        %vm1086 = vcmp.eq.s32.totalorder %v1054, 1
        %vm1087 = vcmp.eq.s32.totalorder %v1055, 1
        %v1088 = vsel %vm1056, %v929, %v925
        %v1089 = vsel %vm1057, %v931, %v833
        %v1090 = vsel %vm1058, %v933, %v835
        %v1091 = vsel %vm1059, %v935, %v837
        %v1092 = vsel %vm1060, %v937, %v839
        %v1093 = vsel %vm1061, %v939, %v841
        %v1094 = vsel %vm1062, %v941, %v843
        %v1095 = vsel %vm1063, %v943, %v845
        %v1096 = vsel %vm1064, %v945, %v847
        %v1097 = vsel %vm1065, %v947, %v849
        %v1098 = vsel %vm1066, %v949, %v851
        %v1099 = vsel %vm1067, %v951, %v853
        %v1100 = vsel %vm1068, %v953, %v855
        %v1101 = vsel %vm1069, %v955, %v857
        %v1102 = vsel %vm1070, %v957, %v859
        %v1103 = vsel %vm1071, %v959, %v861
        %v1104 = vsel %vm1072, %v961, %v863
        %v1105 = vsel %vm1073, %v963, %v865
        %v1106 = vsel %vm1074, %v965, %v867
        %v1107 = vsel %vm1075, %v967, %v869
        %v1108 = vsel %vm1076, %v969, %v871
        %v1109 = vsel %vm1077, %v971, %v873
        %v1110 = vsel %vm1078, %v973, %v875
        %v1111 = vsel %vm1079, %v975, %v877
        %v1112 = vsel %vm1080, %v977, %v879
        %v1113 = vsel %vm1081, %v979, %v881
        %v1114 = vsel %vm1082, %v981, %v883
        %v1115 = vsel %vm1083, %v983, %v885
        %v1116 = vsel %vm1084, %v985, %v887
        %v1117 = vsel %vm1085, %v987, %v889
        %v1118 = vsel %vm1086, %v989, %v891
        %v1119 = vsel %vm1087, %v1023, %v892
        %v1120 = vsel %vm700, 1, 0
        %v1121 = vsel %vm701, 1, 0
        %v1122 = vsel %vm702, 1, 0
        %v1123 = vsel %vm703, 1, 0
        %v1124 = vsel %vm704, 1, 0
        %v1125 = vsel %vm705, 1, 0
        %v1126 = vsel %vm706, 1, 0
        %v1127 = vsel %vm707, 1, 0
        %v1128 = vsel %vm708, 1, 0
        %v1129 = vsel %vm709, 1, 0
        %v1130 = vsel %vm710, 1, 0
        %v1131 = vsel %vm711, 1, 0
        %v1132 = vsel %vm712, 1, 0
        %v1133 = vsel %vm713, 1, 0
        %v1134 = vsel %vm714, 1, 0
        %v1135 = vsel %vm715, 1, 0
        %v1136 = vsel %vm716, 1, 0
        %v1137 = vsel %vm717, 1, 0
        %v1138 = vsel %vm718, 1, 0
        %v1139 = vsel %vm719, 1, 0
        %v1140 = vsel %vm720, 1, 0
        %v1141 = vsel %vm721, 1, 0
        %v1142 = vsel %vm722, 1, 0
        %v1143 = vsel %vm723, 1, 0
        %v1144 = vsel %vm724, 1, 0
        %v1145 = vsel %vm725, 1, 0
        %v1146 = vsel %vm726, 1, 0
        %v1147 = vsel %vm727, 1, 0
        %v1148 = vsel %vm728, 1, 0
        %v1149 = vsel %vm729, 1, 0
        %v1150 = vsel %vm730, 1, 0
        %v1151 = vsel %vm731, 1, 0
        %vm1152 = vcmp.eq.s32.totalorder %v1120, 1
        %vm1153 = vcmp.eq.s32.totalorder %v1121, 1
        %vm1154 = vcmp.eq.s32.totalorder %v1122, 1
        %vm1155 = vcmp.eq.s32.totalorder %v1123, 1
        %vm1156 = vcmp.eq.s32.totalorder %v1124, 1
        %vm1157 = vcmp.eq.s32.totalorder %v1125, 1
        %vm1158 = vcmp.eq.s32.totalorder %v1126, 1
        %vm1159 = vcmp.eq.s32.totalorder %v1127, 1
        %vm1160 = vcmp.eq.s32.totalorder %v1128, 1
        %vm1161 = vcmp.eq.s32.totalorder %v1129, 1
        %vm1162 = vcmp.eq.s32.totalorder %v1130, 1
        %vm1163 = vcmp.eq.s32.totalorder %v1131, 1
        %vm1164 = vcmp.eq.s32.totalorder %v1132, 1
        %vm1165 = vcmp.eq.s32.totalorder %v1133, 1
        %vm1166 = vcmp.eq.s32.totalorder %v1134, 1
        %vm1167 = vcmp.eq.s32.totalorder %v1135, 1
        %vm1168 = vcmp.eq.s32.totalorder %v1136, 1
        %vm1169 = vcmp.eq.s32.totalorder %v1137, 1
        %vm1170 = vcmp.eq.s32.totalorder %v1138, 1
        %vm1171 = vcmp.eq.s32.totalorder %v1139, 1
        %vm1172 = vcmp.eq.s32.totalorder %v1140, 1
        %vm1173 = vcmp.eq.s32.totalorder %v1141, 1
        %vm1174 = vcmp.eq.s32.totalorder %v1142, 1
        %vm1175 = vcmp.eq.s32.totalorder %v1143, 1
        %vm1176 = vcmp.eq.s32.totalorder %v1144, 1
        %vm1177 = vcmp.eq.s32.totalorder %v1145, 1
        %vm1178 = vcmp.eq.s32.totalorder %v1146, 1
        %vm1179 = vcmp.eq.s32.totalorder %v1147, 1
        %vm1180 = vcmp.eq.s32.totalorder %v1148, 1
        %vm1181 = vcmp.eq.s32.totalorder %v1149, 1
        %vm1182 = vcmp.eq.s32.totalorder %v1150, 1
        %vm1183 = vcmp.eq.s32.totalorder %v1151, 1
        %v1184 = vsel %vm1152, %v925, %v929
        %v1185 = vsel %vm1153, %v833, %v931
        %v1186 = vsel %vm1154, %v835, %v933
        %v1187 = vsel %vm1155, %v837, %v935
        %v1188 = vsel %vm1156, %v839, %v937
        %v1189 = vsel %vm1157, %v841, %v939
        %v1190 = vsel %vm1158, %v843, %v941
        %v1191 = vsel %vm1159, %v845, %v943
        %v1192 = vsel %vm1160, %v847, %v945
        %v1193 = vsel %vm1161, %v849, %v947
        %v1194 = vsel %vm1162, %v851, %v949
        %v1195 = vsel %vm1163, %v853, %v951
        %v1196 = vsel %vm1164, %v855, %v953
        %v1197 = vsel %vm1165, %v857, %v955
        %v1198 = vsel %vm1166, %v859, %v957
        %v1199 = vsel %vm1167, %v861, %v959
        %v1200 = vsel %vm1168, %v863, %v961
        %v1201 = vsel %vm1169, %v865, %v963
        %v1202 = vsel %vm1170, %v867, %v965
        %v1203 = vsel %vm1171, %v869, %v967
        %v1204 = vsel %vm1172, %v871, %v969
        %v1205 = vsel %vm1173, %v873, %v971
        %v1206 = vsel %vm1174, %v875, %v973
        %v1207 = vsel %vm1175, %v877, %v975
        %v1208 = vsel %vm1176, %v879, %v977
        %v1209 = vsel %vm1177, %v881, %v979
        %v1210 = vsel %vm1178, %v883, %v981
        %v1211 = vsel %vm1179, %v885, %v983
        %v1212 = vsel %vm1180, %v887, %v985
        %v1213 = vsel %vm1181, %v889, %v987
        %v1214 = vsel %vm1182, %v891, %v989
        %v1215 = vsel %vm1183, %v892, %v1023
        %v1216 = vsel %vm732, 1, 0
        %v1217 = vsel %vm733, 1, 0
        %v1218 = vsel %vm734, 1, 0
        %v1219 = vsel %vm735, 1, 0
        %v1220 = vsel %vm736, 1, 0
        %v1221 = vsel %vm737, 1, 0
        %v1222 = vsel %vm738, 1, 0
        %v1223 = vsel %vm739, 1, 0
        %v1224 = vsel %vm740, 1, 0
        %v1225 = vsel %vm741, 1, 0
        %v1226 = vsel %vm742, 1, 0
        %v1227 = vsel %vm743, 1, 0
        %v1228 = vsel %vm744, 1, 0
        %v1229 = vsel %vm745, 1, 0
        %v1230 = vsel %vm746, 1, 0
        %v1231 = vsel %vm747, 1, 0
        %v1232 = vsel %vm748, 1, 0
        %v1233 = vsel %vm749, 1, 0
        %v1234 = vsel %vm750, 1, 0
        %v1235 = vsel %vm751, 1, 0
        %v1236 = vsel %vm752, 1, 0
        %v1237 = vsel %vm753, 1, 0
        %v1238 = vsel %vm754, 1, 0
        %v1239 = vsel %vm755, 1, 0
        %v1240 = vsel %vm756, 1, 0
        %v1241 = vsel %vm757, 1, 0
        %v1242 = vsel %vm758, 1, 0
        %v1243 = vsel %vm759, 1, 0
        %v1244 = vsel %vm760, 1, 0
        %v1245 = vsel %vm761, 1, 0
        %v1246 = vsel %vm762, 1, 0
        %v1247 = vsel %vm763, 1, 0
        %vm1248 = vcmp.eq.s32.totalorder %v1216, 1
        %vm1249 = vcmp.eq.s32.totalorder %v1217, 1
        %vm1250 = vcmp.eq.s32.totalorder %v1218, 1
        %vm1251 = vcmp.eq.s32.totalorder %v1219, 1
        %vm1252 = vcmp.eq.s32.totalorder %v1220, 1
        %vm1253 = vcmp.eq.s32.totalorder %v1221, 1
        %vm1254 = vcmp.eq.s32.totalorder %v1222, 1
        %vm1255 = vcmp.eq.s32.totalorder %v1223, 1
        %vm1256 = vcmp.eq.s32.totalorder %v1224, 1
        %vm1257 = vcmp.eq.s32.totalorder %v1225, 1
        %vm1258 = vcmp.eq.s32.totalorder %v1226, 1
        %vm1259 = vcmp.eq.s32.totalorder %v1227, 1
        %vm1260 = vcmp.eq.s32.totalorder %v1228, 1
        %vm1261 = vcmp.eq.s32.totalorder %v1229, 1
        %vm1262 = vcmp.eq.s32.totalorder %v1230, 1
        %vm1263 = vcmp.eq.s32.totalorder %v1231, 1
        %vm1264 = vcmp.eq.s32.totalorder %v1232, 1
        %vm1265 = vcmp.eq.s32.totalorder %v1233, 1
        %vm1266 = vcmp.eq.s32.totalorder %v1234, 1
        %vm1267 = vcmp.eq.s32.totalorder %v1235, 1
        %vm1268 = vcmp.eq.s32.totalorder %v1236, 1
        %vm1269 = vcmp.eq.s32.totalorder %v1237, 1
        %vm1270 = vcmp.eq.s32.totalorder %v1238, 1
        %vm1271 = vcmp.eq.s32.totalorder %v1239, 1
        %vm1272 = vcmp.eq.s32.totalorder %v1240, 1
        %vm1273 = vcmp.eq.s32.totalorder %v1241, 1
        %vm1274 = vcmp.eq.s32.totalorder %v1242, 1
        %vm1275 = vcmp.eq.s32.totalorder %v1243, 1
        %vm1276 = vcmp.eq.s32.totalorder %v1244, 1
        %vm1277 = vcmp.eq.s32.totalorder %v1245, 1
        %vm1278 = vcmp.eq.s32.totalorder %v1246, 1
        %vm1279 = vcmp.eq.s32.totalorder %v1247, 1
        %v1280 = vsel %vm1248, %v1090, %v1118
        %v1281 = vsel %vm1248, %v221, %v249
        %v1282 = vsel %vm1248, %v1186, %v1214
        %v1283 = vsel %vm1249, %v1091, %v1119
        %v1284 = vsel %vm1249, %v222, %v250
        %v1285 = vsel %vm1249, %v1187, %v1215
        %v1286 = vsel %vm1250, %v1092, %v1088
        %v1287 = vsel %vm1250, %v223, %v219
        %v1288 = vsel %vm1250, %v1188, %v1184
        %v1289 = vsel %vm1251, %v1093, %v1089
        %v1290 = vsel %vm1251, %v224, %v220
        %v1291 = vsel %vm1251, %v1189, %v1185
        %v1292 = vsel %vm1252, %v1094, %v1090
        %v1293 = vsel %vm1252, %v225, %v221
        %v1294 = vsel %vm1252, %v1190, %v1186
        %v1295 = vsel %vm1253, %v1095, %v1091
        %v1296 = vsel %vm1253, %v226, %v222
        %v1297 = vsel %vm1253, %v1191, %v1187
        %v1298 = vsel %vm1254, %v1096, %v1092
        %v1299 = vsel %vm1254, %v227, %v223
        %v1300 = vsel %vm1254, %v1192, %v1188
        %v1301 = vsel %vm1255, %v1097, %v1093
        %v1302 = vsel %vm1255, %v228, %v224
        %v1303 = vsel %vm1255, %v1193, %v1189
        %v1304 = vsel %vm1256, %v1098, %v1094
        %v1305 = vsel %vm1256, %v229, %v225
        %v1306 = vsel %vm1256, %v1194, %v1190
        %v1307 = vsel %vm1257, %v1099, %v1095
        %v1308 = vsel %vm1257, %v230, %v226
        %v1309 = vsel %vm1257, %v1195, %v1191
        %v1310 = vsel %vm1258, %v1100, %v1096
        %v1311 = vsel %vm1258, %v231, %v227
        %v1312 = vsel %vm1258, %v1196, %v1192
        %v1313 = vsel %vm1259, %v1101, %v1097
        %v1314 = vsel %vm1259, %v232, %v228
        %v1315 = vsel %vm1259, %v1197, %v1193
        %v1316 = vsel %vm1260, %v1102, %v1098
        %v1317 = vsel %vm1260, %v233, %v229
        %v1318 = vsel %vm1260, %v1198, %v1194
        %v1319 = vsel %vm1261, %v1103, %v1099
        %v1320 = vsel %vm1261, %v234, %v230
        %v1321 = vsel %vm1261, %v1199, %v1195
        %v1322 = vsel %vm1262, %v1104, %v1100
        %v1323 = vsel %vm1262, %v235, %v231
        %v1324 = vsel %vm1262, %v1200, %v1196
        %v1325 = vsel %vm1263, %v1105, %v1101
        %v1326 = vsel %vm1263, %v236, %v232
        %v1327 = vsel %vm1263, %v1201, %v1197
        %v1328 = vsel %vm1264, %v1106, %v1102
        %v1329 = vsel %vm1264, %v237, %v233
        %v1330 = vsel %vm1264, %v1202, %v1198
        %v1331 = vsel %vm1265, %v1107, %v1103
        %v1332 = vsel %vm1265, %v238, %v234
        %v1333 = vsel %vm1265, %v1203, %v1199
        %v1334 = vsel %vm1266, %v1108, %v1104
        %v1335 = vsel %vm1266, %v239, %v235
        %v1336 = vsel %vm1266, %v1204, %v1200
        %v1337 = vsel %vm1267, %v1109, %v1105
        %v1338 = vsel %vm1267, %v240, %v236
        %v1339 = vsel %vm1267, %v1205, %v1201
        %v1340 = vsel %vm1268, %v1110, %v1106
        %v1341 = vsel %vm1268, %v241, %v237
        %v1342 = vsel %vm1268, %v1206, %v1202
        %v1343 = vsel %vm1269, %v1111, %v1107
        %v1344 = vsel %vm1269, %v242, %v238
        %v1345 = vsel %vm1269, %v1207, %v1203
        %v1346 = vsel %vm1270, %v1112, %v1108
        %v1347 = vsel %vm1270, %v243, %v239
        %v1348 = vsel %vm1270, %v1208, %v1204
        %v1349 = vsel %vm1271, %v1113, %v1109
        %v1350 = vsel %vm1271, %v244, %v240
        %v1351 = vsel %vm1271, %v1209, %v1205
        %v1352 = vsel %vm1272, %v1114, %v1110
        %v1353 = vsel %vm1272, %v245, %v241
        %v1354 = vsel %vm1272, %v1210, %v1206
        %v1355 = vsel %vm1273, %v1115, %v1111
        %v1356 = vsel %vm1273, %v246, %v242
        %v1357 = vsel %vm1273, %v1211, %v1207
        %v1358 = vsel %vm1274, %v1116, %v1112
        %v1359 = vsel %vm1274, %v247, %v243
        %v1360 = vsel %vm1274, %v1212, %v1208
        %v1361 = vsel %vm1275, %v1117, %v1113
        %v1362 = vsel %vm1275, %v248, %v244
        %v1363 = vsel %vm1275, %v1213, %v1209
        %v1364 = vsel %vm1276, %v1118, %v1114
        %v1365 = vsel %vm1276, %v249, %v245
        %v1366 = vsel %vm1276, %v1214, %v1210
        %v1367 = vsel %vm1277, %v1119, %v1115
        %v1368 = vsel %vm1277, %v250, %v246
        %v1369 = vsel %vm1277, %v1215, %v1211
        %v1370 = vsel %vm1278, %v1088, %v1116
        %v1371 = vsel %vm1278, %v219, %v247
        %v1372 = vsel %vm1278, %v1184, %v1212
        %v1373 = vsel %vm1279, %v1089, %v1117
        %v1374 = vsel %vm1279, %v220, %v248
        %v1375 = vsel %vm1279, %v1185, %v1213
        %v1376 = vsel %vm764, 1, 0
        %v1377 = vsel %vm765, 1, 0
        %v1378 = vsel %vm766, 1, 0
        %v1379 = vsel %vm767, 1, 0
        %v1380 = vsel %vm768, 1, 0
        %v1381 = vsel %vm769, 1, 0
        %v1382 = vsel %vm770, 1, 0
        %v1383 = vsel %vm771, 1, 0
        %v1384 = vsel %vm772, 1, 0
        %v1385 = vsel %vm773, 1, 0
        %v1386 = vsel %vm774, 1, 0
        %v1387 = vsel %vm775, 1, 0
        %v1388 = vsel %vm776, 1, 0
        %v1389 = vsel %vm777, 1, 0
        %v1390 = vsel %vm778, 1, 0
        %v1391 = vsel %vm779, 1, 0
        %v1392 = vsel %vm780, 1, 0
        %v1393 = vsel %vm781, 1, 0
        %v1394 = vsel %vm782, 1, 0
        %v1395 = vsel %vm783, 1, 0
        %v1396 = vsel %vm784, 1, 0
        %v1397 = vsel %vm785, 1, 0
        %v1398 = vsel %vm786, 1, 0
        %v1399 = vsel %vm787, 1, 0
        %v1400 = vsel %vm788, 1, 0
        %v1401 = vsel %vm789, 1, 0
        %v1402 = vsel %vm790, 1, 0
        %v1403 = vsel %vm791, 1, 0
        %v1404 = vsel %vm792, 1, 0
        %v1405 = vsel %vm793, 1, 0
        %v1406 = vsel %vm794, 1, 0
        %v1407 = vsel %vm795, 1, 0
        %vm1408 = vcmp.eq.s32.totalorder %v1376, 1
        %vm1409 = vcmp.eq.s32.totalorder %v1377, 1
        %vm1410 = vcmp.eq.s32.totalorder %v1378, 1
        %vm1411 = vcmp.eq.s32.totalorder %v1379, 1
        %vm1412 = vcmp.eq.s32.totalorder %v1380, 1
        %vm1413 = vcmp.eq.s32.totalorder %v1381, 1
        %vm1414 = vcmp.eq.s32.totalorder %v1382, 1
        %vm1415 = vcmp.eq.s32.totalorder %v1383, 1
        %vm1416 = vcmp.eq.s32.totalorder %v1384, 1
        %vm1417 = vcmp.eq.s32.totalorder %v1385, 1
        %vm1418 = vcmp.eq.s32.totalorder %v1386, 1
        %vm1419 = vcmp.eq.s32.totalorder %v1387, 1
        %vm1420 = vcmp.eq.s32.totalorder %v1388, 1
        %vm1421 = vcmp.eq.s32.totalorder %v1389, 1
        %vm1422 = vcmp.eq.s32.totalorder %v1390, 1
        %vm1423 = vcmp.eq.s32.totalorder %v1391, 1
        %vm1424 = vcmp.eq.s32.totalorder %v1392, 1
        %vm1425 = vcmp.eq.s32.totalorder %v1393, 1
        %vm1426 = vcmp.eq.s32.totalorder %v1394, 1
        %vm1427 = vcmp.eq.s32.totalorder %v1395, 1
        %vm1428 = vcmp.eq.s32.totalorder %v1396, 1
        %vm1429 = vcmp.eq.s32.totalorder %v1397, 1
        %vm1430 = vcmp.eq.s32.totalorder %v1398, 1
        %vm1431 = vcmp.eq.s32.totalorder %v1399, 1
        %vm1432 = vcmp.eq.s32.totalorder %v1400, 1
        %vm1433 = vcmp.eq.s32.totalorder %v1401, 1
        %vm1434 = vcmp.eq.s32.totalorder %v1402, 1
        %vm1435 = vcmp.eq.s32.totalorder %v1403, 1
        %vm1436 = vcmp.eq.s32.totalorder %v1404, 1
        %vm1437 = vcmp.eq.s32.totalorder %v1405, 1
        %vm1438 = vcmp.eq.s32.totalorder %v1406, 1
        %vm1439 = vcmp.eq.s32.totalorder %v1407, 1
        %v1440 = vsel %vm1408, %v1118, %v1090
        %v1441 = vsel %vm1408, %v249, %v221
        %v1442 = vsel %vm1408, %v1214, %v1186
        %v1443 = vsel %vm1409, %v1119, %v1091
        %v1444 = vsel %vm1409, %v250, %v222
        %v1445 = vsel %vm1409, %v1215, %v1187
        %v1446 = vsel %vm1410, %v1088, %v1092
        %v1447 = vsel %vm1410, %v219, %v223
        %v1448 = vsel %vm1410, %v1184, %v1188
        %v1449 = vsel %vm1411, %v1089, %v1093
        %v1450 = vsel %vm1411, %v220, %v224
        %v1451 = vsel %vm1411, %v1185, %v1189
        %v1452 = vsel %vm1412, %v1090, %v1094
        %v1453 = vsel %vm1412, %v221, %v225
        %v1454 = vsel %vm1412, %v1186, %v1190
        %v1455 = vsel %vm1413, %v1091, %v1095
        %v1456 = vsel %vm1413, %v222, %v226
        %v1457 = vsel %vm1413, %v1187, %v1191
        %v1458 = vsel %vm1414, %v1092, %v1096
        %v1459 = vsel %vm1414, %v223, %v227
        %v1460 = vsel %vm1414, %v1188, %v1192
        %v1461 = vsel %vm1415, %v1093, %v1097
        %v1462 = vsel %vm1415, %v224, %v228
        %v1463 = vsel %vm1415, %v1189, %v1193
        %v1464 = vsel %vm1416, %v1094, %v1098
        %v1465 = vsel %vm1416, %v225, %v229
        %v1466 = vsel %vm1416, %v1190, %v1194
        %v1467 = vsel %vm1417, %v1095, %v1099
        %v1468 = vsel %vm1417, %v226, %v230
        %v1469 = vsel %vm1417, %v1191, %v1195
        %v1470 = vsel %vm1418, %v1096, %v1100
        %v1471 = vsel %vm1418, %v227, %v231
        %v1472 = vsel %vm1418, %v1192, %v1196
        %v1473 = vsel %vm1419, %v1097, %v1101
        %v1474 = vsel %vm1419, %v228, %v232
        %v1475 = vsel %vm1419, %v1193, %v1197
        %v1476 = vsel %vm1420, %v1098, %v1102
        %v1477 = vsel %vm1420, %v229, %v233
        %v1478 = vsel %vm1420, %v1194, %v1198
        %v1479 = vsel %vm1421, %v1099, %v1103
        %v1480 = vsel %vm1421, %v230, %v234
        %v1481 = vsel %vm1421, %v1195, %v1199
        %v1482 = vsel %vm1422, %v1100, %v1104
        %v1483 = vsel %vm1422, %v231, %v235
        %v1484 = vsel %vm1422, %v1196, %v1200
        %v1485 = vsel %vm1423, %v1101, %v1105
        %v1486 = vsel %vm1423, %v232, %v236
        %v1487 = vsel %vm1423, %v1197, %v1201
        %v1488 = vsel %vm1424, %v1102, %v1106
        %v1489 = vsel %vm1424, %v233, %v237
        %v1490 = vsel %vm1424, %v1198, %v1202
        %v1491 = vsel %vm1425, %v1103, %v1107
        %v1492 = vsel %vm1425, %v234, %v238
        %v1493 = vsel %vm1425, %v1199, %v1203
        %v1494 = vsel %vm1426, %v1104, %v1108
        %v1495 = vsel %vm1426, %v235, %v239
        %v1496 = vsel %vm1426, %v1200, %v1204
        %v1497 = vsel %vm1427, %v1105, %v1109
        %v1498 = vsel %vm1427, %v236, %v240
        %v1499 = vsel %vm1427, %v1201, %v1205
        %v1500 = vsel %vm1428, %v1106, %v1110
        %v1501 = vsel %vm1428, %v237, %v241
        %v1502 = vsel %vm1428, %v1202, %v1206
        %v1503 = vsel %vm1429, %v1107, %v1111
        %v1504 = vsel %vm1429, %v238, %v242
        %v1505 = vsel %vm1429, %v1203, %v1207
        %v1506 = vsel %vm1430, %v1108, %v1112
        %v1507 = vsel %vm1430, %v239, %v243
        %v1508 = vsel %vm1430, %v1204, %v1208
        %v1509 = vsel %vm1431, %v1109, %v1113
        %v1510 = vsel %vm1431, %v240, %v244
        %v1511 = vsel %vm1431, %v1205, %v1209
        %v1512 = vsel %vm1432, %v1110, %v1114
        %v1513 = vsel %vm1432, %v241, %v245
        %v1514 = vsel %vm1432, %v1206, %v1210
        %v1515 = vsel %vm1433, %v1111, %v1115
        %v1516 = vsel %vm1433, %v242, %v246
        %v1517 = vsel %vm1433, %v1207, %v1211
        %v1518 = vsel %vm1434, %v1112, %v1116
        %v1519 = vsel %vm1434, %v243, %v247
        %v1520 = vsel %vm1434, %v1208, %v1212
        %v1521 = vsel %vm1435, %v1113, %v1117
        %v1522 = vsel %vm1435, %v244, %v248
        %v1523 = vsel %vm1435, %v1209, %v1213
        %v1524 = vsel %vm1436, %v1114, %v1118
        %v1525 = vsel %vm1436, %v245, %v249
        %v1526 = vsel %vm1436, %v1210, %v1214
        %v1527 = vsel %vm1437, %v1115, %v1119
        %v1528 = vsel %vm1437, %v246, %v250
        %v1529 = vsel %vm1437, %v1211, %v1215
        %v1530 = vsel %vm1438, %v1116, %v1088
        %v1531 = vsel %vm1438, %v247, %v219
        %v1532 = vsel %vm1438, %v1212, %v1184
        %v1533 = vsel %vm1439, %v1117, %v1089
        %v1534 = vsel %vm1439, %v248, %v220
        %v1535 = vsel %vm1439, %v1213, %v1185
        %v1536 = vpack.c.bf16 %v1283, %v1280
        %v1537 = vpack.c.bf16 %v1284, %v1281
        %v1538 = vpack.c.bf16 %v1285, %v1282
        %v1539 = vpack.c.bf16 %v1089, %v1088
        %v1540 = vpack.c.bf16 %v220, %v219
        %v1541 = vpack.c.bf16 %v1185, %v1184
        %v1542 = vpack.c.bf16 %v1443, %v1440
        %v1543 = vpack.c.bf16 %v1444, %v1441
        %v1544 = vpack.c.bf16 %v1445, %v1442
        %v1545 = vpack.c.bf16 %v1289, %v1286
        %v1546 = vpack.c.bf16 %v1290, %v1287
        %v1547 = vpack.c.bf16 %v1291, %v1288
        %v1548 = vpack.c.bf16 %v1091, %v1090
        %v1549 = vpack.c.bf16 %v222, %v221
        %v1550 = vpack.c.bf16 %v1187, %v1186
        %v1551 = vpack.c.bf16 %v1449, %v1446
        %v1552 = vpack.c.bf16 %v1450, %v1447
        %v1553 = vpack.c.bf16 %v1451, %v1448
        %v1554 = vpack.c.bf16 %v1295, %v1292
        %v1555 = vpack.c.bf16 %v1296, %v1293
        %v1556 = vpack.c.bf16 %v1297, %v1294
        %v1557 = vpack.c.bf16 %v1093, %v1092
        %v1558 = vpack.c.bf16 %v224, %v223
        %v1559 = vpack.c.bf16 %v1189, %v1188
        %v1560 = vpack.c.bf16 %v1455, %v1452
        %v1561 = vpack.c.bf16 %v1456, %v1453
        %v1562 = vpack.c.bf16 %v1457, %v1454
        %v1563 = vpack.c.bf16 %v1301, %v1298
        %v1564 = vpack.c.bf16 %v1302, %v1299
        %v1565 = vpack.c.bf16 %v1303, %v1300
        %v1566 = vpack.c.bf16 %v1095, %v1094
        %v1567 = vpack.c.bf16 %v226, %v225
        %v1568 = vpack.c.bf16 %v1191, %v1190
        %v1569 = vpack.c.bf16 %v1461, %v1458
        %v1570 = vpack.c.bf16 %v1462, %v1459
        %v1571 = vpack.c.bf16 %v1463, %v1460
        %v1572 = vpack.c.bf16 %v1307, %v1304
        %v1573 = vpack.c.bf16 %v1308, %v1305
        %v1574 = vpack.c.bf16 %v1309, %v1306
        %v1575 = vpack.c.bf16 %v1097, %v1096
        %v1576 = vpack.c.bf16 %v228, %v227
        %v1577 = vpack.c.bf16 %v1193, %v1192
        %v1578 = vpack.c.bf16 %v1467, %v1464
        %v1579 = vpack.c.bf16 %v1468, %v1465
        %v1580 = vpack.c.bf16 %v1469, %v1466
        %v1581 = vpack.c.bf16 %v1313, %v1310
        %v1582 = vpack.c.bf16 %v1314, %v1311
        %v1583 = vpack.c.bf16 %v1315, %v1312
        %v1584 = vpack.c.bf16 %v1099, %v1098
        %v1585 = vpack.c.bf16 %v230, %v229
        %v1586 = vpack.c.bf16 %v1195, %v1194
        %v1587 = vpack.c.bf16 %v1473, %v1470
        %v1588 = vpack.c.bf16 %v1474, %v1471
        %v1589 = vpack.c.bf16 %v1475, %v1472
        %v1590 = vpack.c.bf16 %v1319, %v1316
        %v1591 = vpack.c.bf16 %v1320, %v1317
        %v1592 = vpack.c.bf16 %v1321, %v1318
        %v1593 = vpack.c.bf16 %v1101, %v1100
        %v1594 = vpack.c.bf16 %v232, %v231
        %v1595 = vpack.c.bf16 %v1197, %v1196
        %v1596 = vpack.c.bf16 %v1479, %v1476
        %v1597 = vpack.c.bf16 %v1480, %v1477
        %v1598 = vpack.c.bf16 %v1481, %v1478
        %v1599 = vpack.c.bf16 %v1325, %v1322
        %v1600 = vpack.c.bf16 %v1326, %v1323
        %v1601 = vpack.c.bf16 %v1327, %v1324
        %v1602 = vpack.c.bf16 %v1103, %v1102
        %v1603 = vpack.c.bf16 %v234, %v233
        %v1604 = vpack.c.bf16 %v1199, %v1198
        %v1605 = vpack.c.bf16 %v1485, %v1482
        %v1606 = vpack.c.bf16 %v1486, %v1483
        %v1607 = vpack.c.bf16 %v1487, %v1484
        %v1608 = vpack.c.bf16 %v1331, %v1328
        %v1609 = vpack.c.bf16 %v1332, %v1329
        %v1610 = vpack.c.bf16 %v1333, %v1330
        %v1611 = vpack.c.bf16 %v1105, %v1104
        %v1612 = vpack.c.bf16 %v236, %v235
        %v1613 = vpack.c.bf16 %v1201, %v1200
        %v1614 = vpack.c.bf16 %v1491, %v1488
        %v1615 = vpack.c.bf16 %v1492, %v1489
        %v1616 = vpack.c.bf16 %v1493, %v1490
        %v1617 = vpack.c.bf16 %v1337, %v1334
        %v1618 = vpack.c.bf16 %v1338, %v1335
        %v1619 = vpack.c.bf16 %v1339, %v1336
        %v1620 = vpack.c.bf16 %v1107, %v1106
        %v1621 = vpack.c.bf16 %v238, %v237
        %v1622 = vpack.c.bf16 %v1203, %v1202
        %v1623 = vpack.c.bf16 %v1497, %v1494
        %v1624 = vpack.c.bf16 %v1498, %v1495
        %v1625 = vpack.c.bf16 %v1499, %v1496
        %v1626 = vpack.c.bf16 %v1343, %v1340
        %v1627 = vpack.c.bf16 %v1344, %v1341
        %v1628 = vpack.c.bf16 %v1345, %v1342
        %v1629 = vpack.c.bf16 %v1109, %v1108
        %v1630 = vpack.c.bf16 %v240, %v239
        %v1631 = vpack.c.bf16 %v1205, %v1204
        %v1632 = vpack.c.bf16 %v1503, %v1500
        %v1633 = vpack.c.bf16 %v1504, %v1501
        %v1634 = vpack.c.bf16 %v1505, %v1502
        %v1635 = vpack.c.bf16 %v1349, %v1346
        %v1636 = vpack.c.bf16 %v1350, %v1347
        %v1637 = vpack.c.bf16 %v1351, %v1348
        %v1638 = vpack.c.bf16 %v1111, %v1110
        %v1639 = vpack.c.bf16 %v242, %v241
        %v1640 = vpack.c.bf16 %v1207, %v1206
        %v1641 = vpack.c.bf16 %v1509, %v1506
        %v1642 = vpack.c.bf16 %v1510, %v1507
        %v1643 = vpack.c.bf16 %v1511, %v1508
        %v1644 = vpack.c.bf16 %v1355, %v1352
        %v1645 = vpack.c.bf16 %v1356, %v1353
        %v1646 = vpack.c.bf16 %v1357, %v1354
        %v1647 = vpack.c.bf16 %v1113, %v1112
        %v1648 = vpack.c.bf16 %v244, %v243
        %v1649 = vpack.c.bf16 %v1209, %v1208
        %v1650 = vpack.c.bf16 %v1515, %v1512
        %v1651 = vpack.c.bf16 %v1516, %v1513
        %v1652 = vpack.c.bf16 %v1517, %v1514
        %v1653 = vpack.c.bf16 %v1361, %v1358
        %v1654 = vpack.c.bf16 %v1362, %v1359
        %v1655 = vpack.c.bf16 %v1363, %v1360
        %v1656 = vpack.c.bf16 %v1115, %v1114
        %v1657 = vpack.c.bf16 %v246, %v245
        %v1658 = vpack.c.bf16 %v1211, %v1210
        %v1659 = vpack.c.bf16 %v1521, %v1518
        %v1660 = vpack.c.bf16 %v1522, %v1519
        %v1661 = vpack.c.bf16 %v1523, %v1520
        %v1662 = vpack.c.bf16 %v1367, %v1364
        %v1663 = vpack.c.bf16 %v1368, %v1365
        %v1664 = vpack.c.bf16 %v1369, %v1366
        %v1665 = vpack.c.bf16 %v1117, %v1116
        %v1666 = vpack.c.bf16 %v248, %v247
        %v1667 = vpack.c.bf16 %v1213, %v1212
        %v1668 = vpack.c.bf16 %v1527, %v1524
        %v1669 = vpack.c.bf16 %v1528, %v1525
        %v1670 = vpack.c.bf16 %v1529, %v1526
        %v1671 = vpack.c.bf16 %v1373, %v1370
        %v1672 = vpack.c.bf16 %v1374, %v1371
        %v1673 = vpack.c.bf16 %v1375, %v1372
        %v1674 = vpack.c.bf16 %v1119, %v1118
        %v1675 = vpack.c.bf16 %v250, %v249
        %v1676 = vpack.c.bf16 %v1215, %v1214
        %v1677 = vpack.c.bf16 %v1533, %v1530
        %v1678 = vpack.c.bf16 %v1534, %v1531
        %v1679 = vpack.c.bf16 %v1535, %v1532
        %v1680 = vld [vmem:[#allocation5] sm:$0xf]
        %v1681 = vld [vmem:[#allocation5 + $0x4] sm:$0xf]
        %v1682 = vld [vmem:[#allocation5 + $0x8] sm:$0xf]
        %v1683 = vld [vmem:[#allocation5 + $0xc] sm:$0xf]
        %v1684 = vld [vmem:[#allocation5 + $0x10] sm:$0xf]
        %v1685 = vld [vmem:[#allocation5 + $0x14] sm:$0xf]
        %v1686 = vld [vmem:[#allocation5 + $0x18] sm:$0xf]
        %v1687 = vld [vmem:[#allocation5 + $0x1c] sm:$0xf]
        %v1688 = vld [vmem:[#allocation5 + $0x20] sm:$0xf]
        %v1689 = vld [vmem:[#allocation5 + $0x24] sm:$0xf]
        %v1690 = vld [vmem:[#allocation5 + $0x28] sm:$0xf]
        %v1691 = vld [vmem:[#allocation5 + $0x2c] sm:$0xf]
        %v1692 = vld [vmem:[#allocation5 + $0x30] sm:$0xf]
        %v1693 = vld [vmem:[#allocation5 + $0x34] sm:$0xf]
        %v1694 = vld [vmem:[#allocation5 + $0x38] sm:$0xf]
        %v1695 = vld [vmem:[#allocation5 + $0x3c] sm:$0xf]
        %v1696 = vld [vmem:[#allocation5 + $0x40] sm:$0xf]
        %v1697 = vld [vmem:[#allocation5 + $0x44] sm:$0xf]
        %v1698 = vld [vmem:[#allocation5 + $0x48] sm:$0xf]
        %v1699 = vld [vmem:[#allocation5 + $0x4c] sm:$0xf]
        %v1700 = vld [vmem:[#allocation5 + $0x50] sm:$0xf]
        %v1701 = vld [vmem:[#allocation5 + $0x54] sm:$0xf]
        %v1702 = vld [vmem:[#allocation5 + $0x58] sm:$0xf]
        %v1703 = vld [vmem:[#allocation5 + $0x5c] sm:$0xf]
        %v1704 = vld [vmem:[#allocation5 + $0x60] sm:$0xf]
        %v1705 = vld [vmem:[#allocation5 + $0x64] sm:$0xf]
        %v1706 = vld [vmem:[#allocation5 + $0x68] sm:$0xf]
        %v1707 = vld [vmem:[#allocation5 + $0x6c] sm:$0xf]
        %v1708 = vld [vmem:[#allocation5 + $0x70] sm:$0xf]
        %v1709 = vld [vmem:[#allocation5 + $0x74] sm:$0xf]
        %v1710 = vld [vmem:[#allocation5 + $0x78] sm:$0xf]
        %v1711 = vld [vmem:[#allocation5 + $0x7c] sm:$0xf]
        %v1712 = vld [vmem:[#allocation5 + $0x80] sm:$0xf]
        %v1713 = vld [vmem:[#allocation5 + $0x84] sm:$0xf]
        %v1714 = vld [vmem:[#allocation5 + $0x88] sm:$0xf]
        %v1715 = vld [vmem:[#allocation5 + $0x8c] sm:$0xf]
        %v1716 = vld [vmem:[#allocation5 + $0x90] sm:$0xf]
        %v1717 = vld [vmem:[#allocation5 + $0x94] sm:$0xf]
        %v1718 = vld [vmem:[#allocation5 + $0x98] sm:$0xf]
        %v1719 = vld [vmem:[#allocation5 + $0x9c] sm:$0xf]
        %v1720 = vld [vmem:[#allocation5 + $0xa0] sm:$0xf]
        %v1721 = vld [vmem:[#allocation5 + $0xa4] sm:$0xf]
        %v1722 = vld [vmem:[#allocation5 + $0xa8] sm:$0xf]
        %v1723 = vld [vmem:[#allocation5 + $0xac] sm:$0xf]
        %v1724 = vld [vmem:[#allocation5 + $0xb0] sm:$0xf]
        %v1725 = vld [vmem:[#allocation5 + $0xb4] sm:$0xf]
        %v1726 = vld [vmem:[#allocation5 + $0xb8] sm:$0xf]
        %v1727 = vld [vmem:[#allocation5 + $0xbc] sm:$0xf]
        %v1728 = vld [vmem:[#allocation5 + $0xc0] sm:$0xf]
        %v1729 = vld [vmem:[#allocation5 + $0xc4] sm:$0xf]
        %v1730 = vld [vmem:[#allocation5 + $0xc8] sm:$0xf]
        %v1731 = vld [vmem:[#allocation5 + $0xcc] sm:$0xf]
        %v1732 = vld [vmem:[#allocation5 + $0xd0] sm:$0xf]
        %v1733 = vld [vmem:[#allocation5 + $0xd4] sm:$0xf]
        %v1734 = vld [vmem:[#allocation5 + $0xd8] sm:$0xf]
        %v1735 = vld [vmem:[#allocation5 + $0xdc] sm:$0xf]
        %v1736 = vld [vmem:[#allocation5 + $0xe0] sm:$0xf]
        %v1737 = vld [vmem:[#allocation5 + $0xe4] sm:$0xf]
        %v1738 = vld [vmem:[#allocation5 + $0xe8] sm:$0xf]
        %v1739 = vld [vmem:[#allocation5 + $0xec] sm:$0xf]
        %v1740 = vld [vmem:[#allocation5 + $0xf0] sm:$0xf]
        %v1741 = vld [vmem:[#allocation5 + $0xf4] sm:$0xf]
        %v1742 = vld [vmem:[#allocation5 + $0xf8] sm:$0xf]
        %v1743 = vld [vmem:[#allocation5 + $0xfc] sm:$0xf]
        %v1744 = vld [vmem:[#allocation5 + $0x100] sm:$0xf]
        %v1745 = vld [vmem:[#allocation5 + $0x104] sm:$0xf]
        %v1746 = vld [vmem:[#allocation5 + $0x108] sm:$0xf]
        %v1747 = vld [vmem:[#allocation5 + $0x10c] sm:$0xf]
        %v1748 = vld [vmem:[#allocation5 + $0x110] sm:$0xf]
        %v1749 = vld [vmem:[#allocation5 + $0x114] sm:$0xf]
        %v1750 = vld [vmem:[#allocation5 + $0x118] sm:$0xf]
        %v1751 = vld [vmem:[#allocation5 + $0x11c] sm:$0xf]
        %v1752 = vld [vmem:[#allocation5 + $0x120] sm:$0xf]
        %v1753 = vld [vmem:[#allocation5 + $0x124] sm:$0xf]
        %v1754 = vld [vmem:[#allocation5 + $0x128] sm:$0xf]
        %v1755 = vld [vmem:[#allocation5 + $0x12c] sm:$0xf]
        %v1756 = vld [vmem:[#allocation5 + $0x130] sm:$0xf]
        %v1757 = vld [vmem:[#allocation5 + $0x134] sm:$0xf]
        %v1758 = vld [vmem:[#allocation5 + $0x138] sm:$0xf]
        %v1759 = vld [vmem:[#allocation5 + $0x13c] sm:$0xf]
        %v1760 = vld [vmem:[#allocation5 + $0x140] sm:$0xf]
        %v1761 = vld [vmem:[#allocation5 + $0x144] sm:$0xf]
        %v1762 = vld [vmem:[#allocation5 + $0x148] sm:$0xf]
        %v1763 = vld [vmem:[#allocation5 + $0x14c] sm:$0xf]
        %v1764 = vld [vmem:[#allocation5 + $0x150] sm:$0xf]
        %v1765 = vld [vmem:[#allocation5 + $0x154] sm:$0xf]
        %v1766 = vld [vmem:[#allocation5 + $0x158] sm:$0xf]
        %v1767 = vld [vmem:[#allocation5 + $0x15c] sm:$0xf]
        %v1768 = vld [vmem:[#allocation5 + $0x160] sm:$0xf]
        %v1769 = vld [vmem:[#allocation5 + $0x164] sm:$0xf]
        %v1770 = vld [vmem:[#allocation5 + $0x168] sm:$0xf]
        %v1771 = vld [vmem:[#allocation5 + $0x16c] sm:$0xf]
        %v1772 = vld [vmem:[#allocation5 + $0x170] sm:$0xf]
        %v1773 = vld [vmem:[#allocation5 + $0x174] sm:$0xf]
        %v1774 = vld [vmem:[#allocation5 + $0x178] sm:$0xf]
        %v1775 = vld [vmem:[#allocation5 + $0x17c] sm:$0xf]
        %v1776 = vld [vmem:[#allocation5 + $0x180] sm:$0xf]
        %v1777 = vld [vmem:[#allocation5 + $0x184] sm:$0xf]
        %v1778 = vld [vmem:[#allocation5 + $0x188] sm:$0xf]
        %v1779 = vld [vmem:[#allocation5 + $0x18c] sm:$0xf]
        %v1780 = vld [vmem:[#allocation5 + $0x190] sm:$0xf]
        %v1781 = vld [vmem:[#allocation5 + $0x194] sm:$0xf]
        %v1782 = vld [vmem:[#allocation5 + $0x198] sm:$0xf]
        %v1783 = vld [vmem:[#allocation5 + $0x19c] sm:$0xf]
        %v1784 = vld [vmem:[#allocation5 + $0x1a0] sm:$0xf]
        %v1785 = vld [vmem:[#allocation5 + $0x1a4] sm:$0xf]
        %v1786 = vld [vmem:[#allocation5 + $0x1a8] sm:$0xf]
        %v1787 = vld [vmem:[#allocation5 + $0x1ac] sm:$0xf]
        %v1788 = vld [vmem:[#allocation5 + $0x1b0] sm:$0xf]
        %v1789 = vld [vmem:[#allocation5 + $0x1b4] sm:$0xf]
        %v1790 = vld [vmem:[#allocation5 + $0x1b8] sm:$0xf]
        %v1791 = vld [vmem:[#allocation5 + $0x1bc] sm:$0xf]
        %v1792 = vld [vmem:[#allocation5 + $0x1c0] sm:$0xf]
        %v1793 = vld [vmem:[#allocation5 + $0x1c4] sm:$0xf]
        %v1794 = vld [vmem:[#allocation5 + $0x1c8] sm:$0xf]
        %v1795 = vld [vmem:[#allocation5 + $0x1cc] sm:$0xf]
        %v1796 = vld [vmem:[#allocation5 + $0x1d0] sm:$0xf]
        %v1797 = vld [vmem:[#allocation5 + $0x1d4] sm:$0xf]
        %v1798 = vld [vmem:[#allocation5 + $0x1d8] sm:$0xf]
        %v1799 = vld [vmem:[#allocation5 + $0x1dc] sm:$0xf]
        %v1800 = vld [vmem:[#allocation5 + $0x1e0] sm:$0xf]
        %v1801 = vld [vmem:[#allocation5 + $0x1e4] sm:$0xf]
        %v1802 = vld [vmem:[#allocation5 + $0x1e8] sm:$0xf]
        %v1803 = vld [vmem:[#allocation5 + $0x1ec] sm:$0xf]
        %v1804 = vld [vmem:[#allocation5 + $0x1f0] sm:$0xf]
        %v1805 = vld [vmem:[#allocation5 + $0x1f4] sm:$0xf]
        %v1806 = vld [vmem:[#allocation5 + $0x1f8] sm:$0xf]
        %v1807 = vld [vmem:[#allocation5 + $0x1fc] sm:$0xf]
        %v1808 = vld [vmem:[#allocation5 + $0x200] sm:$0xf]
        %v1809 = vld [vmem:[#allocation5 + $0x204] sm:$0xf]
        %v1810 = vld [vmem:[#allocation5 + $0x208] sm:$0xf]
        %v1811 = vld [vmem:[#allocation5 + $0x20c] sm:$0xf]
        %v1812 = vld [vmem:[#allocation5 + $0x210] sm:$0xf]
        %v1813 = vld [vmem:[#allocation5 + $0x214] sm:$0xf]
        %v1814 = vld [vmem:[#allocation5 + $0x218] sm:$0xf]
        %v1815 = vld [vmem:[#allocation5 + $0x21c] sm:$0xf]
        %v1816 = vld [vmem:[#allocation5 + $0x220] sm:$0xf]
        %v1817 = vld [vmem:[#allocation5 + $0x224] sm:$0xf]
        %v1818 = vld [vmem:[#allocation5 + $0x228] sm:$0xf]
        %v1819 = vld [vmem:[#allocation5 + $0x22c] sm:$0xf]
        %v1820 = vld [vmem:[#allocation5 + $0x230] sm:$0xf]
        %v1821 = vld [vmem:[#allocation5 + $0x234] sm:$0xf]
        %v1822 = vld [vmem:[#allocation5 + $0x238] sm:$0xf]
        %v1823 = vld [vmem:[#allocation5 + $0x23c] sm:$0xf]
        %v1968 = vunpack.c.l.b16 %v1680
        %v1969 = vunpack.c.l.b16 %v1681
        %v1970 = vunpack.c.l.b16 %v1682
        %v1971 = vunpack.c.l.b16 %v1683
        %v1972 = vunpack.c.l.b16 %v1684
        %v1973 = vunpack.c.l.b16 %v1685
        %v1974 = vunpack.c.l.b16 %v1686
        %v1975 = vunpack.c.l.b16 %v1687
        %v1976 = vunpack.c.l.b16 %v1688
        %v1977 = vunpack.c.l.b16 %v1689
        %v1978 = vunpack.c.l.b16 %v1690
        %v1979 = vunpack.c.l.b16 %v1691
        %v1980 = vunpack.c.l.b16 %v1692
        %v1981 = vunpack.c.l.b16 %v1693
        %v1982 = vunpack.c.l.b16 %v1694
        %v1983 = vunpack.c.l.b16 %v1695
        %v1984 = vunpack.c.l.b16 %v1696
        %v1985 = vunpack.c.l.b16 %v1697
        %v1986 = vunpack.c.l.b16 %v1698
        %v1987 = vunpack.c.l.b16 %v1699
        %v1988 = vunpack.c.l.b16 %v1700
        %v1989 = vunpack.c.l.b16 %v1701
        %v1990 = vunpack.c.l.b16 %v1702
        %v1991 = vunpack.c.l.b16 %v1703
        %v1992 = vunpack.c.l.b16 %v1704
        %v1993 = vunpack.c.l.b16 %v1705
        %v1994 = vunpack.c.l.b16 %v1706
        %v1995 = vunpack.c.l.b16 %v1707
        %v1996 = vunpack.c.l.b16 %v1708
        %v1997 = vunpack.c.l.b16 %v1709
        %v1998 = vunpack.c.l.b16 %v1710
        %v1999 = vunpack.c.l.b16 %v1711
        %v2000 = vunpack.c.l.b16 %v1712
        %v2001 = vunpack.c.l.b16 %v1713
        %v2002 = vunpack.c.l.b16 %v1714
        %v2003 = vunpack.c.l.b16 %v1715
        %v2004 = vunpack.c.l.b16 %v1716
        %v2005 = vunpack.c.l.b16 %v1717
        %v2006 = vunpack.c.l.b16 %v1718
        %v2007 = vunpack.c.l.b16 %v1719
        %v2008 = vunpack.c.l.b16 %v1720
        %v2009 = vunpack.c.l.b16 %v1721
        %v2010 = vunpack.c.l.b16 %v1722
        %v2011 = vunpack.c.l.b16 %v1723
        %v2012 = vunpack.c.l.b16 %v1724
        %v2013 = vunpack.c.l.b16 %v1725
        %v2014 = vunpack.c.l.b16 %v1726
        %v2015 = vunpack.c.l.b16 %v1727
        %v2016 = vunpack.c.l.b16 %v1728
        %v2017 = vunpack.c.l.b16 %v1729
        %v2018 = vunpack.c.l.b16 %v1730
        %v2019 = vunpack.c.l.b16 %v1731
        %v2020 = vunpack.c.l.b16 %v1732
        %v2021 = vunpack.c.l.b16 %v1733
        %v2022 = vunpack.c.l.b16 %v1734
        %v2023 = vunpack.c.l.b16 %v1735
        %v2024 = vunpack.c.l.b16 %v1736
        %v2025 = vunpack.c.l.b16 %v1737
        %v2026 = vunpack.c.l.b16 %v1738
        %v2027 = vunpack.c.l.b16 %v1739
        %v2028 = vunpack.c.l.b16 %v1740
        %v2029 = vunpack.c.l.b16 %v1741
        %v2030 = vunpack.c.l.b16 %v1742
        %v2031 = vunpack.c.l.b16 %v1743
        %v2032 = vunpack.c.l.b16 %v1744
        %v2033 = vunpack.c.l.b16 %v1745
        %v2034 = vunpack.c.l.b16 %v1746
        %v2035 = vunpack.c.l.b16 %v1747
        %v2036 = vunpack.c.l.b16 %v1748
        %v2037 = vunpack.c.l.b16 %v1749
        %v2038 = vunpack.c.l.b16 %v1750
        %v2039 = vunpack.c.l.b16 %v1751
        %v2040 = vunpack.c.l.b16 %v1752
        %v2041 = vunpack.c.l.b16 %v1753
        %v2042 = vunpack.c.l.b16 %v1754
        %v2043 = vunpack.c.l.b16 %v1755
        %v2044 = vunpack.c.l.b16 %v1756
        %v2045 = vunpack.c.l.b16 %v1757
        %v2046 = vunpack.c.l.b16 %v1758
        %v2047 = vunpack.c.l.b16 %v1759
        %v2048 = vunpack.c.l.b16 %v1760
        %v2049 = vunpack.c.l.b16 %v1761
        %v2050 = vunpack.c.l.b16 %v1762
        %v2051 = vunpack.c.l.b16 %v1763
        %v2052 = vunpack.c.l.b16 %v1764
        %v2053 = vunpack.c.l.b16 %v1765
        %v2054 = vunpack.c.l.b16 %v1766
        %v2055 = vunpack.c.l.b16 %v1767
        %v2056 = vunpack.c.l.b16 %v1768
        %v2057 = vunpack.c.l.b16 %v1769
        %v2058 = vunpack.c.l.b16 %v1770
        %v2059 = vunpack.c.l.b16 %v1771
        %v2060 = vunpack.c.l.b16 %v1772
        %v2061 = vunpack.c.l.b16 %v1773
        %v2062 = vunpack.c.l.b16 %v1774
        %v2063 = vunpack.c.l.b16 %v1775
        %v2064 = vunpack.c.l.b16 %v1776
        %v2065 = vunpack.c.l.b16 %v1777
        %v2066 = vunpack.c.l.b16 %v1778
        %v2067 = vunpack.c.l.b16 %v1779
        %v2068 = vunpack.c.l.b16 %v1780
        %v2069 = vunpack.c.l.b16 %v1781
        %v2070 = vunpack.c.l.b16 %v1782
        %v2071 = vunpack.c.l.b16 %v1783
        %v2072 = vunpack.c.l.b16 %v1784
        %v2073 = vunpack.c.l.b16 %v1785
        %v2074 = vunpack.c.l.b16 %v1786
        %v2075 = vunpack.c.l.b16 %v1787
        %v2076 = vunpack.c.l.b16 %v1788
        %v2077 = vunpack.c.l.b16 %v1789
        %v2078 = vunpack.c.l.b16 %v1790
        %v2079 = vunpack.c.l.b16 %v1791
        %v2080 = vunpack.c.l.b16 %v1792
        %v2081 = vunpack.c.l.b16 %v1793
        %v2082 = vunpack.c.l.b16 %v1794
        %v2083 = vunpack.c.l.b16 %v1795
        %v2084 = vunpack.c.l.b16 %v1796
        %v2085 = vunpack.c.l.b16 %v1797
        %v2086 = vunpack.c.l.b16 %v1798
        %v2087 = vunpack.c.l.b16 %v1799
        %v2088 = vunpack.c.l.b16 %v1800
        %v2089 = vunpack.c.l.b16 %v1801
        %v2090 = vunpack.c.l.b16 %v1802
        %v2091 = vunpack.c.l.b16 %v1803
        %v2092 = vunpack.c.l.b16 %v1804
        %v2093 = vunpack.c.l.b16 %v1805
        %v2094 = vunpack.c.l.b16 %v1806
        %v2095 = vunpack.c.l.b16 %v1807
        %v2096 = vunpack.c.l.b16 %v1808
        %v2097 = vunpack.c.l.b16 %v1809
        %v2098 = vunpack.c.l.b16 %v1810
        %v2099 = vunpack.c.l.b16 %v1811
        %v2100 = vunpack.c.l.b16 %v1812
        %v2101 = vunpack.c.l.b16 %v1813
        %v2102 = vunpack.c.l.b16 %v1814
        %v2103 = vunpack.c.l.b16 %v1815
        %v2104 = vunpack.c.l.b16 %v1816
        %v2105 = vunpack.c.l.b16 %v1817
        %v2106 = vunpack.c.l.b16 %v1818
        %v2107 = vunpack.c.l.b16 %v1819
        %v2108 = vunpack.c.l.b16 %v1820
        %v2109 = vunpack.c.l.b16 %v1821
        %v2110 = vunpack.c.l.b16 %v1822
        %v2111 = vunpack.c.l.b16 %v1823
        %v2112 = vpack.c.b16 %v1969, %v1968
        %v2113 = vpack.c.b16 %v1971, %v1970
        %v2114 = vpack.c.b16 %v1973, %v1972
        %v2115 = vpack.c.b16 %v1975, %v1974
        %v2116 = vpack.c.b16 %v1977, %v1976
        %v2117 = vpack.c.b16 %v1979, %v1978
        %v2118 = vpack.c.b16 %v1981, %v1980
        %v2119 = vpack.c.b16 %v1983, %v1982
        %v2120 = vpack.c.b16 %v1985, %v1984
        %v2121 = vpack.c.b16 %v1987, %v1986
        %v2122 = vpack.c.b16 %v1989, %v1988
        %v2123 = vpack.c.b16 %v1991, %v1990
        %v2124 = vpack.c.b16 %v1993, %v1992
        %v2125 = vpack.c.b16 %v1995, %v1994
        %v2126 = vpack.c.b16 %v1997, %v1996
        %v2127 = vpack.c.b16 %v1999, %v1998
        %v2128 = vpack.c.b16 %v2001, %v2000
        %v2129 = vpack.c.b16 %v2003, %v2002
        %v2130 = vpack.c.b16 %v2005, %v2004
        %v2131 = vpack.c.b16 %v2007, %v2006
        %v2132 = vpack.c.b16 %v2009, %v2008
        %v2133 = vpack.c.b16 %v2011, %v2010
        %v2134 = vpack.c.b16 %v2013, %v2012
        %v2135 = vpack.c.b16 %v2015, %v2014
        %v2136 = vpack.c.b16 %v2017, %v2016
        %v2137 = vpack.c.b16 %v2019, %v2018
        %v2138 = vpack.c.b16 %v2021, %v2020
        %v2139 = vpack.c.b16 %v2023, %v2022
        %v2140 = vpack.c.b16 %v2025, %v2024
        %v2141 = vpack.c.b16 %v2027, %v2026
        %v2142 = vpack.c.b16 %v2029, %v2028
        %v2143 = vpack.c.b16 %v2031, %v2030
        %v2144 = vpack.c.b16 %v2033, %v2032
        %v2145 = vpack.c.b16 %v2035, %v2034
        %v2146 = vpack.c.b16 %v2037, %v2036
        %v2147 = vpack.c.b16 %v2039, %v2038
        %v2148 = vpack.c.b16 %v2041, %v2040
        %v2149 = vpack.c.b16 %v2043, %v2042
        %v2150 = vpack.c.b16 %v2045, %v2044
        %v2151 = vpack.c.b16 %v2047, %v2046
        %v2152 = vpack.c.b16 %v2049, %v2048
        %v2153 = vpack.c.b16 %v2051, %v2050
        %v2154 = vpack.c.b16 %v2053, %v2052
        %v2155 = vpack.c.b16 %v2055, %v2054
        %v2156 = vpack.c.b16 %v2057, %v2056
        %v2157 = vpack.c.b16 %v2059, %v2058
        %v2158 = vpack.c.b16 %v2061, %v2060
        %v2159 = vpack.c.b16 %v2063, %v2062
        %v2160 = vpack.c.b16 %v2065, %v2064
        %v2161 = vpack.c.b16 %v2067, %v2066
        %v2162 = vpack.c.b16 %v2069, %v2068
        %v2163 = vpack.c.b16 %v2071, %v2070
        %v2164 = vpack.c.b16 %v2073, %v2072
        %v2165 = vpack.c.b16 %v2075, %v2074
        %v2166 = vpack.c.b16 %v2077, %v2076
        %v2167 = vpack.c.b16 %v2079, %v2078
        %v2168 = vpack.c.b16 %v2081, %v2080
        %v2169 = vpack.c.b16 %v2083, %v2082
        %v2170 = vpack.c.b16 %v2085, %v2084
        %v2171 = vpack.c.b16 %v2087, %v2086
        %v2172 = vpack.c.b16 %v2089, %v2088
        %v2173 = vpack.c.b16 %v2091, %v2090
        %v2174 = vpack.c.b16 %v2093, %v2092
        %v2175 = vpack.c.b16 %v2095, %v2094
        %v2176 = vpack.c.b16 %v2097, %v2096
        %v2177 = vpack.c.b16 %v2099, %v2098
        %v2178 = vpack.c.b16 %v2101, %v2100
        %v2179 = vpack.c.b16 %v2103, %v2102
        %v2180 = vpack.c.b16 %v2105, %v2104
        %v2181 = vpack.c.b16 %v2107, %v2106
        %v2182 = vpack.c.b16 %v2109, %v2108
        %v2183 = vpack.c.b16 %v2111, %v2110
        %2256 = vmatprep.subr.bf16.mxu0 0
        %2257 = vmatpush1.bf16.msra.mxu0 %v2112
        %2258 = vmatprep.subr.bf16.mxu0 0
        %2259 = vmatpush1.bf16.msra.mxu0 %v2113
        %2260 = vmatprep.subr.bf16.mxu0 0
        %2261 = vmatpush1.bf16.msra.mxu0 %v2114
        %2262 = vmatprep.subr.bf16.mxu0 0
        %2263 = vmatpush1.bf16.msra.mxu0 %v2115
        %2264 = vmatprep.subr.bf16.mxu0 0
        %2265 = vmatpush1.bf16.msra.mxu0 %v2116
        %2266 = vmatprep.subr.bf16.mxu0 0
        %2267 = vmatpush1.bf16.msra.mxu0 %v2117
        %2268 = vmatprep.subr.bf16.mxu0 0
        %2269 = vmatpush1.bf16.msra.mxu0 %v2118
        %2270 = vmatprep.subr.bf16.mxu0 0
        %2271 = vmatpush1.bf16.msra.mxu0 %v2119
        %2272 = vmatprep.subr.bf16.mxu0 0
        %2273 = vmatpush1.bf16.msra.mxu0 %v2120
        %2274 = vmatprep.subr.bf16.mxu0 0
        %2275 = vmatpush1.bf16.msra.mxu0 %v2121
        %2276 = vmatprep.subr.bf16.mxu0 0
        %2277 = vmatpush1.bf16.msra.mxu0 %v2122
        %2278 = vmatprep.subr.bf16.mxu0 0
        %2279 = vmatpush1.bf16.msra.mxu0 %v2123
        %2280 = vmatprep.subr.bf16.mxu0 0
        %2281 = vmatpush1.bf16.msra.mxu0 %v2124
        %2282 = vmatprep.subr.bf16.mxu0 0
        %2283 = vmatpush1.bf16.msra.mxu0 %v2125
        %2284 = vmatprep.subr.bf16.mxu0 0
        %2285 = vmatpush1.bf16.msra.mxu0 %v2126
        %2286 = vmatprep.subr.bf16.mxu0 0
        %2287 = vmatpush1.bf16.msra.mxu0 %v2127
        %2288 = vmatprep.mubr.bf16.mxu0 %v1537
        %2289 = vmatmul.mubr.bf16.gmra.mrb[0].mxu0 %v1536
        %v2290 = vpop.f32.mrb[0].mxu0
        %v2291 = vadd.f32 0.0, %v2290
        %v2292 = vpop.f32.mrb[0].mxu0
        %v2293 = vpop.f32.mrb[0].mxu0
        %v2294 = vadd.f32 0.0, %v2293
        %v2295 = vpop.f32.mrb[0].mxu0
        %2296 = vmatprep.mubr.bf16.mxu0 %v1546
        %2297 = vmatmul.mubr.bf16.gmra.mrb[0].mxu0 %v1545
        %v2298 = vpop.f32.mrb[0].mxu0
        %v2299 = vadd.f32 0.0, %v2298
        %v2300 = vpop.f32.mrb[0].mxu0
        %v2301 = vpop.f32.mrb[0].mxu0
        %v2302 = vadd.f32 0.0, %v2301
        %v2303 = vpop.f32.mrb[0].mxu0
        %2304 = vmatprep.mubr.bf16.mxu0 %v1555
        %2305 = vmatmul.mubr.bf16.gmra.mrb[0].mxu0 %v1554
        %v2306 = vpop.f32.mrb[0].mxu0
        %v2307 = vadd.f32 0.0, %v2306
        %v2308 = vpop.f32.mrb[0].mxu0
        %v2309 = vpop.f32.mrb[0].mxu0
        %v2310 = vadd.f32 0.0, %v2309
        %v2311 = vpop.f32.mrb[0].mxu0
        %2312 = vmatprep.mubr.bf16.mxu0 %v1564
        %2313 = vmatmul.mubr.bf16.gmra.mrb[0].mxu0 %v1563
        %v2314 = vpop.f32.mrb[0].mxu0
        %v2315 = vadd.f32 0.0, %v2314
        %v2316 = vpop.f32.mrb[0].mxu0
        %v2317 = vpop.f32.mrb[0].mxu0
        %v2318 = vadd.f32 0.0, %v2317
        %v2319 = vpop.f32.mrb[0].mxu0
        %2320 = vmatprep.mubr.bf16.mxu0 %v1573
        %2321 = vmatmul.mubr.bf16.gmra.mrb[0].mxu0 %v1572
        %v2322 = vpop.f32.mrb[0].mxu0
        %v2323 = vadd.f32 0.0, %v2322
        %v2324 = vpop.f32.mrb[0].mxu0
        %v2325 = vpop.f32.mrb[0].mxu0
        %v2326 = vadd.f32 0.0, %v2325
        %v2327 = vpop.f32.mrb[0].mxu0
        %2328 = vmatprep.mubr.bf16.mxu0 %v1582
        %2329 = vmatmul.mubr.bf16.gmra.mrb[0].mxu0 %v1581
        %v2330 = vpop.f32.mrb[0].mxu0
        %v2331 = vadd.f32 0.0, %v2330
        %v2332 = vpop.f32.mrb[0].mxu0
        %v2333 = vpop.f32.mrb[0].mxu0
        %v2334 = vadd.f32 0.0, %v2333
        %v2335 = vpop.f32.mrb[0].mxu0
        %2336 = vmatprep.mubr.bf16.mxu0 %v1591
        %2337 = vmatmul.mubr.bf16.gmra.mrb[0].mxu0 %v1590
        %v2338 = vpop.f32.mrb[0].mxu0
        %v2339 = vadd.f32 0.0, %v2338
        %v2340 = vpop.f32.mrb[0].mxu0
        %v2341 = vpop.f32.mrb[0].mxu0
        %v2342 = vadd.f32 0.0, %v2341
        %v2343 = vpop.f32.mrb[0].mxu0
        %2344 = vmatprep.mubr.bf16.mxu0 %v1600
        %2345 = vmatmul.mubr.bf16.gmra.mrb[0].mxu0 %v1599
        %v2346 = vpop.f32.mrb[0].mxu0
        %v2347 = vadd.f32 0.0, %v2346
        %v2348 = vpop.f32.mrb[0].mxu0
        %v2349 = vpop.f32.mrb[0].mxu0
        %v2350 = vadd.f32 0.0, %v2349
        %v2351 = vpop.f32.mrb[0].mxu0
        %2352 = vmatprep.mubr.bf16.mxu0 %v1609
        %2353 = vmatmul.mubr.bf16.gmra.mrb[0].mxu0 %v1608
        %v2354 = vpop.f32.mrb[0].mxu0
        %v2355 = vadd.f32 0.0, %v2354
        %v2356 = vpop.f32.mrb[0].mxu0
        %v2357 = vpop.f32.mrb[0].mxu0
        %v2358 = vadd.f32 0.0, %v2357
        %v2359 = vpop.f32.mrb[0].mxu0
        %2360 = vmatprep.mubr.bf16.mxu0 %v1618
        %2361 = vmatmul.mubr.bf16.gmra.mrb[0].mxu0 %v1617
        %v2362 = vpop.f32.mrb[0].mxu0
        %v2363 = vadd.f32 0.0, %v2362
        %v2364 = vpop.f32.mrb[0].mxu0
        %v2365 = vpop.f32.mrb[0].mxu0
        %v2366 = vadd.f32 0.0, %v2365
        %v2367 = vpop.f32.mrb[0].mxu0
        %2368 = vmatprep.mubr.bf16.mxu0 %v1627
        %2369 = vmatmul.mubr.bf16.gmra.mrb[0].mxu0 %v1626
        %v2370 = vpop.f32.mrb[0].mxu0
        %v2371 = vadd.f32 0.0, %v2370
        %v2372 = vpop.f32.mrb[0].mxu0
        %v2373 = vpop.f32.mrb[0].mxu0
        %v2374 = vadd.f32 0.0, %v2373
        %v2375 = vpop.f32.mrb[0].mxu0
        %2376 = vmatprep.mubr.bf16.mxu0 %v1636
        %2377 = vmatmul.mubr.bf16.gmra.mrb[0].mxu0 %v1635
        %v2378 = vpop.f32.mrb[0].mxu0
        %v2379 = vadd.f32 0.0, %v2378
        %v2380 = vpop.f32.mrb[0].mxu0
        %v2381 = vpop.f32.mrb[0].mxu0
        %v2382 = vadd.f32 0.0, %v2381
        %v2383 = vpop.f32.mrb[0].mxu0
        %2384 = vmatprep.mubr.bf16.mxu0 %v1645
        %2385 = vmatmul.mubr.bf16.gmra.mrb[0].mxu0 %v1644
        %v2386 = vpop.f32.mrb[0].mxu0
        %v2387 = vadd.f32 0.0, %v2386
        %v2388 = vpop.f32.mrb[0].mxu0
        %v2389 = vpop.f32.mrb[0].mxu0
        %v2390 = vadd.f32 0.0, %v2389
        %v2391 = vpop.f32.mrb[0].mxu0
        %2392 = vmatprep.mubr.bf16.mxu0 %v1654
        %2393 = vmatmul.mubr.bf16.gmra.mrb[0].mxu0 %v1653
        %v2394 = vpop.f32.mrb[0].mxu0
        %v2395 = vadd.f32 0.0, %v2394
        %v2396 = vpop.f32.mrb[0].mxu0
        %v2397 = vpop.f32.mrb[0].mxu0
        %v2398 = vadd.f32 0.0, %v2397
        %v2399 = vpop.f32.mrb[0].mxu0
        %2400 = vmatprep.mubr.bf16.mxu0 %v1663
        %2401 = vmatmul.mubr.bf16.gmra.mrb[0].mxu0 %v1662
        %v2402 = vpop.f32.mrb[0].mxu0
        %v2403 = vadd.f32 0.0, %v2402
        %v2404 = vpop.f32.mrb[0].mxu0
        %v2405 = vpop.f32.mrb[0].mxu0
        %v2406 = vadd.f32 0.0, %v2405
        %v2407 = vpop.f32.mrb[0].mxu0
        %2408 = vmatprep.mubr.bf16.mxu0 %v1672
        %2409 = vmatmul.mubr.bf16.gmra.mrb[0].mxu0 %v1671
        %v2410 = vpop.f32.mrb[0].mxu0
        %v2411 = vadd.f32 0.0, %v2410
        %v2412 = vpop.f32.mrb[0].mxu0
        %v2413 = vpop.f32.mrb[0].mxu0
        %v2414 = vadd.f32 0.0, %v2413
        %v2415 = vpop.f32.mrb[0].mxu0
        %2416 = vdwg.mxu0
        %2417 = vmatprep.subr.bf16.mxu0 0
        %2418 = vmatpush1.bf16.msra.mxu0 %v2128
        %2419 = vmatprep.subr.bf16.mxu0 0
        %2420 = vmatpush1.bf16.msra.mxu0 %v2129
        %2421 = vmatprep.subr.bf16.mxu0 0
        %2422 = vmatpush1.bf16.msra.mxu0 %v2130
        %2423 = vmatprep.subr.bf16.mxu0 0
        %2424 = vmatpush1.bf16.msra.mxu0 %v2131
        %2425 = vmatprep.subr.bf16.mxu0 0
        %2426 = vmatpush1.bf16.msra.mxu0 %v2132
        %2427 = vmatprep.subr.bf16.mxu0 0
        %2428 = vmatpush1.bf16.msra.mxu0 %v2133
        %2429 = vmatprep.subr.bf16.mxu0 0
        %2430 = vmatpush1.bf16.msra.mxu0 %v2134
        %2431 = vmatprep.subr.bf16.mxu0 0
        %2432 = vmatpush1.bf16.msra.mxu0 %v2135
        %2433 = vmatprep.subr.bf16.mxu0 0
        %2434 = vmatpush1.bf16.msra.mxu0 %v2136
        %2435 = vmatprep.subr.bf16.mxu0 0
        %2436 = vmatpush1.bf16.msra.mxu0 %v2137
        %2437 = vmatprep.subr.bf16.mxu0 0
        %2438 = vmatpush1.bf16.msra.mxu0 %v2138
        %2439 = vmatprep.subr.bf16.mxu0 0
        %2440 = vmatpush1.bf16.msra.mxu0 %v2139
        %2441 = vmatprep.subr.bf16.mxu0 0
        %2442 = vmatpush1.bf16.msra.mxu0 %v2140
        %2443 = vmatprep.subr.bf16.mxu0 0
        %2444 = vmatpush1.bf16.msra.mxu0 %v2141
        %2445 = vmatprep.subr.bf16.mxu0 0
        %2446 = vmatpush1.bf16.msra.mxu0 %v2142
        %2447 = vmatprep.subr.bf16.mxu0 0
        %2448 = vmatpush1.bf16.msra.mxu0 %v2143
        %2449 = vmatprep.mubr.bf16.mxu0 %v1539
        %2450 = vmatmul.mubr.bf16.gmra.mrb[0].mxu0 %v1538
        %v2451 = vpop.f32.mrb[0].mxu0
        %v2452 = vadd.f32 %v2291, %v2451
        %v2453 = vpop.f32.mrb[0].mxu0
        %v2454 = vpop.f32.mrb[0].mxu0
        %v2455 = vadd.f32 %v2294, %v2454
        %v2456 = vpop.f32.mrb[0].mxu0
        %2457 = vmatprep.mubr.bf16.mxu0 %v1548
        %2458 = vmatmul.mubr.bf16.gmra.mrb[0].mxu0 %v1547
        %v2459 = vpop.f32.mrb[0].mxu0
        %v2460 = vadd.f32 %v2299, %v2459
        %v2461 = vpop.f32.mrb[0].mxu0
        %v2462 = vpop.f32.mrb[0].mxu0
        %v2463 = vadd.f32 %v2302, %v2462
        %v2464 = vpop.f32.mrb[0].mxu0
        %2465 = vmatprep.mubr.bf16.mxu0 %v1557
        %2466 = vmatmul.mubr.bf16.gmra.mrb[0].mxu0 %v1556
        %v2467 = vpop.f32.mrb[0].mxu0
        %v2468 = vadd.f32 %v2307, %v2467
        %v2469 = vpop.f32.mrb[0].mxu0
        %v2470 = vpop.f32.mrb[0].mxu0
        %v2471 = vadd.f32 %v2310, %v2470
        %v2472 = vpop.f32.mrb[0].mxu0
        %2473 = vmatprep.mubr.bf16.mxu0 %v1566
        %2474 = vmatmul.mubr.bf16.gmra.mrb[0].mxu0 %v1565
        %v2475 = vpop.f32.mrb[0].mxu0
        %v2476 = vadd.f32 %v2315, %v2475
        %v2477 = vpop.f32.mrb[0].mxu0
        %v2478 = vpop.f32.mrb[0].mxu0
        %v2479 = vadd.f32 %v2318, %v2478
        %v2480 = vpop.f32.mrb[0].mxu0
        %2481 = vmatprep.mubr.bf16.mxu0 %v1575
        %2482 = vmatmul.mubr.bf16.gmra.mrb[0].mxu0 %v1574
        %v2483 = vpop.f32.mrb[0].mxu0
        %v2484 = vadd.f32 %v2323, %v2483
        %v2485 = vpop.f32.mrb[0].mxu0
        %v2486 = vpop.f32.mrb[0].mxu0
        %v2487 = vadd.f32 %v2326, %v2486
        %v2488 = vpop.f32.mrb[0].mxu0
        %2489 = vmatprep.mubr.bf16.mxu0 %v1584
        %2490 = vmatmul.mubr.bf16.gmra.mrb[0].mxu0 %v1583
        %v2491 = vpop.f32.mrb[0].mxu0
        %v2492 = vadd.f32 %v2331, %v2491
        %v2493 = vpop.f32.mrb[0].mxu0
        %v2494 = vpop.f32.mrb[0].mxu0
        %v2495 = vadd.f32 %v2334, %v2494
        %v2496 = vpop.f32.mrb[0].mxu0
        %2497 = vmatprep.mubr.bf16.mxu0 %v1593
        %2498 = vmatmul.mubr.bf16.gmra.mrb[0].mxu0 %v1592
        %v2499 = vpop.f32.mrb[0].mxu0
        %v2500 = vadd.f32 %v2339, %v2499
        %v2501 = vpop.f32.mrb[0].mxu0
        %v2502 = vpop.f32.mrb[0].mxu0
        %v2503 = vadd.f32 %v2342, %v2502
        %v2504 = vpop.f32.mrb[0].mxu0
        %2505 = vmatprep.mubr.bf16.mxu0 %v1602
        %2506 = vmatmul.mubr.bf16.gmra.mrb[0].mxu0 %v1601
        %v2507 = vpop.f32.mrb[0].mxu0
        %v2508 = vadd.f32 %v2347, %v2507
        %v2509 = vpop.f32.mrb[0].mxu0
        %v2510 = vpop.f32.mrb[0].mxu0
        %v2511 = vadd.f32 %v2350, %v2510
        %v2512 = vpop.f32.mrb[0].mxu0
        %2513 = vmatprep.mubr.bf16.mxu0 %v1611
        %2514 = vmatmul.mubr.bf16.gmra.mrb[0].mxu0 %v1610
        %v2515 = vpop.f32.mrb[0].mxu0
        %v2516 = vadd.f32 %v2355, %v2515
        %v2517 = vpop.f32.mrb[0].mxu0
        %v2518 = vpop.f32.mrb[0].mxu0
        %v2519 = vadd.f32 %v2358, %v2518
        %v2520 = vpop.f32.mrb[0].mxu0
        %2521 = vmatprep.mubr.bf16.mxu0 %v1620
        %2522 = vmatmul.mubr.bf16.gmra.mrb[0].mxu0 %v1619
        %v2523 = vpop.f32.mrb[0].mxu0
        %v2524 = vadd.f32 %v2363, %v2523
        %v2525 = vpop.f32.mrb[0].mxu0
        %v2526 = vpop.f32.mrb[0].mxu0
        %v2527 = vadd.f32 %v2366, %v2526
        %v2528 = vpop.f32.mrb[0].mxu0
        %2529 = vmatprep.mubr.bf16.mxu0 %v1629
        %2530 = vmatmul.mubr.bf16.gmra.mrb[0].mxu0 %v1628
        %v2531 = vpop.f32.mrb[0].mxu0
        %v2532 = vadd.f32 %v2371, %v2531
        %v2533 = vpop.f32.mrb[0].mxu0
        %v2534 = vpop.f32.mrb[0].mxu0
        %v2535 = vadd.f32 %v2374, %v2534
        %v2536 = vpop.f32.mrb[0].mxu0
        %2537 = vmatprep.mubr.bf16.mxu0 %v1638
        %2538 = vmatmul.mubr.bf16.gmra.mrb[0].mxu0 %v1637
        %v2539 = vpop.f32.mrb[0].mxu0
        %v2540 = vadd.f32 %v2379, %v2539
        %v2541 = vpop.f32.mrb[0].mxu0
        %v2542 = vpop.f32.mrb[0].mxu0
        %v2543 = vadd.f32 %v2382, %v2542
        %v2544 = vpop.f32.mrb[0].mxu0
        %2545 = vmatprep.mubr.bf16.mxu0 %v1647
        %2546 = vmatmul.mubr.bf16.gmra.mrb[0].mxu0 %v1646
        %v2547 = vpop.f32.mrb[0].mxu0
        %v2548 = vadd.f32 %v2387, %v2547
        %v2549 = vpop.f32.mrb[0].mxu0
        %v2550 = vpop.f32.mrb[0].mxu0
        %v2551 = vadd.f32 %v2390, %v2550
        %v2552 = vpop.f32.mrb[0].mxu0
        %2553 = vmatprep.mubr.bf16.mxu0 %v1656
        %2554 = vmatmul.mubr.bf16.gmra.mrb[0].mxu0 %v1655
        %v2555 = vpop.f32.mrb[0].mxu0
        %v2556 = vadd.f32 %v2395, %v2555
        %v2557 = vpop.f32.mrb[0].mxu0
        %v2558 = vpop.f32.mrb[0].mxu0
        %v2559 = vadd.f32 %v2398, %v2558
        %v2560 = vpop.f32.mrb[0].mxu0
        %2561 = vmatprep.mubr.bf16.mxu0 %v1665
        %2562 = vmatmul.mubr.bf16.gmra.mrb[0].mxu0 %v1664
        %v2563 = vpop.f32.mrb[0].mxu0
        %v2564 = vadd.f32 %v2403, %v2563
        %v2565 = vpop.f32.mrb[0].mxu0
        %v2566 = vpop.f32.mrb[0].mxu0
        %v2567 = vadd.f32 %v2406, %v2566
        %v2568 = vpop.f32.mrb[0].mxu0
        %2569 = vmatprep.mubr.bf16.mxu0 %v1674
        %2570 = vmatmul.mubr.bf16.gmra.mrb[0].mxu0 %v1673
        %v2571 = vpop.f32.mrb[0].mxu0
        %v2572 = vadd.f32 %v2411, %v2571
        %v2573 = vpop.f32.mrb[0].mxu0
        %v2574 = vpop.f32.mrb[0].mxu0
        %v2575 = vadd.f32 %v2414, %v2574
        %v2576 = vpop.f32.mrb[0].mxu0
        %2577 = vdwg.mxu0
        %2578 = vmatprep.subr.bf16.mxu0 0
        %2579 = vmatpush1.bf16.msra.mxu0 %v2144
        %2580 = vmatprep.subr.bf16.mxu0 0
        %2581 = vmatpush1.bf16.msra.mxu0 %v2145
        %2582 = vmatprep.subr.bf16.mxu0 0
        %2583 = vmatpush1.bf16.msra.mxu0 %v2146
        %2584 = vmatprep.subr.bf16.mxu0 0
        %2585 = vmatpush1.bf16.msra.mxu0 %v2147
        %2586 = vmatprep.subr.bf16.mxu0 0
        %2587 = vmatpush1.bf16.msra.mxu0 %v2148
        %2588 = vmatprep.subr.bf16.mxu0 0
        %2589 = vmatpush1.bf16.msra.mxu0 %v2149
        %2590 = vmatprep.subr.bf16.mxu0 0
        %2591 = vmatpush1.bf16.msra.mxu0 %v2150
        %2592 = vmatprep.subr.bf16.mxu0 0
        %2593 = vmatpush1.bf16.msra.mxu0 %v2151
        %2594 = vmatprep.subr.bf16.mxu0 0
        %2595 = vmatpush1.bf16.msra.mxu0 %v2152
        %2596 = vmatprep.subr.bf16.mxu0 0
        %2597 = vmatpush1.bf16.msra.mxu0 %v2153
        %2598 = vmatprep.subr.bf16.mxu0 0
        %2599 = vmatpush1.bf16.msra.mxu0 %v2154
        %2600 = vmatprep.subr.bf16.mxu0 0
        %2601 = vmatpush1.bf16.msra.mxu0 %v2155
        %2602 = vmatprep.subr.bf16.mxu0 0
        %2603 = vmatpush1.bf16.msra.mxu0 %v2156
        %2604 = vmatprep.subr.bf16.mxu0 0
        %2605 = vmatpush1.bf16.msra.mxu0 %v2157
        %2606 = vmatprep.subr.bf16.mxu0 0
        %2607 = vmatpush1.bf16.msra.mxu0 %v2158
        %2608 = vmatprep.subr.bf16.mxu0 0
        %2609 = vmatpush1.bf16.msra.mxu0 %v2159
        %2610 = vmatprep.mubr.bf16.mxu0 %v1541
        %2611 = vmatmul.mubr.bf16.gmra.mrb[0].mxu0 %v1540
        %v2612 = vpop.f32.mrb[0].mxu0
        %v2613 = vadd.f32 %v2452, %v2612
        %v2614 = vpop.f32.mrb[0].mxu0
        %v2615 = vpop.f32.mrb[0].mxu0
        %v2616 = vadd.f32 %v2455, %v2615
        %v2617 = vpop.f32.mrb[0].mxu0
        %2618 = vmatprep.mubr.bf16.mxu0 %v1550
        %2619 = vmatmul.mubr.bf16.gmra.mrb[0].mxu0 %v1549
        %v2620 = vpop.f32.mrb[0].mxu0
        %v2621 = vadd.f32 %v2460, %v2620
        %v2622 = vpop.f32.mrb[0].mxu0
        %v2623 = vpop.f32.mrb[0].mxu0
        %v2624 = vadd.f32 %v2463, %v2623
        %v2625 = vpop.f32.mrb[0].mxu0
        %2626 = vmatprep.mubr.bf16.mxu0 %v1559
        %2627 = vmatmul.mubr.bf16.gmra.mrb[0].mxu0 %v1558
        %v2628 = vpop.f32.mrb[0].mxu0
        %v2629 = vadd.f32 %v2468, %v2628
        %v2630 = vpop.f32.mrb[0].mxu0
        %v2631 = vpop.f32.mrb[0].mxu0
        %v2632 = vadd.f32 %v2471, %v2631
        %v2633 = vpop.f32.mrb[0].mxu0
        %2634 = vmatprep.mubr.bf16.mxu0 %v1568
        %2635 = vmatmul.mubr.bf16.gmra.mrb[0].mxu0 %v1567
        %v2636 = vpop.f32.mrb[0].mxu0
        %v2637 = vadd.f32 %v2476, %v2636
        %v2638 = vpop.f32.mrb[0].mxu0
        %v2639 = vpop.f32.mrb[0].mxu0
        %v2640 = vadd.f32 %v2479, %v2639
        %v2641 = vpop.f32.mrb[0].mxu0
        %2642 = vmatprep.mubr.bf16.mxu0 %v1577
        %2643 = vmatmul.mubr.bf16.gmra.mrb[0].mxu0 %v1576
        %v2644 = vpop.f32.mrb[0].mxu0
        %v2645 = vadd.f32 %v2484, %v2644
        %v2646 = vpop.f32.mrb[0].mxu0
        %v2647 = vpop.f32.mrb[0].mxu0
        %v2648 = vadd.f32 %v2487, %v2647
        %v2649 = vpop.f32.mrb[0].mxu0
        %2650 = vmatprep.mubr.bf16.mxu0 %v1586
        %2651 = vmatmul.mubr.bf16.gmra.mrb[0].mxu0 %v1585
        %v2652 = vpop.f32.mrb[0].mxu0
        %v2653 = vadd.f32 %v2492, %v2652
        %v2654 = vpop.f32.mrb[0].mxu0
        %v2655 = vpop.f32.mrb[0].mxu0
        %v2656 = vadd.f32 %v2495, %v2655
        %v2657 = vpop.f32.mrb[0].mxu0
        %2658 = vmatprep.mubr.bf16.mxu0 %v1595
        %2659 = vmatmul.mubr.bf16.gmra.mrb[0].mxu0 %v1594
        %v2660 = vpop.f32.mrb[0].mxu0
        %v2661 = vadd.f32 %v2500, %v2660
        %v2662 = vpop.f32.mrb[0].mxu0
        %v2663 = vpop.f32.mrb[0].mxu0
        %v2664 = vadd.f32 %v2503, %v2663
        %v2665 = vpop.f32.mrb[0].mxu0
        %2666 = vmatprep.mubr.bf16.mxu0 %v1604
        %2667 = vmatmul.mubr.bf16.gmra.mrb[0].mxu0 %v1603
        %v2668 = vpop.f32.mrb[0].mxu0
        %v2669 = vadd.f32 %v2508, %v2668
        %v2670 = vpop.f32.mrb[0].mxu0
        %v2671 = vpop.f32.mrb[0].mxu0
        %v2672 = vadd.f32 %v2511, %v2671
        %v2673 = vpop.f32.mrb[0].mxu0
        %2674 = vmatprep.mubr.bf16.mxu0 %v1613
        %2675 = vmatmul.mubr.bf16.gmra.mrb[0].mxu0 %v1612
        %v2676 = vpop.f32.mrb[0].mxu0
        %v2677 = vadd.f32 %v2516, %v2676
        %v2678 = vpop.f32.mrb[0].mxu0
        %v2679 = vpop.f32.mrb[0].mxu0
        %v2680 = vadd.f32 %v2519, %v2679
        %v2681 = vpop.f32.mrb[0].mxu0
        %2682 = vmatprep.mubr.bf16.mxu0 %v1622
        %2683 = vmatmul.mubr.bf16.gmra.mrb[0].mxu0 %v1621
        %v2684 = vpop.f32.mrb[0].mxu0
        %v2685 = vadd.f32 %v2524, %v2684
        %v2686 = vpop.f32.mrb[0].mxu0
        %v2687 = vpop.f32.mrb[0].mxu0
        %v2688 = vadd.f32 %v2527, %v2687
        %v2689 = vpop.f32.mrb[0].mxu0
        %2690 = vmatprep.mubr.bf16.mxu0 %v1631
        %2691 = vmatmul.mubr.bf16.gmra.mrb[0].mxu0 %v1630
        %v2692 = vpop.f32.mrb[0].mxu0
        %v2693 = vadd.f32 %v2532, %v2692
        %v2694 = vpop.f32.mrb[0].mxu0
        %v2695 = vpop.f32.mrb[0].mxu0
        %v2696 = vadd.f32 %v2535, %v2695
        %v2697 = vpop.f32.mrb[0].mxu0
        %2698 = vmatprep.mubr.bf16.mxu0 %v1640
        %2699 = vmatmul.mubr.bf16.gmra.mrb[0].mxu0 %v1639
        %v2700 = vpop.f32.mrb[0].mxu0
        %v2701 = vadd.f32 %v2540, %v2700
        %v2702 = vpop.f32.mrb[0].mxu0
        %v2703 = vpop.f32.mrb[0].mxu0
        %v2704 = vadd.f32 %v2543, %v2703
        %v2705 = vpop.f32.mrb[0].mxu0
        %2706 = vmatprep.mubr.bf16.mxu0 %v1649
        %2707 = vmatmul.mubr.bf16.gmra.mrb[0].mxu0 %v1648
        %v2708 = vpop.f32.mrb[0].mxu0
        %v2709 = vadd.f32 %v2548, %v2708
        %v2710 = vpop.f32.mrb[0].mxu0
        %v2711 = vpop.f32.mrb[0].mxu0
        %v2712 = vadd.f32 %v2551, %v2711
        %v2713 = vpop.f32.mrb[0].mxu0
        %2714 = vmatprep.mubr.bf16.mxu0 %v1658
        %2715 = vmatmul.mubr.bf16.gmra.mrb[0].mxu0 %v1657
        %v2716 = vpop.f32.mrb[0].mxu0
        %v2717 = vadd.f32 %v2556, %v2716
        %v2718 = vpop.f32.mrb[0].mxu0
        %v2719 = vpop.f32.mrb[0].mxu0
        %v2720 = vadd.f32 %v2559, %v2719
        %v2721 = vpop.f32.mrb[0].mxu0
        %2722 = vmatprep.mubr.bf16.mxu0 %v1667
        %2723 = vmatmul.mubr.bf16.gmra.mrb[0].mxu0 %v1666
        %v2724 = vpop.f32.mrb[0].mxu0
        %v2725 = vadd.f32 %v2564, %v2724
        %v2726 = vpop.f32.mrb[0].mxu0
        %v2727 = vpop.f32.mrb[0].mxu0
        %v2728 = vadd.f32 %v2567, %v2727
        %v2729 = vpop.f32.mrb[0].mxu0
        %2730 = vmatprep.mubr.bf16.mxu0 %v1676
        %2731 = vmatmul.mubr.bf16.gmra.mrb[0].mxu0 %v1675
        %v2732 = vpop.f32.mrb[0].mxu0
        %v2733 = vadd.f32 %v2572, %v2732
        %v2734 = vpop.f32.mrb[0].mxu0
        %v2735 = vpop.f32.mrb[0].mxu0
        %v2736 = vadd.f32 %v2575, %v2735
        %v2737 = vpop.f32.mrb[0].mxu0
        %2738 = vdwg.mxu0
        %2739 = vmatprep.subr.bf16.mxu0 0
        %2740 = vmatpush1.bf16.msra.mxu0 %v2160
        %2741 = vmatprep.subr.bf16.mxu0 0
        %2742 = vmatpush1.bf16.msra.mxu0 %v2161
        %2743 = vmatprep.subr.bf16.mxu0 0
        %2744 = vmatpush1.bf16.msra.mxu0 %v2162
        %2745 = vmatprep.subr.bf16.mxu0 0
        %2746 = vmatpush1.bf16.msra.mxu0 %v2163
        %2747 = vmatprep.subr.bf16.mxu0 0
        %2748 = vmatpush1.bf16.msra.mxu0 %v2164
        %2749 = vmatprep.subr.bf16.mxu0 0
        %2750 = vmatpush1.bf16.msra.mxu0 %v2165
        %2751 = vmatprep.subr.bf16.mxu0 0
        %2752 = vmatpush1.bf16.msra.mxu0 %v2166
        %2753 = vmatprep.subr.bf16.mxu0 0
        %2754 = vmatpush1.bf16.msra.mxu0 %v2167
        %2755 = vmatprep.subr.bf16.mxu0 0
        %2756 = vmatpush1.bf16.msra.mxu0 %v2168
        %2757 = vmatprep.subr.bf16.mxu0 0
        %2758 = vmatpush1.bf16.msra.mxu0 %v2169
        %2759 = vmatprep.subr.bf16.mxu0 0
        %2760 = vmatpush1.bf16.msra.mxu0 %v2170
        %2761 = vmatprep.subr.bf16.mxu0 0
        %2762 = vmatpush1.bf16.msra.mxu0 %v2171
        %2763 = vmatprep.subr.bf16.mxu0 0
        %2764 = vmatpush1.bf16.msra.mxu0 %v2172
        %2765 = vmatprep.subr.bf16.mxu0 0
        %2766 = vmatpush1.bf16.msra.mxu0 %v2173
        %2767 = vmatprep.subr.bf16.mxu0 0
        %2768 = vmatpush1.bf16.msra.mxu0 %v2174
        %2769 = vmatprep.subr.bf16.mxu0 0
        %2770 = vmatpush1.bf16.msra.mxu0 %v2175
        %2771 = vmatprep.mubr.bf16.mxu0 %v1543
        %2772 = vmatmul.mubr.bf16.gmra.mrb[0].mxu0 %v1542
        %v2773 = vpop.f32.mrb[0].mxu0
        %v2774 = vadd.f32 %v2613, %v2773
        %v2775 = vpop.f32.mrb[0].mxu0
        %v2776 = vpop.f32.mrb[0].mxu0
        %v2777 = vadd.f32 %v2616, %v2776
        %v2778 = vpop.f32.mrb[0].mxu0
        %2779 = vmatprep.mubr.bf16.mxu0 %v1552
        %2780 = vmatmul.mubr.bf16.gmra.mrb[0].mxu0 %v1551
        %v2781 = vpop.f32.mrb[0].mxu0
        %v2782 = vadd.f32 %v2621, %v2781
        %v2783 = vpop.f32.mrb[0].mxu0
        %v2784 = vpop.f32.mrb[0].mxu0
        %v2785 = vadd.f32 %v2624, %v2784
        %v2786 = vpop.f32.mrb[0].mxu0
        %2787 = vmatprep.mubr.bf16.mxu0 %v1561
        %2788 = vmatmul.mubr.bf16.gmra.mrb[0].mxu0 %v1560
        %v2789 = vpop.f32.mrb[0].mxu0
        %v2790 = vadd.f32 %v2629, %v2789
        %v2791 = vpop.f32.mrb[0].mxu0
        %v2792 = vpop.f32.mrb[0].mxu0
        %v2793 = vadd.f32 %v2632, %v2792
        %v2794 = vpop.f32.mrb[0].mxu0
        %2795 = vmatprep.mubr.bf16.mxu0 %v1570
        %2796 = vmatmul.mubr.bf16.gmra.mrb[0].mxu0 %v1569
        %v2797 = vpop.f32.mrb[0].mxu0
        %v2798 = vadd.f32 %v2637, %v2797
        %v2799 = vpop.f32.mrb[0].mxu0
        %v2800 = vpop.f32.mrb[0].mxu0
        %v2801 = vadd.f32 %v2640, %v2800
        %v2802 = vpop.f32.mrb[0].mxu0
        %2803 = vmatprep.mubr.bf16.mxu0 %v1579
        %2804 = vmatmul.mubr.bf16.gmra.mrb[0].mxu0 %v1578
        %v2805 = vpop.f32.mrb[0].mxu0
        %v2806 = vadd.f32 %v2645, %v2805
        %v2807 = vpop.f32.mrb[0].mxu0
        %v2808 = vpop.f32.mrb[0].mxu0
        %v2809 = vadd.f32 %v2648, %v2808
        %v2810 = vpop.f32.mrb[0].mxu0
        %2811 = vmatprep.mubr.bf16.mxu0 %v1588
        %2812 = vmatmul.mubr.bf16.gmra.mrb[0].mxu0 %v1587
        %v2813 = vpop.f32.mrb[0].mxu0
        %v2814 = vadd.f32 %v2653, %v2813
        %v2815 = vpop.f32.mrb[0].mxu0
        %v2816 = vpop.f32.mrb[0].mxu0
        %v2817 = vadd.f32 %v2656, %v2816
        %v2818 = vpop.f32.mrb[0].mxu0
        %2819 = vmatprep.mubr.bf16.mxu0 %v1597
        %2820 = vmatmul.mubr.bf16.gmra.mrb[0].mxu0 %v1596
        %v2821 = vpop.f32.mrb[0].mxu0
        %v2822 = vadd.f32 %v2661, %v2821
        %v2823 = vpop.f32.mrb[0].mxu0
        %v2824 = vpop.f32.mrb[0].mxu0
        %v2825 = vadd.f32 %v2664, %v2824
        %v2826 = vpop.f32.mrb[0].mxu0
        %2827 = vmatprep.mubr.bf16.mxu0 %v1606
        %2828 = vmatmul.mubr.bf16.gmra.mrb[0].mxu0 %v1605
        %v2829 = vpop.f32.mrb[0].mxu0
        %v2830 = vadd.f32 %v2669, %v2829
        %v2831 = vpop.f32.mrb[0].mxu0
        %v2832 = vpop.f32.mrb[0].mxu0
        %v2833 = vadd.f32 %v2672, %v2832
        %v2834 = vpop.f32.mrb[0].mxu0
        %2835 = vmatprep.mubr.bf16.mxu0 %v1615
        %2836 = vmatmul.mubr.bf16.gmra.mrb[0].mxu0 %v1614
        %v2837 = vpop.f32.mrb[0].mxu0
        %v2838 = vadd.f32 %v2677, %v2837
        %v2839 = vpop.f32.mrb[0].mxu0
        %v2840 = vpop.f32.mrb[0].mxu0
        %v2841 = vadd.f32 %v2680, %v2840
        %v2842 = vpop.f32.mrb[0].mxu0
        %2843 = vmatprep.mubr.bf16.mxu0 %v1624
        %2844 = vmatmul.mubr.bf16.gmra.mrb[0].mxu0 %v1623
        %v2845 = vpop.f32.mrb[0].mxu0
        %v2846 = vadd.f32 %v2685, %v2845
        %v2847 = vpop.f32.mrb[0].mxu0
        %v2848 = vpop.f32.mrb[0].mxu0
        %v2849 = vadd.f32 %v2688, %v2848
        %v2850 = vpop.f32.mrb[0].mxu0
        %2851 = vmatprep.mubr.bf16.mxu0 %v1633
        %2852 = vmatmul.mubr.bf16.gmra.mrb[0].mxu0 %v1632
        %v2853 = vpop.f32.mrb[0].mxu0
        %v2854 = vadd.f32 %v2693, %v2853
        %v2855 = vpop.f32.mrb[0].mxu0
        %v2856 = vpop.f32.mrb[0].mxu0
        %v2857 = vadd.f32 %v2696, %v2856
        %v2858 = vpop.f32.mrb[0].mxu0
        %2859 = vmatprep.mubr.bf16.mxu0 %v1642
        %2860 = vmatmul.mubr.bf16.gmra.mrb[0].mxu0 %v1641
        %v2861 = vpop.f32.mrb[0].mxu0
        %v2862 = vadd.f32 %v2701, %v2861
        %v2863 = vpop.f32.mrb[0].mxu0
        %v2864 = vpop.f32.mrb[0].mxu0
        %v2865 = vadd.f32 %v2704, %v2864
        %v2866 = vpop.f32.mrb[0].mxu0
        %2867 = vmatprep.mubr.bf16.mxu0 %v1651
        %2868 = vmatmul.mubr.bf16.gmra.mrb[0].mxu0 %v1650
        %v2869 = vpop.f32.mrb[0].mxu0
        %v2870 = vadd.f32 %v2709, %v2869
        %v2871 = vpop.f32.mrb[0].mxu0
        %v2872 = vpop.f32.mrb[0].mxu0
        %v2873 = vadd.f32 %v2712, %v2872
        %v2874 = vpop.f32.mrb[0].mxu0
        %2875 = vmatprep.mubr.bf16.mxu0 %v1660
        %2876 = vmatmul.mubr.bf16.gmra.mrb[0].mxu0 %v1659
        %v2877 = vpop.f32.mrb[0].mxu0
        %v2878 = vadd.f32 %v2717, %v2877
        %v2879 = vpop.f32.mrb[0].mxu0
        %v2880 = vpop.f32.mrb[0].mxu0
        %v2881 = vadd.f32 %v2720, %v2880
        %v2882 = vpop.f32.mrb[0].mxu0
        %2883 = vmatprep.mubr.bf16.mxu0 %v1669
        %2884 = vmatmul.mubr.bf16.gmra.mrb[0].mxu0 %v1668
        %v2885 = vpop.f32.mrb[0].mxu0
        %v2886 = vadd.f32 %v2725, %v2885
        %v2887 = vpop.f32.mrb[0].mxu0
        %v2888 = vpop.f32.mrb[0].mxu0
        %v2889 = vadd.f32 %v2728, %v2888
        %v2890 = vpop.f32.mrb[0].mxu0
        %2891 = vmatprep.mubr.bf16.mxu0 %v1678
        %2892 = vmatmul.mubr.bf16.gmra.mrb[0].mxu0 %v1677
        %v2893 = vpop.f32.mrb[0].mxu0
        %v2894 = vadd.f32 %v2733, %v2893
        %v2895 = vpop.f32.mrb[0].mxu0
        %v2896 = vpop.f32.mrb[0].mxu0
        %v2897 = vadd.f32 %v2736, %v2896
        %v2898 = vpop.f32.mrb[0].mxu0
        %2899 = vdwg.mxu0
        %2900 = vmatprep.subr.bf16.mxu0 0
        %2901 = vmatpush1.bf16.msra.mxu0 %v2176
        %2902 = vmatprep.subr.bf16.mxu0 0
        %2903 = vmatpush1.bf16.msra.mxu0 %v2177
        %2904 = vmatprep.subr.bf16.mxu0 0
        %2905 = vmatpush1.bf16.msra.mxu0 %v2178
        %2906 = vmatprep.subr.bf16.mxu0 0
        %2907 = vmatpush1.bf16.msra.mxu0 %v2179
        %2908 = vmatprep.subr.bf16.mxu0 0
        %2909 = vmatpush1.bf16.msra.mxu0 %v2180
        %2910 = vmatprep.subr.bf16.mxu0 0
        %2911 = vmatpush1.bf16.msra.mxu0 %v2181
        %2912 = vmatprep.subr.bf16.mxu0 0
        %2913 = vmatpush1.bf16.msra.mxu0 %v2182
        %2914 = vmatprep.subr.bf16.mxu0 0
        %2915 = vmatpush1.bf16.msra.mxu0 %v2183
        %2916 = vmatprep.subr.bf16.mxu0 0
        %2917 = vmatpush1.bf16.msra.mxu0 0
        %2918 = vmatprep.subr.bf16.mxu0 0
        %2919 = vmatpush1.bf16.msra.mxu0 0
        %2920 = vmatprep.subr.bf16.mxu0 0
        %2921 = vmatpush1.bf16.msra.mxu0 0
        %2922 = vmatprep.subr.bf16.mxu0 0
        %2923 = vmatpush1.bf16.msra.mxu0 0
        %2924 = vmatprep.subr.bf16.mxu0 0
        %2925 = vmatpush1.bf16.msra.mxu0 0
        %2926 = vmatprep.subr.bf16.mxu0 0
        %2927 = vmatpush1.bf16.msra.mxu0 0
        %2928 = vmatprep.subr.bf16.mxu0 0
        %2929 = vmatpush1.bf16.msra.mxu0 0
        %2930 = vmatprep.subr.bf16.mxu0 0
        %2931 = vmatpush1.bf16.msra.mxu0 0
        %2932 = vmatprep.mubr.bf16.mxu0 0
        %2933 = vmatmul.mubr.bf16.gmra.mrb[0].mxu0 %v1544
        %v2934 = vpop.f32.mrb[0].mxu0
        %v2935 = vadd.f32 %v2774, %v2934
        %v2936 = vpop.f32.mrb[0].mxu0
        %v2937 = vpop.f32.mrb[0].mxu0
        %v2938 = vadd.f32 %v2777, %v2937
        %v2939 = vpop.f32.mrb[0].mxu0
        %2940 = vmatprep.mubr.bf16.mxu0 0
        %2941 = vmatmul.mubr.bf16.gmra.mrb[0].mxu0 %v1553
        %v2942 = vpop.f32.mrb[0].mxu0
        %v2943 = vadd.f32 %v2782, %v2942
        %v2944 = vpop.f32.mrb[0].mxu0
        %v2945 = vpop.f32.mrb[0].mxu0
        %v2946 = vadd.f32 %v2785, %v2945
        %v2947 = vpop.f32.mrb[0].mxu0
        %2948 = vmatprep.mubr.bf16.mxu0 0
        %2949 = vmatmul.mubr.bf16.gmra.mrb[0].mxu0 %v1562
        %v2950 = vpop.f32.mrb[0].mxu0
        %v2951 = vadd.f32 %v2790, %v2950
        %v2952 = vpop.f32.mrb[0].mxu0
        %v2953 = vpop.f32.mrb[0].mxu0
        %v2954 = vadd.f32 %v2793, %v2953
        %v2955 = vpop.f32.mrb[0].mxu0
        %2956 = vmatprep.mubr.bf16.mxu0 0
        %2957 = vmatmul.mubr.bf16.gmra.mrb[0].mxu0 %v1571
        %v2958 = vpop.f32.mrb[0].mxu0
        %v2959 = vadd.f32 %v2798, %v2958
        %v2960 = vpop.f32.mrb[0].mxu0
        %v2961 = vpop.f32.mrb[0].mxu0
        %v2962 = vadd.f32 %v2801, %v2961
        %v2963 = vpop.f32.mrb[0].mxu0
        %2964 = vmatprep.mubr.bf16.mxu0 0
        %2965 = vmatmul.mubr.bf16.gmra.mrb[0].mxu0 %v1580
        %v2966 = vpop.f32.mrb[0].mxu0
        %v2967 = vadd.f32 %v2806, %v2966
        %v2968 = vpop.f32.mrb[0].mxu0
        %v2969 = vpop.f32.mrb[0].mxu0
        %v2970 = vadd.f32 %v2809, %v2969
        %v2971 = vpop.f32.mrb[0].mxu0
        %2972 = vmatprep.mubr.bf16.mxu0 0
        %2973 = vmatmul.mubr.bf16.gmra.mrb[0].mxu0 %v1589
        %v2974 = vpop.f32.mrb[0].mxu0
        %v2975 = vadd.f32 %v2814, %v2974
        %v2976 = vpop.f32.mrb[0].mxu0
        %v2977 = vpop.f32.mrb[0].mxu0
        %v2978 = vadd.f32 %v2817, %v2977
        %v2979 = vpop.f32.mrb[0].mxu0
        %2980 = vmatprep.mubr.bf16.mxu0 0
        %2981 = vmatmul.mubr.bf16.gmra.mrb[0].mxu0 %v1598
        %v2982 = vpop.f32.mrb[0].mxu0
        %v2983 = vadd.f32 %v2822, %v2982
        %v2984 = vpop.f32.mrb[0].mxu0
        %v2985 = vpop.f32.mrb[0].mxu0
        %v2986 = vadd.f32 %v2825, %v2985
        %v2987 = vpop.f32.mrb[0].mxu0
        %2988 = vmatprep.mubr.bf16.mxu0 0
        %2989 = vmatmul.mubr.bf16.gmra.mrb[0].mxu0 %v1607
        %v2990 = vpop.f32.mrb[0].mxu0
        %v2991 = vadd.f32 %v2830, %v2990
        %v2992 = vpop.f32.mrb[0].mxu0
        %v2993 = vpop.f32.mrb[0].mxu0
        %v2994 = vadd.f32 %v2833, %v2993
        %v2995 = vpop.f32.mrb[0].mxu0
        %2996 = vmatprep.mubr.bf16.mxu0 0
        %2997 = vmatmul.mubr.bf16.gmra.mrb[0].mxu0 %v1616
        %v2998 = vpop.f32.mrb[0].mxu0
        %v2999 = vadd.f32 %v2838, %v2998
        %v3000 = vpop.f32.mrb[0].mxu0
        %v3001 = vpop.f32.mrb[0].mxu0
        %v3002 = vadd.f32 %v2841, %v3001
        %v3003 = vpop.f32.mrb[0].mxu0
        %3004 = vmatprep.mubr.bf16.mxu0 0
        %3005 = vmatmul.mubr.bf16.gmra.mrb[0].mxu0 %v1625
        %v3006 = vpop.f32.mrb[0].mxu0
        %v3007 = vadd.f32 %v2846, %v3006
        %v3008 = vpop.f32.mrb[0].mxu0
        %v3009 = vpop.f32.mrb[0].mxu0
        %v3010 = vadd.f32 %v2849, %v3009
        %v3011 = vpop.f32.mrb[0].mxu0
        %3012 = vmatprep.mubr.bf16.mxu0 0
        %3013 = vmatmul.mubr.bf16.gmra.mrb[0].mxu0 %v1634
        %v3014 = vpop.f32.mrb[0].mxu0
        %v3015 = vadd.f32 %v2854, %v3014
        %v3016 = vpop.f32.mrb[0].mxu0
        %v3017 = vpop.f32.mrb[0].mxu0
        %v3018 = vadd.f32 %v2857, %v3017
        %v3019 = vpop.f32.mrb[0].mxu0
        %3020 = vmatprep.mubr.bf16.mxu0 0
        %3021 = vmatmul.mubr.bf16.gmra.mrb[0].mxu0 %v1643
        %v3022 = vpop.f32.mrb[0].mxu0
        %v3023 = vadd.f32 %v2862, %v3022
        %v3024 = vpop.f32.mrb[0].mxu0
        %v3025 = vpop.f32.mrb[0].mxu0
        %v3026 = vadd.f32 %v2865, %v3025
        %v3027 = vpop.f32.mrb[0].mxu0
        %3028 = vmatprep.mubr.bf16.mxu0 0
        %3029 = vmatmul.mubr.bf16.gmra.mrb[0].mxu0 %v1652
        %v3030 = vpop.f32.mrb[0].mxu0
        %v3031 = vadd.f32 %v2870, %v3030
        %v3032 = vpop.f32.mrb[0].mxu0
        %v3033 = vpop.f32.mrb[0].mxu0
        %v3034 = vadd.f32 %v2873, %v3033
        %v3035 = vpop.f32.mrb[0].mxu0
        %3036 = vmatprep.mubr.bf16.mxu0 0
        %3037 = vmatmul.mubr.bf16.gmra.mrb[0].mxu0 %v1661
        %v3038 = vpop.f32.mrb[0].mxu0
        %v3039 = vadd.f32 %v2878, %v3038
        %v3040 = vpop.f32.mrb[0].mxu0
        %v3041 = vpop.f32.mrb[0].mxu0
        %v3042 = vadd.f32 %v2881, %v3041
        %v3043 = vpop.f32.mrb[0].mxu0
        %3044 = vmatprep.mubr.bf16.mxu0 0
        %3045 = vmatmul.mubr.bf16.gmra.mrb[0].mxu0 %v1670
        %v3046 = vpop.f32.mrb[0].mxu0
        %v3047 = vadd.f32 %v2886, %v3046
        %v3048 = vpop.f32.mrb[0].mxu0
        %v3049 = vpop.f32.mrb[0].mxu0
        %v3050 = vadd.f32 %v2889, %v3049
        %v3051 = vpop.f32.mrb[0].mxu0
        %3052 = vmatprep.mubr.bf16.mxu0 0
        %3053 = vmatmul.mubr.bf16.gmra.mrb[0].mxu0 %v1679
        %v3054 = vpop.f32.mrb[0].mxu0
        %v3055 = vadd.f32 %v2894, %v3054
        %v3056 = vpop.f32.mrb[0].mxu0
        %v3057 = vpop.f32.mrb[0].mxu0
        %v3058 = vadd.f32 %v2897, %v3057
        %v3059 = vpop.f32.mrb[0].mxu0
        %3060 = vdwg.mxu0
        %v3061 = vadd.f32 %v2935, %v2938
        %v3062 = vadd.f32 %v3061, %v2943
        %v3063 = vadd.f32 %v3062, %v2946
        %v3064 = vadd.f32 %v3063, %v2951
        %v3065 = vadd.f32 %v3064, %v2954
        %v3066 = vadd.f32 %v3065, %v2959
        %v3067 = vadd.f32 %v3066, %v2962
        %v3068 = vadd.f32 %v3067, %v2967
        %v3069 = vadd.f32 %v3068, %v2970
        %v3070 = vadd.f32 %v3069, %v2975
        %v3071 = vadd.f32 %v3070, %v2978
        %v3072 = vadd.f32 %v3071, %v2983
        %v3073 = vadd.f32 %v3072, %v2986
        %v3074 = vadd.f32 %v3073, %v2991
        %v3075 = vadd.f32 %v3074, %v2994
        %v3076 = vadd.f32 %v3075, %v2999
        %v3077 = vadd.f32 %v3076, %v3002
        %v3078 = vadd.f32 %v3077, %v3007
        %v3079 = vadd.f32 %v3078, %v3010
        %v3080 = vadd.f32 %v3079, %v3015
        %v3081 = vadd.f32 %v3080, %v3018
        %v3082 = vadd.f32 %v3081, %v3023
        %v3083 = vadd.f32 %v3082, %v3026
        %v3084 = vadd.f32 %v3083, %v3031
        %v3085 = vadd.f32 %v3084, %v3034
        %v3086 = vadd.f32 %v3085, %v3039
        %v3087 = vadd.f32 %v3086, %v3042
        %v3088 = vadd.f32 %v3087, %v3047
        %v3089 = vadd.f32 %v3088, %v3050
        %v3090 = vadd.f32 %v3089, %v3055
        %v3091 = vadd.f32 %v3090, %v3058
        %v3092 = vrot.slane %v3091, 4
        %v3093 = vadd.f32 %v3091, %v3092
        %v3094 = vrot.slane %v3093, 2
        %v3095 = vadd.f32 %v3093, %v3094
        %v3096 = vrot.slane %v3095, 1
        %v3097 = vadd.f32 %v3095, %v3096
        %v3098 = vmul.f32 %v2935, %v2935
        %v3099 = vmul.f32 %v2938, %v2938
        %v3100 = vmul.f32 %v2943, %v2943
        %v3101 = vmul.f32 %v2946, %v2946
        %v3102 = vmul.f32 %v2951, %v2951
        %v3103 = vmul.f32 %v2954, %v2954
        %v3104 = vmul.f32 %v2959, %v2959
        %v3105 = vmul.f32 %v2962, %v2962
        %v3106 = vmul.f32 %v2967, %v2967
        %v3107 = vmul.f32 %v2970, %v2970
        %v3108 = vmul.f32 %v2975, %v2975
        %v3109 = vmul.f32 %v2978, %v2978
        %v3110 = vmul.f32 %v2983, %v2983
        %v3111 = vmul.f32 %v2986, %v2986
        %v3112 = vmul.f32 %v2991, %v2991
        %v3113 = vmul.f32 %v2994, %v2994
        %v3114 = vmul.f32 %v2999, %v2999
        %v3115 = vmul.f32 %v3002, %v3002
        %v3116 = vmul.f32 %v3007, %v3007
        %v3117 = vmul.f32 %v3010, %v3010
        %v3118 = vmul.f32 %v3015, %v3015
        %v3119 = vmul.f32 %v3018, %v3018
        %v3120 = vmul.f32 %v3023, %v3023
        %v3121 = vmul.f32 %v3026, %v3026
        %v3122 = vmul.f32 %v3031, %v3031
        %v3123 = vmul.f32 %v3034, %v3034
        %v3124 = vmul.f32 %v3039, %v3039
        %v3125 = vmul.f32 %v3042, %v3042
        %v3126 = vmul.f32 %v3047, %v3047
        %v3127 = vmul.f32 %v3050, %v3050
        %v3128 = vmul.f32 %v3055, %v3055
        %v3129 = vmul.f32 %v3058, %v3058
        %v3130 = vadd.f32 %v3098, %v3099
        %v3131 = vadd.f32 %v3130, %v3100
        %v3132 = vadd.f32 %v3131, %v3101
        %v3133 = vadd.f32 %v3132, %v3102
        %v3134 = vadd.f32 %v3133, %v3103
        %v3135 = vadd.f32 %v3134, %v3104
        %v3136 = vadd.f32 %v3135, %v3105
        %v3137 = vadd.f32 %v3136, %v3106
        %v3138 = vadd.f32 %v3137, %v3107
        %v3139 = vadd.f32 %v3138, %v3108
        %v3140 = vadd.f32 %v3139, %v3109
        %v3141 = vadd.f32 %v3140, %v3110
        %v3142 = vadd.f32 %v3141, %v3111
        %v3143 = vadd.f32 %v3142, %v3112
        %v3144 = vadd.f32 %v3143, %v3113
        %v3145 = vadd.f32 %v3144, %v3114
        %v3146 = vadd.f32 %v3145, %v3115
        %v3147 = vadd.f32 %v3146, %v3116
        %v3148 = vadd.f32 %v3147, %v3117
        %v3149 = vadd.f32 %v3148, %v3118
        %v3150 = vadd.f32 %v3149, %v3119
        %v3151 = vadd.f32 %v3150, %v3120
        %v3152 = vadd.f32 %v3151, %v3121
        %v3153 = vadd.f32 %v3152, %v3122
        %v3154 = vadd.f32 %v3153, %v3123
        %v3155 = vadd.f32 %v3154, %v3124
        %v3156 = vadd.f32 %v3155, %v3125
        %v3157 = vadd.f32 %v3156, %v3126
        %v3158 = vadd.f32 %v3157, %v3127
        %v3159 = vadd.f32 %v3158, %v3128
        %v3160 = vadd.f32 %v3159, %v3129
        %v3161 = vrot.slane %v3160, 4
        %v3162 = vadd.f32 %v3160, %v3161
        %v3163 = vrot.slane %v3162, 2
        %v3164 = vadd.f32 %v3162, %v3163
        %v3165 = vrot.slane %v3164, 1
        %v3166 = vadd.f32 %v3164, %v3165
        %v3167 = vmul.f32 %v3097, 0.00390625
        %v3168 = vmul.f32 %v3166, 0.00390625
        %v3169 = vmul.f32 %v3167, %v3167
        %v3170 = vsub.f32 %v3168, %v3169
        %v3171 = vmax.f32 %v3170, 0.0
        %v3172 = vsub.f32 %v2935, %v3167
        %v3173 = vsub.f32 %v2938, %v3167
        %v3174 = vsub.f32 %v2943, %v3167
        %v3175 = vsub.f32 %v2946, %v3167
        %v3176 = vsub.f32 %v2951, %v3167
        %v3177 = vsub.f32 %v2954, %v3167
        %v3178 = vsub.f32 %v2959, %v3167
        %v3179 = vsub.f32 %v2962, %v3167
        %v3180 = vsub.f32 %v2967, %v3167
        %v3181 = vsub.f32 %v2970, %v3167
        %v3182 = vsub.f32 %v2975, %v3167
        %v3183 = vsub.f32 %v2978, %v3167
        %v3184 = vsub.f32 %v2983, %v3167
        %v3185 = vsub.f32 %v2986, %v3167
        %v3186 = vsub.f32 %v2991, %v3167
        %v3187 = vsub.f32 %v2994, %v3167
        %v3188 = vsub.f32 %v2999, %v3167
        %v3189 = vsub.f32 %v3002, %v3167
        %v3190 = vsub.f32 %v3007, %v3167
        %v3191 = vsub.f32 %v3010, %v3167
        %v3192 = vsub.f32 %v3015, %v3167
        %v3193 = vsub.f32 %v3018, %v3167
        %v3194 = vsub.f32 %v3023, %v3167
        %v3195 = vsub.f32 %v3026, %v3167
        %v3196 = vsub.f32 %v3031, %v3167
        %v3197 = vsub.f32 %v3034, %v3167
        %v3198 = vsub.f32 %v3039, %v3167
        %v3199 = vsub.f32 %v3042, %v3167
        %v3200 = vsub.f32 %v3047, %v3167
        %v3201 = vsub.f32 %v3050, %v3167
        %v3202 = vsub.f32 %v3055, %v3167
        %v3203 = vsub.f32 %v3058, %v3167
        %v3204 = vadd.f32 %v3171, 1e-05
        %v3205 = vrsqrt.pop %v3204
        %v3206 = vmul.f32 %v3172, %v3205
        %v3207 = vmul.f32 %v3173, %v3205
        %v3208 = vmul.f32 %v3174, %v3205
        %v3209 = vmul.f32 %v3175, %v3205
        %v3210 = vmul.f32 %v3176, %v3205
        %v3211 = vmul.f32 %v3177, %v3205
        %v3212 = vmul.f32 %v3178, %v3205
        %v3213 = vmul.f32 %v3179, %v3205
        %v3214 = vmul.f32 %v3180, %v3205
        %v3215 = vmul.f32 %v3181, %v3205
        %v3216 = vmul.f32 %v3182, %v3205
        %v3217 = vmul.f32 %v3183, %v3205
        %v3218 = vmul.f32 %v3184, %v3205
        %v3219 = vmul.f32 %v3185, %v3205
        %v3220 = vmul.f32 %v3186, %v3205
        %v3221 = vmul.f32 %v3187, %v3205
        %v3222 = vmul.f32 %v3188, %v3205
        %v3223 = vmul.f32 %v3189, %v3205
        %v3224 = vmul.f32 %v3190, %v3205
        %v3225 = vmul.f32 %v3191, %v3205
        %v3226 = vmul.f32 %v3192, %v3205
        %v3227 = vmul.f32 %v3193, %v3205
        %v3228 = vmul.f32 %v3194, %v3205
        %v3229 = vmul.f32 %v3195, %v3205
        %v3230 = vmul.f32 %v3196, %v3205
        %v3231 = vmul.f32 %v3197, %v3205
        %v3232 = vmul.f32 %v3198, %v3205
        %v3233 = vmul.f32 %v3199, %v3205
        %v3234 = vmul.f32 %v3200, %v3205
        %v3235 = vmul.f32 %v3201, %v3205
        %v3236 = vmul.f32 %v3202, %v3205
        %v3237 = vmul.f32 %v3203, %v3205
        %v3238 = vmax.f32 %v3206, 0.0
        %v3239 = vmax.f32 %v3207, 0.0
        %v3240 = vmax.f32 %v3208, 0.0
        %v3241 = vmax.f32 %v3209, 0.0
        %v3242 = vmax.f32 %v3210, 0.0
        %v3243 = vmax.f32 %v3211, 0.0
        %v3244 = vmax.f32 %v3212, 0.0
        %v3245 = vmax.f32 %v3213, 0.0
        %v3246 = vmax.f32 %v3214, 0.0
        %v3247 = vmax.f32 %v3215, 0.0
        %v3248 = vmax.f32 %v3216, 0.0
        %v3249 = vmax.f32 %v3217, 0.0
        %v3250 = vmax.f32 %v3218, 0.0
        %v3251 = vmax.f32 %v3219, 0.0
        %v3252 = vmax.f32 %v3220, 0.0
        %v3253 = vmax.f32 %v3221, 0.0
        %v3254 = vmax.f32 %v3222, 0.0
        %v3255 = vmax.f32 %v3223, 0.0
        %v3256 = vmax.f32 %v3224, 0.0
        %v3257 = vmax.f32 %v3225, 0.0
        %v3258 = vmax.f32 %v3226, 0.0
        %v3259 = vmax.f32 %v3227, 0.0
        %v3260 = vmax.f32 %v3228, 0.0
        %v3261 = vmax.f32 %v3229, 0.0
        %v3262 = vmax.f32 %v3230, 0.0
        %v3263 = vmax.f32 %v3231, 0.0
        %v3264 = vmax.f32 %v3232, 0.0
        %v3265 = vmax.f32 %v3233, 0.0
        %v3266 = vmax.f32 %v3234, 0.0
        %v3267 = vmax.f32 %v3235, 0.0
        %v3268 = vmax.f32 %v3236, 0.0
        %v3269 = vmax.f32 %v3237, 0.0
        %v3271 = vrot.slane %v3269, 7
        %v3304 = vrot.slane %v3238, 7
        %v3305 = vrot.slane %v3239, 7
        %v3306 = vsel %vm830, %v3304, %v3305
        %v3307 = vrot.slane %v3240, 7
        %v3308 = vsel %vm830, %v3305, %v3307
        %v3309 = vrot.slane %v3241, 7
        %v3310 = vsel %vm830, %v3307, %v3309
        %v3311 = vrot.slane %v3242, 7
        %v3312 = vsel %vm830, %v3309, %v3311
        %v3313 = vrot.slane %v3243, 7
        %v3314 = vsel %vm830, %v3311, %v3313
        %v3315 = vrot.slane %v3244, 7
        %v3316 = vsel %vm830, %v3313, %v3315
        %v3317 = vrot.slane %v3245, 7
        %v3318 = vsel %vm830, %v3315, %v3317
        %v3319 = vrot.slane %v3246, 7
        %v3320 = vsel %vm830, %v3317, %v3319
        %v3321 = vrot.slane %v3247, 7
        %v3322 = vsel %vm830, %v3319, %v3321
        %v3323 = vrot.slane %v3248, 7
        %v3324 = vsel %vm830, %v3321, %v3323
        %v3325 = vrot.slane %v3249, 7
        %v3326 = vsel %vm830, %v3323, %v3325
        %v3327 = vrot.slane %v3250, 7
        %v3328 = vsel %vm830, %v3325, %v3327
        %v3329 = vrot.slane %v3251, 7
        %v3330 = vsel %vm830, %v3327, %v3329
        %v3331 = vrot.slane %v3252, 7
        %v3332 = vsel %vm830, %v3329, %v3331
        %v3333 = vrot.slane %v3253, 7
        %v3334 = vsel %vm830, %v3331, %v3333
        %v3335 = vrot.slane %v3254, 7
        %v3336 = vsel %vm830, %v3333, %v3335
        %v3337 = vrot.slane %v3255, 7
        %v3338 = vsel %vm830, %v3335, %v3337
        %v3339 = vrot.slane %v3256, 7
        %v3340 = vsel %vm830, %v3337, %v3339
        %v3341 = vrot.slane %v3257, 7
        %v3342 = vsel %vm830, %v3339, %v3341
        %v3343 = vrot.slane %v3258, 7
        %v3344 = vsel %vm830, %v3341, %v3343
        %v3345 = vrot.slane %v3259, 7
        %v3346 = vsel %vm830, %v3343, %v3345
        %v3347 = vrot.slane %v3260, 7
        %v3348 = vsel %vm830, %v3345, %v3347
        %v3349 = vrot.slane %v3261, 7
        %v3350 = vsel %vm830, %v3347, %v3349
        %v3351 = vrot.slane %v3262, 7
        %v3352 = vsel %vm830, %v3349, %v3351
        %v3353 = vrot.slane %v3263, 7
        %v3354 = vsel %vm830, %v3351, %v3353
        %v3355 = vrot.slane %v3264, 7
        %v3356 = vsel %vm830, %v3353, %v3355
        %v3357 = vrot.slane %v3265, 7
        %v3358 = vsel %vm830, %v3355, %v3357
        %v3359 = vrot.slane %v3266, 7
        %v3360 = vsel %vm830, %v3357, %v3359
        %v3361 = vrot.slane %v3267, 7
        %v3362 = vsel %vm830, %v3359, %v3361
        %v3363 = vrot.slane %v3268, 7
        %v3364 = vsel %vm830, %v3361, %v3363
        %v3365 = vsel %vm830, %v3363, %v3271
        %v3398 = vsel %vm830, %v3271, %v3304
        %v3399 = vrot.slane %v3238, 1
        %v3400 = vrot.slane %v3239, 1
        %v3401 = vsel %vm926, %v3399, %v3400
        %v3402 = vrot.slane %v3240, 1
        %v3403 = vsel %vm926, %v3400, %v3402
        %v3404 = vrot.slane %v3241, 1
        %v3405 = vsel %vm926, %v3402, %v3404
        %v3406 = vrot.slane %v3242, 1
        %v3407 = vsel %vm926, %v3404, %v3406
        %v3408 = vrot.slane %v3243, 1
        %v3409 = vsel %vm926, %v3406, %v3408
        %v3410 = vrot.slane %v3244, 1
        %v3411 = vsel %vm926, %v3408, %v3410
        %v3412 = vrot.slane %v3245, 1
        %v3413 = vsel %vm926, %v3410, %v3412
        %v3414 = vrot.slane %v3246, 1
        %v3415 = vsel %vm926, %v3412, %v3414
        %v3416 = vrot.slane %v3247, 1
        %v3417 = vsel %vm926, %v3414, %v3416
        %v3418 = vrot.slane %v3248, 1
        %v3419 = vsel %vm926, %v3416, %v3418
        %v3420 = vrot.slane %v3249, 1
        %v3421 = vsel %vm926, %v3418, %v3420
        %v3422 = vrot.slane %v3250, 1
        %v3423 = vsel %vm926, %v3420, %v3422
        %v3424 = vrot.slane %v3251, 1
        %v3425 = vsel %vm926, %v3422, %v3424
        %v3426 = vrot.slane %v3252, 1
        %v3427 = vsel %vm926, %v3424, %v3426
        %v3428 = vrot.slane %v3253, 1
        %v3429 = vsel %vm926, %v3426, %v3428
        %v3430 = vrot.slane %v3254, 1
        %v3431 = vsel %vm926, %v3428, %v3430
        %v3432 = vrot.slane %v3255, 1
        %v3433 = vsel %vm926, %v3430, %v3432
        %v3434 = vrot.slane %v3256, 1
        %v3435 = vsel %vm926, %v3432, %v3434
        %v3436 = vrot.slane %v3257, 1
        %v3437 = vsel %vm926, %v3434, %v3436
        %v3438 = vrot.slane %v3258, 1
        %v3439 = vsel %vm926, %v3436, %v3438
        %v3440 = vrot.slane %v3259, 1
        %v3441 = vsel %vm926, %v3438, %v3440
        %v3442 = vrot.slane %v3260, 1
        %v3443 = vsel %vm926, %v3440, %v3442
        %v3444 = vrot.slane %v3261, 1
        %v3445 = vsel %vm926, %v3442, %v3444
        %v3446 = vrot.slane %v3262, 1
        %v3447 = vsel %vm926, %v3444, %v3446
        %v3448 = vrot.slane %v3263, 1
        %v3449 = vsel %vm926, %v3446, %v3448
        %v3450 = vrot.slane %v3264, 1
        %v3451 = vsel %vm926, %v3448, %v3450
        %v3452 = vrot.slane %v3265, 1
        %v3453 = vsel %vm926, %v3450, %v3452
        %v3454 = vrot.slane %v3266, 1
        %v3455 = vsel %vm926, %v3452, %v3454
        %v3456 = vrot.slane %v3267, 1
        %v3457 = vsel %vm926, %v3454, %v3456
        %v3458 = vrot.slane %v3268, 1
        %v3459 = vsel %vm926, %v3456, %v3458
        %v3460 = vrot.slane %v3269, 1
        %v3461 = vsel %vm926, %v3458, %v3460
        %v3495 = vsel %vm926, %v3460, %v3399
        %v3496 = vsel %vm1056, %v3401, %v3398
        %v3497 = vsel %vm1057, %v3403, %v3306
        %v3498 = vsel %vm1058, %v3405, %v3308
        %v3499 = vsel %vm1059, %v3407, %v3310
        %v3500 = vsel %vm1060, %v3409, %v3312
        %v3501 = vsel %vm1061, %v3411, %v3314
        %v3502 = vsel %vm1062, %v3413, %v3316
        %v3503 = vsel %vm1063, %v3415, %v3318
        %v3504 = vsel %vm1064, %v3417, %v3320
        %v3505 = vsel %vm1065, %v3419, %v3322
        %v3506 = vsel %vm1066, %v3421, %v3324
        %v3507 = vsel %vm1067, %v3423, %v3326
        %v3508 = vsel %vm1068, %v3425, %v3328
        %v3509 = vsel %vm1069, %v3427, %v3330
        %v3510 = vsel %vm1070, %v3429, %v3332
        %v3511 = vsel %vm1071, %v3431, %v3334
        %v3512 = vsel %vm1072, %v3433, %v3336
        %v3513 = vsel %vm1073, %v3435, %v3338
        %v3514 = vsel %vm1074, %v3437, %v3340
        %v3515 = vsel %vm1075, %v3439, %v3342
        %v3516 = vsel %vm1076, %v3441, %v3344
        %v3517 = vsel %vm1077, %v3443, %v3346
        %v3518 = vsel %vm1078, %v3445, %v3348
        %v3519 = vsel %vm1079, %v3447, %v3350
        %v3520 = vsel %vm1080, %v3449, %v3352
        %v3521 = vsel %vm1081, %v3451, %v3354
        %v3522 = vsel %vm1082, %v3453, %v3356
        %v3523 = vsel %vm1083, %v3455, %v3358
        %v3524 = vsel %vm1084, %v3457, %v3360
        %v3525 = vsel %vm1085, %v3459, %v3362
        %v3526 = vsel %vm1086, %v3461, %v3364
        %v3527 = vsel %vm1087, %v3495, %v3365
        %v3528 = vsel %vm1152, %v3398, %v3401
        %v3529 = vsel %vm1153, %v3306, %v3403
        %v3530 = vsel %vm1154, %v3308, %v3405
        %v3531 = vsel %vm1155, %v3310, %v3407
        %v3532 = vsel %vm1156, %v3312, %v3409
        %v3533 = vsel %vm1157, %v3314, %v3411
        %v3534 = vsel %vm1158, %v3316, %v3413
        %v3535 = vsel %vm1159, %v3318, %v3415
        %v3536 = vsel %vm1160, %v3320, %v3417
        %v3537 = vsel %vm1161, %v3322, %v3419
        %v3538 = vsel %vm1162, %v3324, %v3421
        %v3539 = vsel %vm1163, %v3326, %v3423
        %v3540 = vsel %vm1164, %v3328, %v3425
        %v3541 = vsel %vm1165, %v3330, %v3427
        %v3542 = vsel %vm1166, %v3332, %v3429
        %v3543 = vsel %vm1167, %v3334, %v3431
        %v3544 = vsel %vm1168, %v3336, %v3433
        %v3545 = vsel %vm1169, %v3338, %v3435
        %v3546 = vsel %vm1170, %v3340, %v3437
        %v3547 = vsel %vm1171, %v3342, %v3439
        %v3548 = vsel %vm1172, %v3344, %v3441
        %v3549 = vsel %vm1173, %v3346, %v3443
        %v3550 = vsel %vm1174, %v3348, %v3445
        %v3551 = vsel %vm1175, %v3350, %v3447
        %v3552 = vsel %vm1176, %v3352, %v3449
        %v3553 = vsel %vm1177, %v3354, %v3451
        %v3554 = vsel %vm1178, %v3356, %v3453
        %v3555 = vsel %vm1179, %v3358, %v3455
        %v3556 = vsel %vm1180, %v3360, %v3457
        %v3557 = vsel %vm1181, %v3362, %v3459
        %v3558 = vsel %vm1182, %v3364, %v3461
        %v3559 = vsel %vm1183, %v3365, %v3495
        %v3560 = vsel %vm1248, %v3498, %v3526
        %v3561 = vsel %vm1248, %v3240, %v3268
        %v3562 = vsel %vm1248, %v3530, %v3558
        %v3563 = vsel %vm1249, %v3499, %v3527
        %v3564 = vsel %vm1249, %v3241, %v3269
        %v3565 = vsel %vm1249, %v3531, %v3559
        %v3566 = vsel %vm1250, %v3500, %v3496
        %v3567 = vsel %vm1250, %v3242, %v3238
        %v3568 = vsel %vm1250, %v3532, %v3528
        %v3569 = vsel %vm1251, %v3501, %v3497
        %v3570 = vsel %vm1251, %v3243, %v3239
        %v3571 = vsel %vm1251, %v3533, %v3529
        %v3572 = vsel %vm1252, %v3502, %v3498
        %v3573 = vsel %vm1252, %v3244, %v3240
        %v3574 = vsel %vm1252, %v3534, %v3530
        %v3575 = vsel %vm1253, %v3503, %v3499
        %v3576 = vsel %vm1253, %v3245, %v3241
        %v3577 = vsel %vm1253, %v3535, %v3531
        %v3578 = vsel %vm1254, %v3504, %v3500
        %v3579 = vsel %vm1254, %v3246, %v3242
        %v3580 = vsel %vm1254, %v3536, %v3532
        %v3581 = vsel %vm1255, %v3505, %v3501
        %v3582 = vsel %vm1255, %v3247, %v3243
        %v3583 = vsel %vm1255, %v3537, %v3533
        %v3584 = vsel %vm1256, %v3506, %v3502
        %v3585 = vsel %vm1256, %v3248, %v3244
        %v3586 = vsel %vm1256, %v3538, %v3534
        %v3587 = vsel %vm1257, %v3507, %v3503
        %v3588 = vsel %vm1257, %v3249, %v3245
        %v3589 = vsel %vm1257, %v3539, %v3535
        %v3590 = vsel %vm1258, %v3508, %v3504
        %v3591 = vsel %vm1258, %v3250, %v3246
        %v3592 = vsel %vm1258, %v3540, %v3536
        %v3593 = vsel %vm1259, %v3509, %v3505
        %v3594 = vsel %vm1259, %v3251, %v3247
        %v3595 = vsel %vm1259, %v3541, %v3537
        %v3596 = vsel %vm1260, %v3510, %v3506
        %v3597 = vsel %vm1260, %v3252, %v3248
        %v3598 = vsel %vm1260, %v3542, %v3538
        %v3599 = vsel %vm1261, %v3511, %v3507
        %v3600 = vsel %vm1261, %v3253, %v3249
        %v3601 = vsel %vm1261, %v3543, %v3539
        %v3602 = vsel %vm1262, %v3512, %v3508
        %v3603 = vsel %vm1262, %v3254, %v3250
        %v3604 = vsel %vm1262, %v3544, %v3540
        %v3605 = vsel %vm1263, %v3513, %v3509
        %v3606 = vsel %vm1263, %v3255, %v3251
        %v3607 = vsel %vm1263, %v3545, %v3541
        %v3608 = vsel %vm1264, %v3514, %v3510
        %v3609 = vsel %vm1264, %v3256, %v3252
        %v3610 = vsel %vm1264, %v3546, %v3542
        %v3611 = vsel %vm1265, %v3515, %v3511
        %v3612 = vsel %vm1265, %v3257, %v3253
        %v3613 = vsel %vm1265, %v3547, %v3543
        %v3614 = vsel %vm1266, %v3516, %v3512
        %v3615 = vsel %vm1266, %v3258, %v3254
        %v3616 = vsel %vm1266, %v3548, %v3544
        %v3617 = vsel %vm1267, %v3517, %v3513
        %v3618 = vsel %vm1267, %v3259, %v3255
        %v3619 = vsel %vm1267, %v3549, %v3545
        %v3620 = vsel %vm1268, %v3518, %v3514
        %v3621 = vsel %vm1268, %v3260, %v3256
        %v3622 = vsel %vm1268, %v3550, %v3546
        %v3623 = vsel %vm1269, %v3519, %v3515
        %v3624 = vsel %vm1269, %v3261, %v3257
        %v3625 = vsel %vm1269, %v3551, %v3547
        %v3626 = vsel %vm1270, %v3520, %v3516
        %v3627 = vsel %vm1270, %v3262, %v3258
        %v3628 = vsel %vm1270, %v3552, %v3548
        %v3629 = vsel %vm1271, %v3521, %v3517
        %v3630 = vsel %vm1271, %v3263, %v3259
        %v3631 = vsel %vm1271, %v3553, %v3549
        %v3632 = vsel %vm1272, %v3522, %v3518
        %v3633 = vsel %vm1272, %v3264, %v3260
        %v3634 = vsel %vm1272, %v3554, %v3550
        %v3635 = vsel %vm1273, %v3523, %v3519
        %v3636 = vsel %vm1273, %v3265, %v3261
        %v3637 = vsel %vm1273, %v3555, %v3551
        %v3638 = vsel %vm1274, %v3524, %v3520
        %v3639 = vsel %vm1274, %v3266, %v3262
        %v3640 = vsel %vm1274, %v3556, %v3552
        %v3641 = vsel %vm1275, %v3525, %v3521
        %v3642 = vsel %vm1275, %v3267, %v3263
        %v3643 = vsel %vm1275, %v3557, %v3553
        %v3644 = vsel %vm1276, %v3526, %v3522
        %v3645 = vsel %vm1276, %v3268, %v3264
        %v3646 = vsel %vm1276, %v3558, %v3554
        %v3647 = vsel %vm1277, %v3527, %v3523
        %v3648 = vsel %vm1277, %v3269, %v3265
        %v3649 = vsel %vm1277, %v3559, %v3555
        %v3650 = vsel %vm1278, %v3496, %v3524
        %v3651 = vsel %vm1278, %v3238, %v3266
        %v3652 = vsel %vm1278, %v3528, %v3556
        %v3653 = vsel %vm1279, %v3497, %v3525
        %v3654 = vsel %vm1279, %v3239, %v3267
        %v3655 = vsel %vm1279, %v3529, %v3557
        %v3656 = vsel %vm1408, %v3526, %v3498
        %v3657 = vsel %vm1408, %v3268, %v3240
        %v3658 = vsel %vm1408, %v3558, %v3530
        %v3659 = vsel %vm1409, %v3527, %v3499
        %v3660 = vsel %vm1409, %v3269, %v3241
        %v3661 = vsel %vm1409, %v3559, %v3531
        %v3662 = vsel %vm1410, %v3496, %v3500
        %v3663 = vsel %vm1410, %v3238, %v3242
        %v3664 = vsel %vm1410, %v3528, %v3532
        %v3665 = vsel %vm1411, %v3497, %v3501
        %v3666 = vsel %vm1411, %v3239, %v3243
        %v3667 = vsel %vm1411, %v3529, %v3533
        %v3668 = vsel %vm1412, %v3498, %v3502
        %v3669 = vsel %vm1412, %v3240, %v3244
        %v3670 = vsel %vm1412, %v3530, %v3534
        %v3671 = vsel %vm1413, %v3499, %v3503
        %v3672 = vsel %vm1413, %v3241, %v3245
        %v3673 = vsel %vm1413, %v3531, %v3535
        %v3674 = vsel %vm1414, %v3500, %v3504
        %v3675 = vsel %vm1414, %v3242, %v3246
        %v3676 = vsel %vm1414, %v3532, %v3536
        %v3677 = vsel %vm1415, %v3501, %v3505
        %v3678 = vsel %vm1415, %v3243, %v3247
        %v3679 = vsel %vm1415, %v3533, %v3537
        %v3680 = vsel %vm1416, %v3502, %v3506
        %v3681 = vsel %vm1416, %v3244, %v3248
        %v3682 = vsel %vm1416, %v3534, %v3538
        %v3683 = vsel %vm1417, %v3503, %v3507
        %v3684 = vsel %vm1417, %v3245, %v3249
        %v3685 = vsel %vm1417, %v3535, %v3539
        %v3686 = vsel %vm1418, %v3504, %v3508
        %v3687 = vsel %vm1418, %v3246, %v3250
        %v3688 = vsel %vm1418, %v3536, %v3540
        %v3689 = vsel %vm1419, %v3505, %v3509
        %v3690 = vsel %vm1419, %v3247, %v3251
        %v3691 = vsel %vm1419, %v3537, %v3541
        %v3692 = vsel %vm1420, %v3506, %v3510
        %v3693 = vsel %vm1420, %v3248, %v3252
        %v3694 = vsel %vm1420, %v3538, %v3542
        %v3695 = vsel %vm1421, %v3507, %v3511
        %v3696 = vsel %vm1421, %v3249, %v3253
        %v3697 = vsel %vm1421, %v3539, %v3543
        %v3698 = vsel %vm1422, %v3508, %v3512
        %v3699 = vsel %vm1422, %v3250, %v3254
        %v3700 = vsel %vm1422, %v3540, %v3544
        %v3701 = vsel %vm1423, %v3509, %v3513
        %v3702 = vsel %vm1423, %v3251, %v3255
        %v3703 = vsel %vm1423, %v3541, %v3545
        %v3704 = vsel %vm1424, %v3510, %v3514
        %v3705 = vsel %vm1424, %v3252, %v3256
        %v3706 = vsel %vm1424, %v3542, %v3546
        %v3707 = vsel %vm1425, %v3511, %v3515
        %v3708 = vsel %vm1425, %v3253, %v3257
        %v3709 = vsel %vm1425, %v3543, %v3547
        %v3710 = vsel %vm1426, %v3512, %v3516
        %v3711 = vsel %vm1426, %v3254, %v3258
        %v3712 = vsel %vm1426, %v3544, %v3548
        %v3713 = vsel %vm1427, %v3513, %v3517
        %v3714 = vsel %vm1427, %v3255, %v3259
        %v3715 = vsel %vm1427, %v3545, %v3549
        %v3716 = vsel %vm1428, %v3514, %v3518
        %v3717 = vsel %vm1428, %v3256, %v3260
        %v3718 = vsel %vm1428, %v3546, %v3550
        %v3719 = vsel %vm1429, %v3515, %v3519
        %v3720 = vsel %vm1429, %v3257, %v3261
        %v3721 = vsel %vm1429, %v3547, %v3551
        %v3722 = vsel %vm1430, %v3516, %v3520
        %v3723 = vsel %vm1430, %v3258, %v3262
        %v3724 = vsel %vm1430, %v3548, %v3552
        %v3725 = vsel %vm1431, %v3517, %v3521
        %v3726 = vsel %vm1431, %v3259, %v3263
        %v3727 = vsel %vm1431, %v3549, %v3553
        %v3728 = vsel %vm1432, %v3518, %v3522
        %v3729 = vsel %vm1432, %v3260, %v3264
        %v3730 = vsel %vm1432, %v3550, %v3554
        %v3731 = vsel %vm1433, %v3519, %v3523
        %v3732 = vsel %vm1433, %v3261, %v3265
        %v3733 = vsel %vm1433, %v3551, %v3555
        %v3734 = vsel %vm1434, %v3520, %v3524
        %v3735 = vsel %vm1434, %v3262, %v3266
        %v3736 = vsel %vm1434, %v3552, %v3556
        %v3737 = vsel %vm1435, %v3521, %v3525
        %v3738 = vsel %vm1435, %v3263, %v3267
        %v3739 = vsel %vm1435, %v3553, %v3557
        %v3740 = vsel %vm1436, %v3522, %v3526
        %v3741 = vsel %vm1436, %v3264, %v3268
        %v3742 = vsel %vm1436, %v3554, %v3558
        %v3743 = vsel %vm1437, %v3523, %v3527
        %v3744 = vsel %vm1437, %v3265, %v3269
        %v3745 = vsel %vm1437, %v3555, %v3559
        %v3746 = vsel %vm1438, %v3524, %v3496
        %v3747 = vsel %vm1438, %v3266, %v3238
        %v3748 = vsel %vm1438, %v3556, %v3528
        %v3749 = vsel %vm1439, %v3525, %v3497
        %v3750 = vsel %vm1439, %v3267, %v3239
        %v3751 = vsel %vm1439, %v3557, %v3529
        %v3752 = vpack.c.bf16 %v3563, %v3560
        %v3753 = vpack.c.bf16 %v3564, %v3561
        %v3754 = vpack.c.bf16 %v3565, %v3562
        %v3755 = vpack.c.bf16 %v3497, %v3496
        %v3756 = vpack.c.bf16 %v3239, %v3238
        %v3757 = vpack.c.bf16 %v3529, %v3528
        %v3758 = vpack.c.bf16 %v3659, %v3656
        %v3759 = vpack.c.bf16 %v3660, %v3657
        %v3760 = vpack.c.bf16 %v3661, %v3658
        %v3761 = vpack.c.bf16 %v3569, %v3566
        %v3762 = vpack.c.bf16 %v3570, %v3567
        %v3763 = vpack.c.bf16 %v3571, %v3568
        %v3764 = vpack.c.bf16 %v3499, %v3498
        %v3765 = vpack.c.bf16 %v3241, %v3240
        %v3766 = vpack.c.bf16 %v3531, %v3530
        %v3767 = vpack.c.bf16 %v3665, %v3662
        %v3768 = vpack.c.bf16 %v3666, %v3663
        %v3769 = vpack.c.bf16 %v3667, %v3664
        %v3770 = vpack.c.bf16 %v3575, %v3572
        %v3771 = vpack.c.bf16 %v3576, %v3573
        %v3772 = vpack.c.bf16 %v3577, %v3574
        %v3773 = vpack.c.bf16 %v3501, %v3500
        %v3774 = vpack.c.bf16 %v3243, %v3242
        %v3775 = vpack.c.bf16 %v3533, %v3532
        %v3776 = vpack.c.bf16 %v3671, %v3668
        %v3777 = vpack.c.bf16 %v3672, %v3669
        %v3778 = vpack.c.bf16 %v3673, %v3670
        %v3779 = vpack.c.bf16 %v3581, %v3578
        %v3780 = vpack.c.bf16 %v3582, %v3579
        %v3781 = vpack.c.bf16 %v3583, %v3580
        %v3782 = vpack.c.bf16 %v3503, %v3502
        %v3783 = vpack.c.bf16 %v3245, %v3244
        %v3784 = vpack.c.bf16 %v3535, %v3534
        %v3785 = vpack.c.bf16 %v3677, %v3674
        %v3786 = vpack.c.bf16 %v3678, %v3675
        %v3787 = vpack.c.bf16 %v3679, %v3676
        %v3788 = vpack.c.bf16 %v3587, %v3584
        %v3789 = vpack.c.bf16 %v3588, %v3585
        %v3790 = vpack.c.bf16 %v3589, %v3586
        %v3791 = vpack.c.bf16 %v3505, %v3504
        %v3792 = vpack.c.bf16 %v3247, %v3246
        %v3793 = vpack.c.bf16 %v3537, %v3536
        %v3794 = vpack.c.bf16 %v3683, %v3680
        %v3795 = vpack.c.bf16 %v3684, %v3681
        %v3796 = vpack.c.bf16 %v3685, %v3682
        %v3797 = vpack.c.bf16 %v3593, %v3590
        %v3798 = vpack.c.bf16 %v3594, %v3591
        %v3799 = vpack.c.bf16 %v3595, %v3592
        %v3800 = vpack.c.bf16 %v3507, %v3506
        %v3801 = vpack.c.bf16 %v3249, %v3248
        %v3802 = vpack.c.bf16 %v3539, %v3538
        %v3803 = vpack.c.bf16 %v3689, %v3686
        %v3804 = vpack.c.bf16 %v3690, %v3687
        %v3805 = vpack.c.bf16 %v3691, %v3688
        %v3806 = vpack.c.bf16 %v3599, %v3596
        %v3807 = vpack.c.bf16 %v3600, %v3597
        %v3808 = vpack.c.bf16 %v3601, %v3598
        %v3809 = vpack.c.bf16 %v3509, %v3508
        %v3810 = vpack.c.bf16 %v3251, %v3250
        %v3811 = vpack.c.bf16 %v3541, %v3540
        %v3812 = vpack.c.bf16 %v3695, %v3692
        %v3813 = vpack.c.bf16 %v3696, %v3693
        %v3814 = vpack.c.bf16 %v3697, %v3694
        %v3815 = vpack.c.bf16 %v3605, %v3602
        %v3816 = vpack.c.bf16 %v3606, %v3603
        %v3817 = vpack.c.bf16 %v3607, %v3604
        %v3818 = vpack.c.bf16 %v3511, %v3510
        %v3819 = vpack.c.bf16 %v3253, %v3252
        %v3820 = vpack.c.bf16 %v3543, %v3542
        %v3821 = vpack.c.bf16 %v3701, %v3698
        %v3822 = vpack.c.bf16 %v3702, %v3699
        %v3823 = vpack.c.bf16 %v3703, %v3700
        %v3824 = vpack.c.bf16 %v3611, %v3608
        %v3825 = vpack.c.bf16 %v3612, %v3609
        %v3826 = vpack.c.bf16 %v3613, %v3610
        %v3827 = vpack.c.bf16 %v3513, %v3512
        %v3828 = vpack.c.bf16 %v3255, %v3254
        %v3829 = vpack.c.bf16 %v3545, %v3544
        %v3830 = vpack.c.bf16 %v3707, %v3704
        %v3831 = vpack.c.bf16 %v3708, %v3705
        %v3832 = vpack.c.bf16 %v3709, %v3706
        %v3833 = vpack.c.bf16 %v3617, %v3614
        %v3834 = vpack.c.bf16 %v3618, %v3615
        %v3835 = vpack.c.bf16 %v3619, %v3616
        %v3836 = vpack.c.bf16 %v3515, %v3514
        %v3837 = vpack.c.bf16 %v3257, %v3256
        %v3838 = vpack.c.bf16 %v3547, %v3546
        %v3839 = vpack.c.bf16 %v3713, %v3710
        %v3840 = vpack.c.bf16 %v3714, %v3711
        %v3841 = vpack.c.bf16 %v3715, %v3712
        %v3842 = vpack.c.bf16 %v3623, %v3620
        %v3843 = vpack.c.bf16 %v3624, %v3621
        %v3844 = vpack.c.bf16 %v3625, %v3622
        %v3845 = vpack.c.bf16 %v3517, %v3516
        %v3846 = vpack.c.bf16 %v3259, %v3258
        %v3847 = vpack.c.bf16 %v3549, %v3548
        %v3848 = vpack.c.bf16 %v3719, %v3716
        %v3849 = vpack.c.bf16 %v3720, %v3717
        %v3850 = vpack.c.bf16 %v3721, %v3718
        %v3851 = vpack.c.bf16 %v3629, %v3626
        %v3852 = vpack.c.bf16 %v3630, %v3627
        %v3853 = vpack.c.bf16 %v3631, %v3628
        %v3854 = vpack.c.bf16 %v3519, %v3518
        %v3855 = vpack.c.bf16 %v3261, %v3260
        %v3856 = vpack.c.bf16 %v3551, %v3550
        %v3857 = vpack.c.bf16 %v3725, %v3722
        %v3858 = vpack.c.bf16 %v3726, %v3723
        %v3859 = vpack.c.bf16 %v3727, %v3724
        %v3860 = vpack.c.bf16 %v3635, %v3632
        %v3861 = vpack.c.bf16 %v3636, %v3633
        %v3862 = vpack.c.bf16 %v3637, %v3634
        %v3863 = vpack.c.bf16 %v3521, %v3520
        %v3864 = vpack.c.bf16 %v3263, %v3262
        %v3865 = vpack.c.bf16 %v3553, %v3552
        %v3866 = vpack.c.bf16 %v3731, %v3728
        %v3867 = vpack.c.bf16 %v3732, %v3729
        %v3868 = vpack.c.bf16 %v3733, %v3730
        %v3869 = vpack.c.bf16 %v3641, %v3638
        %v3870 = vpack.c.bf16 %v3642, %v3639
        %v3871 = vpack.c.bf16 %v3643, %v3640
        %v3872 = vpack.c.bf16 %v3523, %v3522
        %v3873 = vpack.c.bf16 %v3265, %v3264
        %v3874 = vpack.c.bf16 %v3555, %v3554
        %v3875 = vpack.c.bf16 %v3737, %v3734
        %v3876 = vpack.c.bf16 %v3738, %v3735
        %v3877 = vpack.c.bf16 %v3739, %v3736
        %v3878 = vpack.c.bf16 %v3647, %v3644
        %v3879 = vpack.c.bf16 %v3648, %v3645
        %v3880 = vpack.c.bf16 %v3649, %v3646
        %v3881 = vpack.c.bf16 %v3525, %v3524
        %v3882 = vpack.c.bf16 %v3267, %v3266
        %v3883 = vpack.c.bf16 %v3557, %v3556
        %v3884 = vpack.c.bf16 %v3743, %v3740
        %v3885 = vpack.c.bf16 %v3744, %v3741
        %v3886 = vpack.c.bf16 %v3745, %v3742
        %v3887 = vpack.c.bf16 %v3653, %v3650
        %v3888 = vpack.c.bf16 %v3654, %v3651
        %v3889 = vpack.c.bf16 %v3655, %v3652
        %v3890 = vpack.c.bf16 %v3527, %v3526
        %v3891 = vpack.c.bf16 %v3269, %v3268
        %v3892 = vpack.c.bf16 %v3559, %v3558
        %v3893 = vpack.c.bf16 %v3749, %v3746
        %v3894 = vpack.c.bf16 %v3750, %v3747
        %v3895 = vpack.c.bf16 %v3751, %v3748
        %v3896 = vld [vmem:[#allocation7] sm:$0xf]
        %v3897 = vld [vmem:[#allocation7 + $0x4] sm:$0xf]
        %v3898 = vld [vmem:[#allocation7 + $0x8] sm:$0xf]
        %v3899 = vld [vmem:[#allocation7 + $0xc] sm:$0xf]
        %v3900 = vld [vmem:[#allocation7 + $0x10] sm:$0xf]
        %v3901 = vld [vmem:[#allocation7 + $0x14] sm:$0xf]
        %v3902 = vld [vmem:[#allocation7 + $0x18] sm:$0xf]
        %v3903 = vld [vmem:[#allocation7 + $0x1c] sm:$0xf]
        %v3904 = vld [vmem:[#allocation7 + $0x20] sm:$0xf]
        %v3905 = vld [vmem:[#allocation7 + $0x24] sm:$0xf]
        %v3906 = vld [vmem:[#allocation7 + $0x28] sm:$0xf]
        %v3907 = vld [vmem:[#allocation7 + $0x2c] sm:$0xf]
        %v3908 = vld [vmem:[#allocation7 + $0x30] sm:$0xf]
        %v3909 = vld [vmem:[#allocation7 + $0x34] sm:$0xf]
        %v3910 = vld [vmem:[#allocation7 + $0x38] sm:$0xf]
        %v3911 = vld [vmem:[#allocation7 + $0x3c] sm:$0xf]
        %v3912 = vld [vmem:[#allocation7 + $0x40] sm:$0xf]
        %v3913 = vld [vmem:[#allocation7 + $0x44] sm:$0xf]
        %v3914 = vld [vmem:[#allocation7 + $0x48] sm:$0xf]
        %v3915 = vld [vmem:[#allocation7 + $0x4c] sm:$0xf]
        %v3916 = vld [vmem:[#allocation7 + $0x50] sm:$0xf]
        %v3917 = vld [vmem:[#allocation7 + $0x54] sm:$0xf]
        %v3918 = vld [vmem:[#allocation7 + $0x58] sm:$0xf]
        %v3919 = vld [vmem:[#allocation7 + $0x5c] sm:$0xf]
        %v3920 = vld [vmem:[#allocation7 + $0x60] sm:$0xf]
        %v3921 = vld [vmem:[#allocation7 + $0x64] sm:$0xf]
        %v3922 = vld [vmem:[#allocation7 + $0x68] sm:$0xf]
        %v3923 = vld [vmem:[#allocation7 + $0x6c] sm:$0xf]
        %v3924 = vld [vmem:[#allocation7 + $0x70] sm:$0xf]
        %v3925 = vld [vmem:[#allocation7 + $0x74] sm:$0xf]
        %v3926 = vld [vmem:[#allocation7 + $0x78] sm:$0xf]
        %v3927 = vld [vmem:[#allocation7 + $0x7c] sm:$0xf]
        %v3928 = vld [vmem:[#allocation7 + $0x80] sm:$0xf]
        %v3929 = vld [vmem:[#allocation7 + $0x84] sm:$0xf]
        %v3930 = vld [vmem:[#allocation7 + $0x88] sm:$0xf]
        %v3931 = vld [vmem:[#allocation7 + $0x8c] sm:$0xf]
        %v3932 = vld [vmem:[#allocation7 + $0x90] sm:$0xf]
        %v3933 = vld [vmem:[#allocation7 + $0x94] sm:$0xf]
        %v3934 = vld [vmem:[#allocation7 + $0x98] sm:$0xf]
        %v3935 = vld [vmem:[#allocation7 + $0x9c] sm:$0xf]
        %v3936 = vld [vmem:[#allocation7 + $0xa0] sm:$0xf]
        %v3937 = vld [vmem:[#allocation7 + $0xa4] sm:$0xf]
        %v3938 = vld [vmem:[#allocation7 + $0xa8] sm:$0xf]
        %v3939 = vld [vmem:[#allocation7 + $0xac] sm:$0xf]
        %v3940 = vld [vmem:[#allocation7 + $0xb0] sm:$0xf]
        %v3941 = vld [vmem:[#allocation7 + $0xb4] sm:$0xf]
        %v3942 = vld [vmem:[#allocation7 + $0xb8] sm:$0xf]
        %v3943 = vld [vmem:[#allocation7 + $0xbc] sm:$0xf]
        %v3944 = vld [vmem:[#allocation7 + $0xc0] sm:$0xf]
        %v3945 = vld [vmem:[#allocation7 + $0xc4] sm:$0xf]
        %v3946 = vld [vmem:[#allocation7 + $0xc8] sm:$0xf]
        %v3947 = vld [vmem:[#allocation7 + $0xcc] sm:$0xf]
        %v3948 = vld [vmem:[#allocation7 + $0xd0] sm:$0xf]
        %v3949 = vld [vmem:[#allocation7 + $0xd4] sm:$0xf]
        %v3950 = vld [vmem:[#allocation7 + $0xd8] sm:$0xf]
        %v3951 = vld [vmem:[#allocation7 + $0xdc] sm:$0xf]
        %v3952 = vld [vmem:[#allocation7 + $0xe0] sm:$0xf]
        %v3953 = vld [vmem:[#allocation7 + $0xe4] sm:$0xf]
        %v3954 = vld [vmem:[#allocation7 + $0xe8] sm:$0xf]
        %v3955 = vld [vmem:[#allocation7 + $0xec] sm:$0xf]
        %v3956 = vld [vmem:[#allocation7 + $0xf0] sm:$0xf]
        %v3957 = vld [vmem:[#allocation7 + $0xf4] sm:$0xf]
        %v3958 = vld [vmem:[#allocation7 + $0xf8] sm:$0xf]
        %v3959 = vld [vmem:[#allocation7 + $0xfc] sm:$0xf]
        %v3960 = vld [vmem:[#allocation7 + $0x100] sm:$0xf]
        %v3961 = vld [vmem:[#allocation7 + $0x104] sm:$0xf]
        %v3962 = vld [vmem:[#allocation7 + $0x108] sm:$0xf]
        %v3963 = vld [vmem:[#allocation7 + $0x10c] sm:$0xf]
        %v3964 = vld [vmem:[#allocation7 + $0x110] sm:$0xf]
        %v3965 = vld [vmem:[#allocation7 + $0x114] sm:$0xf]
        %v3966 = vld [vmem:[#allocation7 + $0x118] sm:$0xf]
        %v3967 = vld [vmem:[#allocation7 + $0x11c] sm:$0xf]
        %v3968 = vld [vmem:[#allocation7 + $0x120] sm:$0xf]
        %v3969 = vld [vmem:[#allocation7 + $0x124] sm:$0xf]
        %v3970 = vld [vmem:[#allocation7 + $0x128] sm:$0xf]
        %v3971 = vld [vmem:[#allocation7 + $0x12c] sm:$0xf]
        %v3972 = vld [vmem:[#allocation7 + $0x130] sm:$0xf]
        %v3973 = vld [vmem:[#allocation7 + $0x134] sm:$0xf]
        %v3974 = vld [vmem:[#allocation7 + $0x138] sm:$0xf]
        %v3975 = vld [vmem:[#allocation7 + $0x13c] sm:$0xf]
        %v3976 = vld [vmem:[#allocation7 + $0x140] sm:$0xf]
        %v3977 = vld [vmem:[#allocation7 + $0x144] sm:$0xf]
        %v3978 = vld [vmem:[#allocation7 + $0x148] sm:$0xf]
        %v3979 = vld [vmem:[#allocation7 + $0x14c] sm:$0xf]
        %v3980 = vld [vmem:[#allocation7 + $0x150] sm:$0xf]
        %v3981 = vld [vmem:[#allocation7 + $0x154] sm:$0xf]
        %v3982 = vld [vmem:[#allocation7 + $0x158] sm:$0xf]
        %v3983 = vld [vmem:[#allocation7 + $0x15c] sm:$0xf]
        %v3984 = vld [vmem:[#allocation7 + $0x160] sm:$0xf]
        %v3985 = vld [vmem:[#allocation7 + $0x164] sm:$0xf]
        %v3986 = vld [vmem:[#allocation7 + $0x168] sm:$0xf]
        %v3987 = vld [vmem:[#allocation7 + $0x16c] sm:$0xf]
        %v3988 = vld [vmem:[#allocation7 + $0x170] sm:$0xf]
        %v3989 = vld [vmem:[#allocation7 + $0x174] sm:$0xf]
        %v3990 = vld [vmem:[#allocation7 + $0x178] sm:$0xf]
        %v3991 = vld [vmem:[#allocation7 + $0x17c] sm:$0xf]
        %v3992 = vld [vmem:[#allocation7 + $0x180] sm:$0xf]
        %v3993 = vld [vmem:[#allocation7 + $0x184] sm:$0xf]
        %v3994 = vld [vmem:[#allocation7 + $0x188] sm:$0xf]
        %v3995 = vld [vmem:[#allocation7 + $0x18c] sm:$0xf]
        %v3996 = vld [vmem:[#allocation7 + $0x190] sm:$0xf]
        %v3997 = vld [vmem:[#allocation7 + $0x194] sm:$0xf]
        %v3998 = vld [vmem:[#allocation7 + $0x198] sm:$0xf]
        %v3999 = vld [vmem:[#allocation7 + $0x19c] sm:$0xf]
        %v4000 = vld [vmem:[#allocation7 + $0x1a0] sm:$0xf]
        %v4001 = vld [vmem:[#allocation7 + $0x1a4] sm:$0xf]
        %v4002 = vld [vmem:[#allocation7 + $0x1a8] sm:$0xf]
        %v4003 = vld [vmem:[#allocation7 + $0x1ac] sm:$0xf]
        %v4004 = vld [vmem:[#allocation7 + $0x1b0] sm:$0xf]
        %v4005 = vld [vmem:[#allocation7 + $0x1b4] sm:$0xf]
        %v4006 = vld [vmem:[#allocation7 + $0x1b8] sm:$0xf]
        %v4007 = vld [vmem:[#allocation7 + $0x1bc] sm:$0xf]
        %v4008 = vld [vmem:[#allocation7 + $0x1c0] sm:$0xf]
        %v4009 = vld [vmem:[#allocation7 + $0x1c4] sm:$0xf]
        %v4010 = vld [vmem:[#allocation7 + $0x1c8] sm:$0xf]
        %v4011 = vld [vmem:[#allocation7 + $0x1cc] sm:$0xf]
        %v4012 = vld [vmem:[#allocation7 + $0x1d0] sm:$0xf]
        %v4013 = vld [vmem:[#allocation7 + $0x1d4] sm:$0xf]
        %v4014 = vld [vmem:[#allocation7 + $0x1d8] sm:$0xf]
        %v4015 = vld [vmem:[#allocation7 + $0x1dc] sm:$0xf]
        %v4016 = vld [vmem:[#allocation7 + $0x1e0] sm:$0xf]
        %v4017 = vld [vmem:[#allocation7 + $0x1e4] sm:$0xf]
        %v4018 = vld [vmem:[#allocation7 + $0x1e8] sm:$0xf]
        %v4019 = vld [vmem:[#allocation7 + $0x1ec] sm:$0xf]
        %v4020 = vld [vmem:[#allocation7 + $0x1f0] sm:$0xf]
        %v4021 = vld [vmem:[#allocation7 + $0x1f4] sm:$0xf]
        %v4022 = vld [vmem:[#allocation7 + $0x1f8] sm:$0xf]
        %v4023 = vld [vmem:[#allocation7 + $0x1fc] sm:$0xf]
        %v4024 = vld [vmem:[#allocation7 + $0x200] sm:$0xf]
        %v4025 = vld [vmem:[#allocation7 + $0x204] sm:$0xf]
        %v4026 = vld [vmem:[#allocation7 + $0x208] sm:$0xf]
        %v4027 = vld [vmem:[#allocation7 + $0x20c] sm:$0xf]
        %v4028 = vld [vmem:[#allocation7 + $0x210] sm:$0xf]
        %v4029 = vld [vmem:[#allocation7 + $0x214] sm:$0xf]
        %v4030 = vld [vmem:[#allocation7 + $0x218] sm:$0xf]
        %v4031 = vld [vmem:[#allocation7 + $0x21c] sm:$0xf]
        %v4032 = vld [vmem:[#allocation7 + $0x220] sm:$0xf]
        %v4033 = vld [vmem:[#allocation7 + $0x224] sm:$0xf]
        %v4034 = vld [vmem:[#allocation7 + $0x228] sm:$0xf]
        %v4035 = vld [vmem:[#allocation7 + $0x22c] sm:$0xf]
        %v4036 = vld [vmem:[#allocation7 + $0x230] sm:$0xf]
        %v4037 = vld [vmem:[#allocation7 + $0x234] sm:$0xf]
        %v4038 = vld [vmem:[#allocation7 + $0x238] sm:$0xf]
        %v4039 = vld [vmem:[#allocation7 + $0x23c] sm:$0xf]
        %v4184 = vunpack.c.l.b16 %v3896
        %v4185 = vunpack.c.l.b16 %v3897
        %v4186 = vunpack.c.l.b16 %v3898
        %v4187 = vunpack.c.l.b16 %v3899
        %v4188 = vunpack.c.l.b16 %v3900
        %v4189 = vunpack.c.l.b16 %v3901
        %v4190 = vunpack.c.l.b16 %v3902
        %v4191 = vunpack.c.l.b16 %v3903
        %v4192 = vunpack.c.l.b16 %v3904
        %v4193 = vunpack.c.l.b16 %v3905
        %v4194 = vunpack.c.l.b16 %v3906
        %v4195 = vunpack.c.l.b16 %v3907
        %v4196 = vunpack.c.l.b16 %v3908
        %v4197 = vunpack.c.l.b16 %v3909
        %v4198 = vunpack.c.l.b16 %v3910
        %v4199 = vunpack.c.l.b16 %v3911
        %v4200 = vunpack.c.l.b16 %v3912
        %v4201 = vunpack.c.l.b16 %v3913
        %v4202 = vunpack.c.l.b16 %v3914
        %v4203 = vunpack.c.l.b16 %v3915
        %v4204 = vunpack.c.l.b16 %v3916
        %v4205 = vunpack.c.l.b16 %v3917
        %v4206 = vunpack.c.l.b16 %v3918
        %v4207 = vunpack.c.l.b16 %v3919
        %v4208 = vunpack.c.l.b16 %v3920
        %v4209 = vunpack.c.l.b16 %v3921
        %v4210 = vunpack.c.l.b16 %v3922
        %v4211 = vunpack.c.l.b16 %v3923
        %v4212 = vunpack.c.l.b16 %v3924
        %v4213 = vunpack.c.l.b16 %v3925
        %v4214 = vunpack.c.l.b16 %v3926
        %v4215 = vunpack.c.l.b16 %v3927
        %v4216 = vunpack.c.l.b16 %v3928
        %v4217 = vunpack.c.l.b16 %v3929
        %v4218 = vunpack.c.l.b16 %v3930
        %v4219 = vunpack.c.l.b16 %v3931
        %v4220 = vunpack.c.l.b16 %v3932
        %v4221 = vunpack.c.l.b16 %v3933
        %v4222 = vunpack.c.l.b16 %v3934
        %v4223 = vunpack.c.l.b16 %v3935
        %v4224 = vunpack.c.l.b16 %v3936
        %v4225 = vunpack.c.l.b16 %v3937
        %v4226 = vunpack.c.l.b16 %v3938
        %v4227 = vunpack.c.l.b16 %v3939
        %v4228 = vunpack.c.l.b16 %v3940
        %v4229 = vunpack.c.l.b16 %v3941
        %v4230 = vunpack.c.l.b16 %v3942
        %v4231 = vunpack.c.l.b16 %v3943
        %v4232 = vunpack.c.l.b16 %v3944
        %v4233 = vunpack.c.l.b16 %v3945
        %v4234 = vunpack.c.l.b16 %v3946
        %v4235 = vunpack.c.l.b16 %v3947
        %v4236 = vunpack.c.l.b16 %v3948
        %v4237 = vunpack.c.l.b16 %v3949
        %v4238 = vunpack.c.l.b16 %v3950
        %v4239 = vunpack.c.l.b16 %v3951
        %v4240 = vunpack.c.l.b16 %v3952
        %v4241 = vunpack.c.l.b16 %v3953
        %v4242 = vunpack.c.l.b16 %v3954
        %v4243 = vunpack.c.l.b16 %v3955
        %v4244 = vunpack.c.l.b16 %v3956
        %v4245 = vunpack.c.l.b16 %v3957
        %v4246 = vunpack.c.l.b16 %v3958
        %v4247 = vunpack.c.l.b16 %v3959
        %v4248 = vunpack.c.l.b16 %v3960
        %v4249 = vunpack.c.l.b16 %v3961
        %v4250 = vunpack.c.l.b16 %v3962
        %v4251 = vunpack.c.l.b16 %v3963
        %v4252 = vunpack.c.l.b16 %v3964
        %v4253 = vunpack.c.l.b16 %v3965
        %v4254 = vunpack.c.l.b16 %v3966
        %v4255 = vunpack.c.l.b16 %v3967
        %v4256 = vunpack.c.l.b16 %v3968
        %v4257 = vunpack.c.l.b16 %v3969
        %v4258 = vunpack.c.l.b16 %v3970
        %v4259 = vunpack.c.l.b16 %v3971
        %v4260 = vunpack.c.l.b16 %v3972
        %v4261 = vunpack.c.l.b16 %v3973
        %v4262 = vunpack.c.l.b16 %v3974
        %v4263 = vunpack.c.l.b16 %v3975
        %v4264 = vunpack.c.l.b16 %v3976
        %v4265 = vunpack.c.l.b16 %v3977
        %v4266 = vunpack.c.l.b16 %v3978
        %v4267 = vunpack.c.l.b16 %v3979
        %v4268 = vunpack.c.l.b16 %v3980
        %v4269 = vunpack.c.l.b16 %v3981
        %v4270 = vunpack.c.l.b16 %v3982
        %v4271 = vunpack.c.l.b16 %v3983
        %v4272 = vunpack.c.l.b16 %v3984
        %v4273 = vunpack.c.l.b16 %v3985
        %v4274 = vunpack.c.l.b16 %v3986
        %v4275 = vunpack.c.l.b16 %v3987
        %v4276 = vunpack.c.l.b16 %v3988
        %v4277 = vunpack.c.l.b16 %v3989
        %v4278 = vunpack.c.l.b16 %v3990
        %v4279 = vunpack.c.l.b16 %v3991
        %v4280 = vunpack.c.l.b16 %v3992
        %v4281 = vunpack.c.l.b16 %v3993
        %v4282 = vunpack.c.l.b16 %v3994
        %v4283 = vunpack.c.l.b16 %v3995
        %v4284 = vunpack.c.l.b16 %v3996
        %v4285 = vunpack.c.l.b16 %v3997
        %v4286 = vunpack.c.l.b16 %v3998
        %v4287 = vunpack.c.l.b16 %v3999
        %v4288 = vunpack.c.l.b16 %v4000
        %v4289 = vunpack.c.l.b16 %v4001
        %v4290 = vunpack.c.l.b16 %v4002
        %v4291 = vunpack.c.l.b16 %v4003
        %v4292 = vunpack.c.l.b16 %v4004
        %v4293 = vunpack.c.l.b16 %v4005
        %v4294 = vunpack.c.l.b16 %v4006
        %v4295 = vunpack.c.l.b16 %v4007
        %v4296 = vunpack.c.l.b16 %v4008
        %v4297 = vunpack.c.l.b16 %v4009
        %v4298 = vunpack.c.l.b16 %v4010
        %v4299 = vunpack.c.l.b16 %v4011
        %v4300 = vunpack.c.l.b16 %v4012
        %v4301 = vunpack.c.l.b16 %v4013
        %v4302 = vunpack.c.l.b16 %v4014
        %v4303 = vunpack.c.l.b16 %v4015
        %v4304 = vunpack.c.l.b16 %v4016
        %v4305 = vunpack.c.l.b16 %v4017
        %v4306 = vunpack.c.l.b16 %v4018
        %v4307 = vunpack.c.l.b16 %v4019
        %v4308 = vunpack.c.l.b16 %v4020
        %v4309 = vunpack.c.l.b16 %v4021
        %v4310 = vunpack.c.l.b16 %v4022
        %v4311 = vunpack.c.l.b16 %v4023
        %v4312 = vunpack.c.l.b16 %v4024
        %v4313 = vunpack.c.l.b16 %v4025
        %v4314 = vunpack.c.l.b16 %v4026
        %v4315 = vunpack.c.l.b16 %v4027
        %v4316 = vunpack.c.l.b16 %v4028
        %v4317 = vunpack.c.l.b16 %v4029
        %v4318 = vunpack.c.l.b16 %v4030
        %v4319 = vunpack.c.l.b16 %v4031
        %v4320 = vunpack.c.l.b16 %v4032
        %v4321 = vunpack.c.l.b16 %v4033
        %v4322 = vunpack.c.l.b16 %v4034
        %v4323 = vunpack.c.l.b16 %v4035
        %v4324 = vunpack.c.l.b16 %v4036
        %v4325 = vunpack.c.l.b16 %v4037
        %v4326 = vunpack.c.l.b16 %v4038
        %v4327 = vunpack.c.l.b16 %v4039
        %v4328 = vpack.c.b16 %v4185, %v4184
        %v4329 = vpack.c.b16 %v4187, %v4186
        %v4330 = vpack.c.b16 %v4189, %v4188
        %v4331 = vpack.c.b16 %v4191, %v4190
        %v4332 = vpack.c.b16 %v4193, %v4192
        %v4333 = vpack.c.b16 %v4195, %v4194
        %v4334 = vpack.c.b16 %v4197, %v4196
        %v4335 = vpack.c.b16 %v4199, %v4198
        %v4336 = vpack.c.b16 %v4201, %v4200
        %v4337 = vpack.c.b16 %v4203, %v4202
        %v4338 = vpack.c.b16 %v4205, %v4204
        %v4339 = vpack.c.b16 %v4207, %v4206
        %v4340 = vpack.c.b16 %v4209, %v4208
        %v4341 = vpack.c.b16 %v4211, %v4210
        %v4342 = vpack.c.b16 %v4213, %v4212
        %v4343 = vpack.c.b16 %v4215, %v4214
        %v4344 = vpack.c.b16 %v4217, %v4216
        %v4345 = vpack.c.b16 %v4219, %v4218
        %v4346 = vpack.c.b16 %v4221, %v4220
        %v4347 = vpack.c.b16 %v4223, %v4222
        %v4348 = vpack.c.b16 %v4225, %v4224
        %v4349 = vpack.c.b16 %v4227, %v4226
        %v4350 = vpack.c.b16 %v4229, %v4228
        %v4351 = vpack.c.b16 %v4231, %v4230
        %v4352 = vpack.c.b16 %v4233, %v4232
        %v4353 = vpack.c.b16 %v4235, %v4234
        %v4354 = vpack.c.b16 %v4237, %v4236
        %v4355 = vpack.c.b16 %v4239, %v4238
        %v4356 = vpack.c.b16 %v4241, %v4240
        %v4357 = vpack.c.b16 %v4243, %v4242
        %v4358 = vpack.c.b16 %v4245, %v4244
        %v4359 = vpack.c.b16 %v4247, %v4246
        %v4360 = vpack.c.b16 %v4249, %v4248
        %v4361 = vpack.c.b16 %v4251, %v4250
        %v4362 = vpack.c.b16 %v4253, %v4252
        %v4363 = vpack.c.b16 %v4255, %v4254
        %v4364 = vpack.c.b16 %v4257, %v4256
        %v4365 = vpack.c.b16 %v4259, %v4258
        %v4366 = vpack.c.b16 %v4261, %v4260
        %v4367 = vpack.c.b16 %v4263, %v4262
        %v4368 = vpack.c.b16 %v4265, %v4264
        %v4369 = vpack.c.b16 %v4267, %v4266
        %v4370 = vpack.c.b16 %v4269, %v4268
        %v4371 = vpack.c.b16 %v4271, %v4270
        %v4372 = vpack.c.b16 %v4273, %v4272
        %v4373 = vpack.c.b16 %v4275, %v4274
        %v4374 = vpack.c.b16 %v4277, %v4276
        %v4375 = vpack.c.b16 %v4279, %v4278
        %v4376 = vpack.c.b16 %v4281, %v4280
        %v4377 = vpack.c.b16 %v4283, %v4282
        %v4378 = vpack.c.b16 %v4285, %v4284
        %v4379 = vpack.c.b16 %v4287, %v4286
        %v4380 = vpack.c.b16 %v4289, %v4288
        %v4381 = vpack.c.b16 %v4291, %v4290
        %v4382 = vpack.c.b16 %v4293, %v4292
        %v4383 = vpack.c.b16 %v4295, %v4294
        %v4384 = vpack.c.b16 %v4297, %v4296
        %v4385 = vpack.c.b16 %v4299, %v4298
        %v4386 = vpack.c.b16 %v4301, %v4300
        %v4387 = vpack.c.b16 %v4303, %v4302
        %v4388 = vpack.c.b16 %v4305, %v4304
        %v4389 = vpack.c.b16 %v4307, %v4306
        %v4390 = vpack.c.b16 %v4309, %v4308
        %v4391 = vpack.c.b16 %v4311, %v4310
        %v4392 = vpack.c.b16 %v4313, %v4312
        %v4393 = vpack.c.b16 %v4315, %v4314
        %v4394 = vpack.c.b16 %v4317, %v4316
        %v4395 = vpack.c.b16 %v4319, %v4318
        %v4396 = vpack.c.b16 %v4321, %v4320
        %v4397 = vpack.c.b16 %v4323, %v4322
        %v4398 = vpack.c.b16 %v4325, %v4324
        %v4399 = vpack.c.b16 %v4327, %v4326
        %4472 = vmatprep.subr.bf16.mxu0 0
        %4473 = vmatpush1.bf16.msra.mxu0 %v4328
        %4474 = vmatprep.subr.bf16.mxu0 0
        %4475 = vmatpush1.bf16.msra.mxu0 %v4329
        %4476 = vmatprep.subr.bf16.mxu0 0
        %4477 = vmatpush1.bf16.msra.mxu0 %v4330
        %4478 = vmatprep.subr.bf16.mxu0 0
        %4479 = vmatpush1.bf16.msra.mxu0 %v4331
        %4480 = vmatprep.subr.bf16.mxu0 0
        %4481 = vmatpush1.bf16.msra.mxu0 %v4332
        %4482 = vmatprep.subr.bf16.mxu0 0
        %4483 = vmatpush1.bf16.msra.mxu0 %v4333
        %4484 = vmatprep.subr.bf16.mxu0 0
        %4485 = vmatpush1.bf16.msra.mxu0 %v4334
        %4486 = vmatprep.subr.bf16.mxu0 0
        %4487 = vmatpush1.bf16.msra.mxu0 %v4335
        %4488 = vmatprep.subr.bf16.mxu0 0
        %4489 = vmatpush1.bf16.msra.mxu0 %v4336
        %4490 = vmatprep.subr.bf16.mxu0 0
        %4491 = vmatpush1.bf16.msra.mxu0 %v4337
        %4492 = vmatprep.subr.bf16.mxu0 0
        %4493 = vmatpush1.bf16.msra.mxu0 %v4338
        %4494 = vmatprep.subr.bf16.mxu0 0
        %4495 = vmatpush1.bf16.msra.mxu0 %v4339
        %4496 = vmatprep.subr.bf16.mxu0 0
        %4497 = vmatpush1.bf16.msra.mxu0 %v4340
        %4498 = vmatprep.subr.bf16.mxu0 0
        %4499 = vmatpush1.bf16.msra.mxu0 %v4341
        %4500 = vmatprep.subr.bf16.mxu0 0
        %4501 = vmatpush1.bf16.msra.mxu0 %v4342
        %4502 = vmatprep.subr.bf16.mxu0 0
        %4503 = vmatpush1.bf16.msra.mxu0 %v4343
        %4504 = vmatprep.mubr.bf16.mxu0 %v3753
        %4505 = vmatmul.mubr.bf16.gmra.mrb[0].mxu0 %v3752
        %v4506 = vpop.f32.mrb[0].mxu0
        %v4507 = vadd.f32 0.0, %v4506
        %v4508 = vpop.f32.mrb[0].mxu0
        %v4509 = vpop.f32.mrb[0].mxu0
        %v4510 = vadd.f32 0.0, %v4509
        %v4511 = vpop.f32.mrb[0].mxu0
        %4512 = vmatprep.mubr.bf16.mxu0 %v3762
        %4513 = vmatmul.mubr.bf16.gmra.mrb[0].mxu0 %v3761
        %v4514 = vpop.f32.mrb[0].mxu0
        %v4515 = vadd.f32 0.0, %v4514
        %v4516 = vpop.f32.mrb[0].mxu0
        %v4517 = vpop.f32.mrb[0].mxu0
        %v4518 = vadd.f32 0.0, %v4517
        %v4519 = vpop.f32.mrb[0].mxu0
        %4520 = vmatprep.mubr.bf16.mxu0 %v3771
        %4521 = vmatmul.mubr.bf16.gmra.mrb[0].mxu0 %v3770
        %v4522 = vpop.f32.mrb[0].mxu0
        %v4523 = vadd.f32 0.0, %v4522
        %v4524 = vpop.f32.mrb[0].mxu0
        %v4525 = vpop.f32.mrb[0].mxu0
        %v4526 = vadd.f32 0.0, %v4525
        %v4527 = vpop.f32.mrb[0].mxu0
        %4528 = vmatprep.mubr.bf16.mxu0 %v3780
        %4529 = vmatmul.mubr.bf16.gmra.mrb[0].mxu0 %v3779
        %v4530 = vpop.f32.mrb[0].mxu0
        %v4531 = vadd.f32 0.0, %v4530
        %v4532 = vpop.f32.mrb[0].mxu0
        %v4533 = vpop.f32.mrb[0].mxu0
        %v4534 = vadd.f32 0.0, %v4533
        %v4535 = vpop.f32.mrb[0].mxu0
        %4536 = vmatprep.mubr.bf16.mxu0 %v3789
        %4537 = vmatmul.mubr.bf16.gmra.mrb[0].mxu0 %v3788
        %v4538 = vpop.f32.mrb[0].mxu0
        %v4539 = vadd.f32 0.0, %v4538
        %v4540 = vpop.f32.mrb[0].mxu0
        %v4541 = vpop.f32.mrb[0].mxu0
        %v4542 = vadd.f32 0.0, %v4541
        %v4543 = vpop.f32.mrb[0].mxu0
        %4544 = vmatprep.mubr.bf16.mxu0 %v3798
        %4545 = vmatmul.mubr.bf16.gmra.mrb[0].mxu0 %v3797
        %v4546 = vpop.f32.mrb[0].mxu0
        %v4547 = vadd.f32 0.0, %v4546
        %v4548 = vpop.f32.mrb[0].mxu0
        %v4549 = vpop.f32.mrb[0].mxu0
        %v4550 = vadd.f32 0.0, %v4549
        %v4551 = vpop.f32.mrb[0].mxu0
        %4552 = vmatprep.mubr.bf16.mxu0 %v3807
        %4553 = vmatmul.mubr.bf16.gmra.mrb[0].mxu0 %v3806
        %v4554 = vpop.f32.mrb[0].mxu0
        %v4555 = vadd.f32 0.0, %v4554
        %v4556 = vpop.f32.mrb[0].mxu0
        %v4557 = vpop.f32.mrb[0].mxu0
        %v4558 = vadd.f32 0.0, %v4557
        %v4559 = vpop.f32.mrb[0].mxu0
        %4560 = vmatprep.mubr.bf16.mxu0 %v3816
        %4561 = vmatmul.mubr.bf16.gmra.mrb[0].mxu0 %v3815
        %v4562 = vpop.f32.mrb[0].mxu0
        %v4563 = vadd.f32 0.0, %v4562
        %v4564 = vpop.f32.mrb[0].mxu0
        %v4565 = vpop.f32.mrb[0].mxu0
        %v4566 = vadd.f32 0.0, %v4565
        %v4567 = vpop.f32.mrb[0].mxu0
        %4568 = vmatprep.mubr.bf16.mxu0 %v3825
        %4569 = vmatmul.mubr.bf16.gmra.mrb[0].mxu0 %v3824
        %v4570 = vpop.f32.mrb[0].mxu0
        %v4571 = vadd.f32 0.0, %v4570
        %v4572 = vpop.f32.mrb[0].mxu0
        %v4573 = vpop.f32.mrb[0].mxu0
        %v4574 = vadd.f32 0.0, %v4573
        %v4575 = vpop.f32.mrb[0].mxu0
        %4576 = vmatprep.mubr.bf16.mxu0 %v3834
        %4577 = vmatmul.mubr.bf16.gmra.mrb[0].mxu0 %v3833
        %v4578 = vpop.f32.mrb[0].mxu0
        %v4579 = vadd.f32 0.0, %v4578
        %v4580 = vpop.f32.mrb[0].mxu0
        %v4581 = vpop.f32.mrb[0].mxu0
        %v4582 = vadd.f32 0.0, %v4581
        %v4583 = vpop.f32.mrb[0].mxu0
        %4584 = vmatprep.mubr.bf16.mxu0 %v3843
        %4585 = vmatmul.mubr.bf16.gmra.mrb[0].mxu0 %v3842
        %v4586 = vpop.f32.mrb[0].mxu0
        %v4587 = vadd.f32 0.0, %v4586
        %v4588 = vpop.f32.mrb[0].mxu0
        %v4589 = vpop.f32.mrb[0].mxu0
        %v4590 = vadd.f32 0.0, %v4589
        %v4591 = vpop.f32.mrb[0].mxu0
        %4592 = vmatprep.mubr.bf16.mxu0 %v3852
        %4593 = vmatmul.mubr.bf16.gmra.mrb[0].mxu0 %v3851
        %v4594 = vpop.f32.mrb[0].mxu0
        %v4595 = vadd.f32 0.0, %v4594
        %v4596 = vpop.f32.mrb[0].mxu0
        %v4597 = vpop.f32.mrb[0].mxu0
        %v4598 = vadd.f32 0.0, %v4597
        %v4599 = vpop.f32.mrb[0].mxu0
        %4600 = vmatprep.mubr.bf16.mxu0 %v3861
        %4601 = vmatmul.mubr.bf16.gmra.mrb[0].mxu0 %v3860
        %v4602 = vpop.f32.mrb[0].mxu0
        %v4603 = vadd.f32 0.0, %v4602
        %v4604 = vpop.f32.mrb[0].mxu0
        %v4605 = vpop.f32.mrb[0].mxu0
        %v4606 = vadd.f32 0.0, %v4605
        %v4607 = vpop.f32.mrb[0].mxu0
        %4608 = vmatprep.mubr.bf16.mxu0 %v3870
        %4609 = vmatmul.mubr.bf16.gmra.mrb[0].mxu0 %v3869
        %v4610 = vpop.f32.mrb[0].mxu0
        %v4611 = vadd.f32 0.0, %v4610
        %v4612 = vpop.f32.mrb[0].mxu0
        %v4613 = vpop.f32.mrb[0].mxu0
        %v4614 = vadd.f32 0.0, %v4613
        %v4615 = vpop.f32.mrb[0].mxu0
        %4616 = vmatprep.mubr.bf16.mxu0 %v3879
        %4617 = vmatmul.mubr.bf16.gmra.mrb[0].mxu0 %v3878
        %v4618 = vpop.f32.mrb[0].mxu0
        %v4619 = vadd.f32 0.0, %v4618
        %v4620 = vpop.f32.mrb[0].mxu0
        %v4621 = vpop.f32.mrb[0].mxu0
        %v4622 = vadd.f32 0.0, %v4621
        %v4623 = vpop.f32.mrb[0].mxu0
        %4624 = vmatprep.mubr.bf16.mxu0 %v3888
        %4625 = vmatmul.mubr.bf16.gmra.mrb[0].mxu0 %v3887
        %v4626 = vpop.f32.mrb[0].mxu0
        %v4627 = vadd.f32 0.0, %v4626
        %v4628 = vpop.f32.mrb[0].mxu0
        %v4629 = vpop.f32.mrb[0].mxu0
        %v4630 = vadd.f32 0.0, %v4629
        %v4631 = vpop.f32.mrb[0].mxu0
        %4632 = vdwg.mxu0
        %4633 = vmatprep.subr.bf16.mxu0 0
        %4634 = vmatpush1.bf16.msra.mxu0 %v4344
        %4635 = vmatprep.subr.bf16.mxu0 0
        %4636 = vmatpush1.bf16.msra.mxu0 %v4345
        %4637 = vmatprep.subr.bf16.mxu0 0
        %4638 = vmatpush1.bf16.msra.mxu0 %v4346
        %4639 = vmatprep.subr.bf16.mxu0 0
        %4640 = vmatpush1.bf16.msra.mxu0 %v4347
        %4641 = vmatprep.subr.bf16.mxu0 0
        %4642 = vmatpush1.bf16.msra.mxu0 %v4348
        %4643 = vmatprep.subr.bf16.mxu0 0
        %4644 = vmatpush1.bf16.msra.mxu0 %v4349
        %4645 = vmatprep.subr.bf16.mxu0 0
        %4646 = vmatpush1.bf16.msra.mxu0 %v4350
        %4647 = vmatprep.subr.bf16.mxu0 0
        %4648 = vmatpush1.bf16.msra.mxu0 %v4351
        %4649 = vmatprep.subr.bf16.mxu0 0
        %4650 = vmatpush1.bf16.msra.mxu0 %v4352
        %4651 = vmatprep.subr.bf16.mxu0 0
        %4652 = vmatpush1.bf16.msra.mxu0 %v4353
        %4653 = vmatprep.subr.bf16.mxu0 0
        %4654 = vmatpush1.bf16.msra.mxu0 %v4354
        %4655 = vmatprep.subr.bf16.mxu0 0
        %4656 = vmatpush1.bf16.msra.mxu0 %v4355
        %4657 = vmatprep.subr.bf16.mxu0 0
        %4658 = vmatpush1.bf16.msra.mxu0 %v4356
        %4659 = vmatprep.subr.bf16.mxu0 0
        %4660 = vmatpush1.bf16.msra.mxu0 %v4357
        %4661 = vmatprep.subr.bf16.mxu0 0
        %4662 = vmatpush1.bf16.msra.mxu0 %v4358
        %4663 = vmatprep.subr.bf16.mxu0 0
        %4664 = vmatpush1.bf16.msra.mxu0 %v4359
        %4665 = vmatprep.mubr.bf16.mxu0 %v3755
        %4666 = vmatmul.mubr.bf16.gmra.mrb[0].mxu0 %v3754
        %v4667 = vpop.f32.mrb[0].mxu0
        %v4668 = vadd.f32 %v4507, %v4667
        %v4669 = vpop.f32.mrb[0].mxu0
        %v4670 = vpop.f32.mrb[0].mxu0
        %v4671 = vadd.f32 %v4510, %v4670
        %v4672 = vpop.f32.mrb[0].mxu0
        %4673 = vmatprep.mubr.bf16.mxu0 %v3764
        %4674 = vmatmul.mubr.bf16.gmra.mrb[0].mxu0 %v3763
        %v4675 = vpop.f32.mrb[0].mxu0
        %v4676 = vadd.f32 %v4515, %v4675
        %v4677 = vpop.f32.mrb[0].mxu0
        %v4678 = vpop.f32.mrb[0].mxu0
        %v4679 = vadd.f32 %v4518, %v4678
        %v4680 = vpop.f32.mrb[0].mxu0
        %4681 = vmatprep.mubr.bf16.mxu0 %v3773
        %4682 = vmatmul.mubr.bf16.gmra.mrb[0].mxu0 %v3772
        %v4683 = vpop.f32.mrb[0].mxu0
        %v4684 = vadd.f32 %v4523, %v4683
        %v4685 = vpop.f32.mrb[0].mxu0
        %v4686 = vpop.f32.mrb[0].mxu0
        %v4687 = vadd.f32 %v4526, %v4686
        %v4688 = vpop.f32.mrb[0].mxu0
        %4689 = vmatprep.mubr.bf16.mxu0 %v3782
        %4690 = vmatmul.mubr.bf16.gmra.mrb[0].mxu0 %v3781
        %v4691 = vpop.f32.mrb[0].mxu0
        %v4692 = vadd.f32 %v4531, %v4691
        %v4693 = vpop.f32.mrb[0].mxu0
        %v4694 = vpop.f32.mrb[0].mxu0
        %v4695 = vadd.f32 %v4534, %v4694
        %v4696 = vpop.f32.mrb[0].mxu0
        %4697 = vmatprep.mubr.bf16.mxu0 %v3791
        %4698 = vmatmul.mubr.bf16.gmra.mrb[0].mxu0 %v3790
        %v4699 = vpop.f32.mrb[0].mxu0
        %v4700 = vadd.f32 %v4539, %v4699
        %v4701 = vpop.f32.mrb[0].mxu0
        %v4702 = vpop.f32.mrb[0].mxu0
        %v4703 = vadd.f32 %v4542, %v4702
        %v4704 = vpop.f32.mrb[0].mxu0
        %4705 = vmatprep.mubr.bf16.mxu0 %v3800
        %4706 = vmatmul.mubr.bf16.gmra.mrb[0].mxu0 %v3799
        %v4707 = vpop.f32.mrb[0].mxu0
        %v4708 = vadd.f32 %v4547, %v4707
        %v4709 = vpop.f32.mrb[0].mxu0
        %v4710 = vpop.f32.mrb[0].mxu0
        %v4711 = vadd.f32 %v4550, %v4710
        %v4712 = vpop.f32.mrb[0].mxu0
        %4713 = vmatprep.mubr.bf16.mxu0 %v3809
        %4714 = vmatmul.mubr.bf16.gmra.mrb[0].mxu0 %v3808
        %v4715 = vpop.f32.mrb[0].mxu0
        %v4716 = vadd.f32 %v4555, %v4715
        %v4717 = vpop.f32.mrb[0].mxu0
        %v4718 = vpop.f32.mrb[0].mxu0
        %v4719 = vadd.f32 %v4558, %v4718
        %v4720 = vpop.f32.mrb[0].mxu0
        %4721 = vmatprep.mubr.bf16.mxu0 %v3818
        %4722 = vmatmul.mubr.bf16.gmra.mrb[0].mxu0 %v3817
        %v4723 = vpop.f32.mrb[0].mxu0
        %v4724 = vadd.f32 %v4563, %v4723
        %v4725 = vpop.f32.mrb[0].mxu0
        %v4726 = vpop.f32.mrb[0].mxu0
        %v4727 = vadd.f32 %v4566, %v4726
        %v4728 = vpop.f32.mrb[0].mxu0
        %4729 = vmatprep.mubr.bf16.mxu0 %v3827
        %4730 = vmatmul.mubr.bf16.gmra.mrb[0].mxu0 %v3826
        %v4731 = vpop.f32.mrb[0].mxu0
        %v4732 = vadd.f32 %v4571, %v4731
        %v4733 = vpop.f32.mrb[0].mxu0
        %v4734 = vpop.f32.mrb[0].mxu0
        %v4735 = vadd.f32 %v4574, %v4734
        %v4736 = vpop.f32.mrb[0].mxu0
        %4737 = vmatprep.mubr.bf16.mxu0 %v3836
        %4738 = vmatmul.mubr.bf16.gmra.mrb[0].mxu0 %v3835
        %v4739 = vpop.f32.mrb[0].mxu0
        %v4740 = vadd.f32 %v4579, %v4739
        %v4741 = vpop.f32.mrb[0].mxu0
        %v4742 = vpop.f32.mrb[0].mxu0
        %v4743 = vadd.f32 %v4582, %v4742
        %v4744 = vpop.f32.mrb[0].mxu0
        %4745 = vmatprep.mubr.bf16.mxu0 %v3845
        %4746 = vmatmul.mubr.bf16.gmra.mrb[0].mxu0 %v3844
        %v4747 = vpop.f32.mrb[0].mxu0
        %v4748 = vadd.f32 %v4587, %v4747
        %v4749 = vpop.f32.mrb[0].mxu0
        %v4750 = vpop.f32.mrb[0].mxu0
        %v4751 = vadd.f32 %v4590, %v4750
        %v4752 = vpop.f32.mrb[0].mxu0
        %4753 = vmatprep.mubr.bf16.mxu0 %v3854
        %4754 = vmatmul.mubr.bf16.gmra.mrb[0].mxu0 %v3853
        %v4755 = vpop.f32.mrb[0].mxu0
        %v4756 = vadd.f32 %v4595, %v4755
        %v4757 = vpop.f32.mrb[0].mxu0
        %v4758 = vpop.f32.mrb[0].mxu0
        %v4759 = vadd.f32 %v4598, %v4758
        %v4760 = vpop.f32.mrb[0].mxu0
        %4761 = vmatprep.mubr.bf16.mxu0 %v3863
        %4762 = vmatmul.mubr.bf16.gmra.mrb[0].mxu0 %v3862
        %v4763 = vpop.f32.mrb[0].mxu0
        %v4764 = vadd.f32 %v4603, %v4763
        %v4765 = vpop.f32.mrb[0].mxu0
        %v4766 = vpop.f32.mrb[0].mxu0
        %v4767 = vadd.f32 %v4606, %v4766
        %v4768 = vpop.f32.mrb[0].mxu0
        %4769 = vmatprep.mubr.bf16.mxu0 %v3872
        %4770 = vmatmul.mubr.bf16.gmra.mrb[0].mxu0 %v3871
        %v4771 = vpop.f32.mrb[0].mxu0
        %v4772 = vadd.f32 %v4611, %v4771
        %v4773 = vpop.f32.mrb[0].mxu0
        %v4774 = vpop.f32.mrb[0].mxu0
        %v4775 = vadd.f32 %v4614, %v4774
        %v4776 = vpop.f32.mrb[0].mxu0
        %4777 = vmatprep.mubr.bf16.mxu0 %v3881
        %4778 = vmatmul.mubr.bf16.gmra.mrb[0].mxu0 %v3880
        %v4779 = vpop.f32.mrb[0].mxu0
        %v4780 = vadd.f32 %v4619, %v4779
        %v4781 = vpop.f32.mrb[0].mxu0
        %v4782 = vpop.f32.mrb[0].mxu0
        %v4783 = vadd.f32 %v4622, %v4782
        %v4784 = vpop.f32.mrb[0].mxu0
        %4785 = vmatprep.mubr.bf16.mxu0 %v3890
        %4786 = vmatmul.mubr.bf16.gmra.mrb[0].mxu0 %v3889
        %v4787 = vpop.f32.mrb[0].mxu0
        %v4788 = vadd.f32 %v4627, %v4787
        %v4789 = vpop.f32.mrb[0].mxu0
        %v4790 = vpop.f32.mrb[0].mxu0
        %v4791 = vadd.f32 %v4630, %v4790
        %v4792 = vpop.f32.mrb[0].mxu0
        %4793 = vdwg.mxu0
        %4794 = vmatprep.subr.bf16.mxu0 0
        %4795 = vmatpush1.bf16.msra.mxu0 %v4360
        %4796 = vmatprep.subr.bf16.mxu0 0
        %4797 = vmatpush1.bf16.msra.mxu0 %v4361
        %4798 = vmatprep.subr.bf16.mxu0 0
        %4799 = vmatpush1.bf16.msra.mxu0 %v4362
        %4800 = vmatprep.subr.bf16.mxu0 0
        %4801 = vmatpush1.bf16.msra.mxu0 %v4363
        %4802 = vmatprep.subr.bf16.mxu0 0
        %4803 = vmatpush1.bf16.msra.mxu0 %v4364
        %4804 = vmatprep.subr.bf16.mxu0 0
        %4805 = vmatpush1.bf16.msra.mxu0 %v4365
        %4806 = vmatprep.subr.bf16.mxu0 0
        %4807 = vmatpush1.bf16.msra.mxu0 %v4366
        %4808 = vmatprep.subr.bf16.mxu0 0
        %4809 = vmatpush1.bf16.msra.mxu0 %v4367
        %4810 = vmatprep.subr.bf16.mxu0 0
        %4811 = vmatpush1.bf16.msra.mxu0 %v4368
        %4812 = vmatprep.subr.bf16.mxu0 0
        %4813 = vmatpush1.bf16.msra.mxu0 %v4369
        %4814 = vmatprep.subr.bf16.mxu0 0
        %4815 = vmatpush1.bf16.msra.mxu0 %v4370
        %4816 = vmatprep.subr.bf16.mxu0 0
        %4817 = vmatpush1.bf16.msra.mxu0 %v4371
        %4818 = vmatprep.subr.bf16.mxu0 0
        %4819 = vmatpush1.bf16.msra.mxu0 %v4372
        %4820 = vmatprep.subr.bf16.mxu0 0
        %4821 = vmatpush1.bf16.msra.mxu0 %v4373
        %4822 = vmatprep.subr.bf16.mxu0 0
        %4823 = vmatpush1.bf16.msra.mxu0 %v4374
        %4824 = vmatprep.subr.bf16.mxu0 0
        %4825 = vmatpush1.bf16.msra.mxu0 %v4375
        %4826 = vmatprep.mubr.bf16.mxu0 %v3757
        %4827 = vmatmul.mubr.bf16.gmra.mrb[0].mxu0 %v3756
        %v4828 = vpop.f32.mrb[0].mxu0
        %v4829 = vadd.f32 %v4668, %v4828
        %v4830 = vpop.f32.mrb[0].mxu0
        %v4831 = vpop.f32.mrb[0].mxu0
        %v4832 = vadd.f32 %v4671, %v4831
        %v4833 = vpop.f32.mrb[0].mxu0
        %4834 = vmatprep.mubr.bf16.mxu0 %v3766
        %4835 = vmatmul.mubr.bf16.gmra.mrb[0].mxu0 %v3765
        %v4836 = vpop.f32.mrb[0].mxu0
        %v4837 = vadd.f32 %v4676, %v4836
        %v4838 = vpop.f32.mrb[0].mxu0
        %v4839 = vpop.f32.mrb[0].mxu0
        %v4840 = vadd.f32 %v4679, %v4839
        %v4841 = vpop.f32.mrb[0].mxu0
        %4842 = vmatprep.mubr.bf16.mxu0 %v3775
        %4843 = vmatmul.mubr.bf16.gmra.mrb[0].mxu0 %v3774
        %v4844 = vpop.f32.mrb[0].mxu0
        %v4845 = vadd.f32 %v4684, %v4844
        %v4846 = vpop.f32.mrb[0].mxu0
        %v4847 = vpop.f32.mrb[0].mxu0
        %v4848 = vadd.f32 %v4687, %v4847
        %v4849 = vpop.f32.mrb[0].mxu0
        %4850 = vmatprep.mubr.bf16.mxu0 %v3784
        %4851 = vmatmul.mubr.bf16.gmra.mrb[0].mxu0 %v3783
        %v4852 = vpop.f32.mrb[0].mxu0
        %v4853 = vadd.f32 %v4692, %v4852
        %v4854 = vpop.f32.mrb[0].mxu0
        %v4855 = vpop.f32.mrb[0].mxu0
        %v4856 = vadd.f32 %v4695, %v4855
        %v4857 = vpop.f32.mrb[0].mxu0
        %4858 = vmatprep.mubr.bf16.mxu0 %v3793
        %4859 = vmatmul.mubr.bf16.gmra.mrb[0].mxu0 %v3792
        %v4860 = vpop.f32.mrb[0].mxu0
        %v4861 = vadd.f32 %v4700, %v4860
        %v4862 = vpop.f32.mrb[0].mxu0
        %v4863 = vpop.f32.mrb[0].mxu0
        %v4864 = vadd.f32 %v4703, %v4863
        %v4865 = vpop.f32.mrb[0].mxu0
        %4866 = vmatprep.mubr.bf16.mxu0 %v3802
        %4867 = vmatmul.mubr.bf16.gmra.mrb[0].mxu0 %v3801
        %v4868 = vpop.f32.mrb[0].mxu0
        %v4869 = vadd.f32 %v4708, %v4868
        %v4870 = vpop.f32.mrb[0].mxu0
        %v4871 = vpop.f32.mrb[0].mxu0
        %v4872 = vadd.f32 %v4711, %v4871
        %v4873 = vpop.f32.mrb[0].mxu0
        %4874 = vmatprep.mubr.bf16.mxu0 %v3811
        %4875 = vmatmul.mubr.bf16.gmra.mrb[0].mxu0 %v3810
        %v4876 = vpop.f32.mrb[0].mxu0
        %v4877 = vadd.f32 %v4716, %v4876
        %v4878 = vpop.f32.mrb[0].mxu0
        %v4879 = vpop.f32.mrb[0].mxu0
        %v4880 = vadd.f32 %v4719, %v4879
        %v4881 = vpop.f32.mrb[0].mxu0
        %4882 = vmatprep.mubr.bf16.mxu0 %v3820
        %4883 = vmatmul.mubr.bf16.gmra.mrb[0].mxu0 %v3819
        %v4884 = vpop.f32.mrb[0].mxu0
        %v4885 = vadd.f32 %v4724, %v4884
        %v4886 = vpop.f32.mrb[0].mxu0
        %v4887 = vpop.f32.mrb[0].mxu0
        %v4888 = vadd.f32 %v4727, %v4887
        %v4889 = vpop.f32.mrb[0].mxu0
        %4890 = vmatprep.mubr.bf16.mxu0 %v3829
        %4891 = vmatmul.mubr.bf16.gmra.mrb[0].mxu0 %v3828
        %v4892 = vpop.f32.mrb[0].mxu0
        %v4893 = vadd.f32 %v4732, %v4892
        %v4894 = vpop.f32.mrb[0].mxu0
        %v4895 = vpop.f32.mrb[0].mxu0
        %v4896 = vadd.f32 %v4735, %v4895
        %v4897 = vpop.f32.mrb[0].mxu0
        %4898 = vmatprep.mubr.bf16.mxu0 %v3838
        %4899 = vmatmul.mubr.bf16.gmra.mrb[0].mxu0 %v3837
        %v4900 = vpop.f32.mrb[0].mxu0
        %v4901 = vadd.f32 %v4740, %v4900
        %v4902 = vpop.f32.mrb[0].mxu0
        %v4903 = vpop.f32.mrb[0].mxu0
        %v4904 = vadd.f32 %v4743, %v4903
        %v4905 = vpop.f32.mrb[0].mxu0
        %4906 = vmatprep.mubr.bf16.mxu0 %v3847
        %4907 = vmatmul.mubr.bf16.gmra.mrb[0].mxu0 %v3846
        %v4908 = vpop.f32.mrb[0].mxu0
        %v4909 = vadd.f32 %v4748, %v4908
        %v4910 = vpop.f32.mrb[0].mxu0
        %v4911 = vpop.f32.mrb[0].mxu0
        %v4912 = vadd.f32 %v4751, %v4911
        %v4913 = vpop.f32.mrb[0].mxu0
        %4914 = vmatprep.mubr.bf16.mxu0 %v3856
        %4915 = vmatmul.mubr.bf16.gmra.mrb[0].mxu0 %v3855
        %v4916 = vpop.f32.mrb[0].mxu0
        %v4917 = vadd.f32 %v4756, %v4916
        %v4918 = vpop.f32.mrb[0].mxu0
        %v4919 = vpop.f32.mrb[0].mxu0
        %v4920 = vadd.f32 %v4759, %v4919
        %v4921 = vpop.f32.mrb[0].mxu0
        %4922 = vmatprep.mubr.bf16.mxu0 %v3865
        %4923 = vmatmul.mubr.bf16.gmra.mrb[0].mxu0 %v3864
        %v4924 = vpop.f32.mrb[0].mxu0
        %v4925 = vadd.f32 %v4764, %v4924
        %v4926 = vpop.f32.mrb[0].mxu0
        %v4927 = vpop.f32.mrb[0].mxu0
        %v4928 = vadd.f32 %v4767, %v4927
        %v4929 = vpop.f32.mrb[0].mxu0
        %4930 = vmatprep.mubr.bf16.mxu0 %v3874
        %4931 = vmatmul.mubr.bf16.gmra.mrb[0].mxu0 %v3873
        %v4932 = vpop.f32.mrb[0].mxu0
        %v4933 = vadd.f32 %v4772, %v4932
        %v4934 = vpop.f32.mrb[0].mxu0
        %v4935 = vpop.f32.mrb[0].mxu0
        %v4936 = vadd.f32 %v4775, %v4935
        %v4937 = vpop.f32.mrb[0].mxu0
        %4938 = vmatprep.mubr.bf16.mxu0 %v3883
        %4939 = vmatmul.mubr.bf16.gmra.mrb[0].mxu0 %v3882
        %v4940 = vpop.f32.mrb[0].mxu0
        %v4941 = vadd.f32 %v4780, %v4940
        %v4942 = vpop.f32.mrb[0].mxu0
        %v4943 = vpop.f32.mrb[0].mxu0
        %v4944 = vadd.f32 %v4783, %v4943
        %v4945 = vpop.f32.mrb[0].mxu0
        %4946 = vmatprep.mubr.bf16.mxu0 %v3892
        %4947 = vmatmul.mubr.bf16.gmra.mrb[0].mxu0 %v3891
        %v4948 = vpop.f32.mrb[0].mxu0
        %v4949 = vadd.f32 %v4788, %v4948
        %v4950 = vpop.f32.mrb[0].mxu0
        %v4951 = vpop.f32.mrb[0].mxu0
        %v4952 = vadd.f32 %v4791, %v4951
        %v4953 = vpop.f32.mrb[0].mxu0
        %4954 = vdwg.mxu0
        %4955 = vmatprep.subr.bf16.mxu0 0
        %4956 = vmatpush1.bf16.msra.mxu0 %v4376
        %4957 = vmatprep.subr.bf16.mxu0 0
        %4958 = vmatpush1.bf16.msra.mxu0 %v4377
        %4959 = vmatprep.subr.bf16.mxu0 0
        %4960 = vmatpush1.bf16.msra.mxu0 %v4378
        %4961 = vmatprep.subr.bf16.mxu0 0
        %4962 = vmatpush1.bf16.msra.mxu0 %v4379
        %4963 = vmatprep.subr.bf16.mxu0 0
        %4964 = vmatpush1.bf16.msra.mxu0 %v4380
        %4965 = vmatprep.subr.bf16.mxu0 0
        %4966 = vmatpush1.bf16.msra.mxu0 %v4381
        %4967 = vmatprep.subr.bf16.mxu0 0
        %4968 = vmatpush1.bf16.msra.mxu0 %v4382
        %4969 = vmatprep.subr.bf16.mxu0 0
        %4970 = vmatpush1.bf16.msra.mxu0 %v4383
        %4971 = vmatprep.subr.bf16.mxu0 0
        %4972 = vmatpush1.bf16.msra.mxu0 %v4384
        %4973 = vmatprep.subr.bf16.mxu0 0
        %4974 = vmatpush1.bf16.msra.mxu0 %v4385
        %4975 = vmatprep.subr.bf16.mxu0 0
        %4976 = vmatpush1.bf16.msra.mxu0 %v4386
        %4977 = vmatprep.subr.bf16.mxu0 0
        %4978 = vmatpush1.bf16.msra.mxu0 %v4387
        %4979 = vmatprep.subr.bf16.mxu0 0
        %4980 = vmatpush1.bf16.msra.mxu0 %v4388
        %4981 = vmatprep.subr.bf16.mxu0 0
        %4982 = vmatpush1.bf16.msra.mxu0 %v4389
        %4983 = vmatprep.subr.bf16.mxu0 0
        %4984 = vmatpush1.bf16.msra.mxu0 %v4390
        %4985 = vmatprep.subr.bf16.mxu0 0
        %4986 = vmatpush1.bf16.msra.mxu0 %v4391
        %4987 = vmatprep.mubr.bf16.mxu0 %v3759
        %4988 = vmatmul.mubr.bf16.gmra.mrb[0].mxu0 %v3758
        %v4989 = vpop.f32.mrb[0].mxu0
        %v4990 = vadd.f32 %v4829, %v4989
        %v4991 = vpop.f32.mrb[0].mxu0
        %v4992 = vpop.f32.mrb[0].mxu0
        %v4993 = vadd.f32 %v4832, %v4992
        %v4994 = vpop.f32.mrb[0].mxu0
        %4995 = vmatprep.mubr.bf16.mxu0 %v3768
        %4996 = vmatmul.mubr.bf16.gmra.mrb[0].mxu0 %v3767
        %v4997 = vpop.f32.mrb[0].mxu0
        %v4998 = vadd.f32 %v4837, %v4997
        %v4999 = vpop.f32.mrb[0].mxu0
        %v5000 = vpop.f32.mrb[0].mxu0
        %v5001 = vadd.f32 %v4840, %v5000
        %v5002 = vpop.f32.mrb[0].mxu0
        %5003 = vmatprep.mubr.bf16.mxu0 %v3777
        %5004 = vmatmul.mubr.bf16.gmra.mrb[0].mxu0 %v3776
        %v5005 = vpop.f32.mrb[0].mxu0
        %v5006 = vadd.f32 %v4845, %v5005
        %v5007 = vpop.f32.mrb[0].mxu0
        %v5008 = vpop.f32.mrb[0].mxu0
        %v5009 = vadd.f32 %v4848, %v5008
        %v5010 = vpop.f32.mrb[0].mxu0
        %5011 = vmatprep.mubr.bf16.mxu0 %v3786
        %5012 = vmatmul.mubr.bf16.gmra.mrb[0].mxu0 %v3785
        %v5013 = vpop.f32.mrb[0].mxu0
        %v5014 = vadd.f32 %v4853, %v5013
        %v5015 = vpop.f32.mrb[0].mxu0
        %v5016 = vpop.f32.mrb[0].mxu0
        %v5017 = vadd.f32 %v4856, %v5016
        %v5018 = vpop.f32.mrb[0].mxu0
        %5019 = vmatprep.mubr.bf16.mxu0 %v3795
        %5020 = vmatmul.mubr.bf16.gmra.mrb[0].mxu0 %v3794
        %v5021 = vpop.f32.mrb[0].mxu0
        %v5022 = vadd.f32 %v4861, %v5021
        %v5023 = vpop.f32.mrb[0].mxu0
        %v5024 = vpop.f32.mrb[0].mxu0
        %v5025 = vadd.f32 %v4864, %v5024
        %v5026 = vpop.f32.mrb[0].mxu0
        %5027 = vmatprep.mubr.bf16.mxu0 %v3804
        %5028 = vmatmul.mubr.bf16.gmra.mrb[0].mxu0 %v3803
        %v5029 = vpop.f32.mrb[0].mxu0
        %v5030 = vadd.f32 %v4869, %v5029
        %v5031 = vpop.f32.mrb[0].mxu0
        %v5032 = vpop.f32.mrb[0].mxu0
        %v5033 = vadd.f32 %v4872, %v5032
        %v5034 = vpop.f32.mrb[0].mxu0
        %5035 = vmatprep.mubr.bf16.mxu0 %v3813
        %5036 = vmatmul.mubr.bf16.gmra.mrb[0].mxu0 %v3812
        %v5037 = vpop.f32.mrb[0].mxu0
        %v5038 = vadd.f32 %v4877, %v5037
        %v5039 = vpop.f32.mrb[0].mxu0
        %v5040 = vpop.f32.mrb[0].mxu0
        %v5041 = vadd.f32 %v4880, %v5040
        %v5042 = vpop.f32.mrb[0].mxu0
        %5043 = vmatprep.mubr.bf16.mxu0 %v3822
        %5044 = vmatmul.mubr.bf16.gmra.mrb[0].mxu0 %v3821
        %v5045 = vpop.f32.mrb[0].mxu0
        %v5046 = vadd.f32 %v4885, %v5045
        %v5047 = vpop.f32.mrb[0].mxu0
        %v5048 = vpop.f32.mrb[0].mxu0
        %v5049 = vadd.f32 %v4888, %v5048
        %v5050 = vpop.f32.mrb[0].mxu0
        %5051 = vmatprep.mubr.bf16.mxu0 %v3831
        %5052 = vmatmul.mubr.bf16.gmra.mrb[0].mxu0 %v3830
        %v5053 = vpop.f32.mrb[0].mxu0
        %v5054 = vadd.f32 %v4893, %v5053
        %v5055 = vpop.f32.mrb[0].mxu0
        %v5056 = vpop.f32.mrb[0].mxu0
        %v5057 = vadd.f32 %v4896, %v5056
        %v5058 = vpop.f32.mrb[0].mxu0
        %5059 = vmatprep.mubr.bf16.mxu0 %v3840
        %5060 = vmatmul.mubr.bf16.gmra.mrb[0].mxu0 %v3839
        %v5061 = vpop.f32.mrb[0].mxu0
        %v5062 = vadd.f32 %v4901, %v5061
        %v5063 = vpop.f32.mrb[0].mxu0
        %v5064 = vpop.f32.mrb[0].mxu0
        %v5065 = vadd.f32 %v4904, %v5064
        %v5066 = vpop.f32.mrb[0].mxu0
        %5067 = vmatprep.mubr.bf16.mxu0 %v3849
        %5068 = vmatmul.mubr.bf16.gmra.mrb[0].mxu0 %v3848
        %v5069 = vpop.f32.mrb[0].mxu0
        %v5070 = vadd.f32 %v4909, %v5069
        %v5071 = vpop.f32.mrb[0].mxu0
        %v5072 = vpop.f32.mrb[0].mxu0
        %v5073 = vadd.f32 %v4912, %v5072
        %v5074 = vpop.f32.mrb[0].mxu0
        %5075 = vmatprep.mubr.bf16.mxu0 %v3858
        %5076 = vmatmul.mubr.bf16.gmra.mrb[0].mxu0 %v3857
        %v5077 = vpop.f32.mrb[0].mxu0
        %v5078 = vadd.f32 %v4917, %v5077
        %v5079 = vpop.f32.mrb[0].mxu0
        %v5080 = vpop.f32.mrb[0].mxu0
        %v5081 = vadd.f32 %v4920, %v5080
        %v5082 = vpop.f32.mrb[0].mxu0
        %5083 = vmatprep.mubr.bf16.mxu0 %v3867
        %5084 = vmatmul.mubr.bf16.gmra.mrb[0].mxu0 %v3866
        %v5085 = vpop.f32.mrb[0].mxu0
        %v5086 = vadd.f32 %v4925, %v5085
        %v5087 = vpop.f32.mrb[0].mxu0
        %v5088 = vpop.f32.mrb[0].mxu0
        %v5089 = vadd.f32 %v4928, %v5088
        %v5090 = vpop.f32.mrb[0].mxu0
        %5091 = vmatprep.mubr.bf16.mxu0 %v3876
        %5092 = vmatmul.mubr.bf16.gmra.mrb[0].mxu0 %v3875
        %v5093 = vpop.f32.mrb[0].mxu0
        %v5094 = vadd.f32 %v4933, %v5093
        %v5095 = vpop.f32.mrb[0].mxu0
        %v5096 = vpop.f32.mrb[0].mxu0
        %v5097 = vadd.f32 %v4936, %v5096
        %v5098 = vpop.f32.mrb[0].mxu0
        %5099 = vmatprep.mubr.bf16.mxu0 %v3885
        %5100 = vmatmul.mubr.bf16.gmra.mrb[0].mxu0 %v3884
        %v5101 = vpop.f32.mrb[0].mxu0
        %v5102 = vadd.f32 %v4941, %v5101
        %v5103 = vpop.f32.mrb[0].mxu0
        %v5104 = vpop.f32.mrb[0].mxu0
        %v5105 = vadd.f32 %v4944, %v5104
        %v5106 = vpop.f32.mrb[0].mxu0
        %5107 = vmatprep.mubr.bf16.mxu0 %v3894
        %5108 = vmatmul.mubr.bf16.gmra.mrb[0].mxu0 %v3893
        %v5109 = vpop.f32.mrb[0].mxu0
        %v5110 = vadd.f32 %v4949, %v5109
        %v5111 = vpop.f32.mrb[0].mxu0
        %v5112 = vpop.f32.mrb[0].mxu0
        %v5113 = vadd.f32 %v4952, %v5112
        %v5114 = vpop.f32.mrb[0].mxu0
        %5115 = vdwg.mxu0
        %5116 = vmatprep.subr.bf16.mxu0 0
        %5117 = vmatpush1.bf16.msra.mxu0 %v4392
        %5118 = vmatprep.subr.bf16.mxu0 0
        %5119 = vmatpush1.bf16.msra.mxu0 %v4393
        %5120 = vmatprep.subr.bf16.mxu0 0
        %5121 = vmatpush1.bf16.msra.mxu0 %v4394
        %5122 = vmatprep.subr.bf16.mxu0 0
        %5123 = vmatpush1.bf16.msra.mxu0 %v4395
        %5124 = vmatprep.subr.bf16.mxu0 0
        %5125 = vmatpush1.bf16.msra.mxu0 %v4396
        %5126 = vmatprep.subr.bf16.mxu0 0
        %5127 = vmatpush1.bf16.msra.mxu0 %v4397
        %5128 = vmatprep.subr.bf16.mxu0 0
        %5129 = vmatpush1.bf16.msra.mxu0 %v4398
        %5130 = vmatprep.subr.bf16.mxu0 0
        %5131 = vmatpush1.bf16.msra.mxu0 %v4399
        %5132 = vmatprep.subr.bf16.mxu0 0
        %5133 = vmatpush1.bf16.msra.mxu0 0
        %5134 = vmatprep.subr.bf16.mxu0 0
        %5135 = vmatpush1.bf16.msra.mxu0 0
        %5136 = vmatprep.subr.bf16.mxu0 0
        %5137 = vmatpush1.bf16.msra.mxu0 0
        %5138 = vmatprep.subr.bf16.mxu0 0
        %5139 = vmatpush1.bf16.msra.mxu0 0
        %5140 = vmatprep.subr.bf16.mxu0 0
        %5141 = vmatpush1.bf16.msra.mxu0 0
        %5142 = vmatprep.subr.bf16.mxu0 0
        %5143 = vmatpush1.bf16.msra.mxu0 0
        %5144 = vmatprep.subr.bf16.mxu0 0
        %5145 = vmatpush1.bf16.msra.mxu0 0
        %5146 = vmatprep.subr.bf16.mxu0 0
        %5147 = vmatpush1.bf16.msra.mxu0 0
        %5148 = vmatprep.mubr.bf16.mxu0 0
        %5149 = vmatmul.mubr.bf16.gmra.mrb[0].mxu0 %v3760
        %v5150 = vpop.f32.mrb[0].mxu0
        %v5151 = vadd.f32 %v4990, %v5150
        %v5152 = vpop.f32.mrb[0].mxu0
        %v5153 = vpop.f32.mrb[0].mxu0
        %v5154 = vadd.f32 %v4993, %v5153
        %v5155 = vpop.f32.mrb[0].mxu0
        %5156 = vmatprep.mubr.bf16.mxu0 0
        %5157 = vmatmul.mubr.bf16.gmra.mrb[0].mxu0 %v3769
        %v5158 = vpop.f32.mrb[0].mxu0
        %v5159 = vadd.f32 %v4998, %v5158
        %v5160 = vpop.f32.mrb[0].mxu0
        %v5161 = vpop.f32.mrb[0].mxu0
        %v5162 = vadd.f32 %v5001, %v5161
        %v5163 = vpop.f32.mrb[0].mxu0
        %5164 = vmatprep.mubr.bf16.mxu0 0
        %5165 = vmatmul.mubr.bf16.gmra.mrb[0].mxu0 %v3778
        %v5166 = vpop.f32.mrb[0].mxu0
        %v5167 = vadd.f32 %v5006, %v5166
        %v5168 = vpop.f32.mrb[0].mxu0
        %v5169 = vpop.f32.mrb[0].mxu0
        %v5170 = vadd.f32 %v5009, %v5169
        %v5171 = vpop.f32.mrb[0].mxu0
        %5172 = vmatprep.mubr.bf16.mxu0 0
        %5173 = vmatmul.mubr.bf16.gmra.mrb[0].mxu0 %v3787
        %v5174 = vpop.f32.mrb[0].mxu0
        %v5175 = vadd.f32 %v5014, %v5174
        %v5176 = vpop.f32.mrb[0].mxu0
        %v5177 = vpop.f32.mrb[0].mxu0
        %v5178 = vadd.f32 %v5017, %v5177
        %v5179 = vpop.f32.mrb[0].mxu0
        %5180 = vmatprep.mubr.bf16.mxu0 0
        %5181 = vmatmul.mubr.bf16.gmra.mrb[0].mxu0 %v3796
        %v5182 = vpop.f32.mrb[0].mxu0
        %v5183 = vadd.f32 %v5022, %v5182
        %v5184 = vpop.f32.mrb[0].mxu0
        %v5185 = vpop.f32.mrb[0].mxu0
        %v5186 = vadd.f32 %v5025, %v5185
        %v5187 = vpop.f32.mrb[0].mxu0
        %5188 = vmatprep.mubr.bf16.mxu0 0
        %5189 = vmatmul.mubr.bf16.gmra.mrb[0].mxu0 %v3805
        %v5190 = vpop.f32.mrb[0].mxu0
        %v5191 = vadd.f32 %v5030, %v5190
        %v5192 = vpop.f32.mrb[0].mxu0
        %v5193 = vpop.f32.mrb[0].mxu0
        %v5194 = vadd.f32 %v5033, %v5193
        %v5195 = vpop.f32.mrb[0].mxu0
        %5196 = vmatprep.mubr.bf16.mxu0 0
        %5197 = vmatmul.mubr.bf16.gmra.mrb[0].mxu0 %v3814
        %v5198 = vpop.f32.mrb[0].mxu0
        %v5199 = vadd.f32 %v5038, %v5198
        %v5200 = vpop.f32.mrb[0].mxu0
        %v5201 = vpop.f32.mrb[0].mxu0
        %v5202 = vadd.f32 %v5041, %v5201
        %v5203 = vpop.f32.mrb[0].mxu0
        %5204 = vmatprep.mubr.bf16.mxu0 0
        %5205 = vmatmul.mubr.bf16.gmra.mrb[0].mxu0 %v3823
        %v5206 = vpop.f32.mrb[0].mxu0
        %v5207 = vadd.f32 %v5046, %v5206
        %v5208 = vpop.f32.mrb[0].mxu0
        %v5209 = vpop.f32.mrb[0].mxu0
        %v5210 = vadd.f32 %v5049, %v5209
        %v5211 = vpop.f32.mrb[0].mxu0
        %5212 = vmatprep.mubr.bf16.mxu0 0
        %5213 = vmatmul.mubr.bf16.gmra.mrb[0].mxu0 %v3832
        %v5214 = vpop.f32.mrb[0].mxu0
        %v5215 = vadd.f32 %v5054, %v5214
        %v5216 = vpop.f32.mrb[0].mxu0
        %v5217 = vpop.f32.mrb[0].mxu0
        %v5218 = vadd.f32 %v5057, %v5217
        %v5219 = vpop.f32.mrb[0].mxu0
        %5220 = vmatprep.mubr.bf16.mxu0 0
        %5221 = vmatmul.mubr.bf16.gmra.mrb[0].mxu0 %v3841
        %v5222 = vpop.f32.mrb[0].mxu0
        %v5223 = vadd.f32 %v5062, %v5222
        %v5224 = vpop.f32.mrb[0].mxu0
        %v5225 = vpop.f32.mrb[0].mxu0
        %v5226 = vadd.f32 %v5065, %v5225
        %v5227 = vpop.f32.mrb[0].mxu0
        %5228 = vmatprep.mubr.bf16.mxu0 0
        %5229 = vmatmul.mubr.bf16.gmra.mrb[0].mxu0 %v3850
        %v5230 = vpop.f32.mrb[0].mxu0
        %v5231 = vadd.f32 %v5070, %v5230
        %v5232 = vpop.f32.mrb[0].mxu0
        %v5233 = vpop.f32.mrb[0].mxu0
        %v5234 = vadd.f32 %v5073, %v5233
        %v5235 = vpop.f32.mrb[0].mxu0
        %5236 = vmatprep.mubr.bf16.mxu0 0
        %5237 = vmatmul.mubr.bf16.gmra.mrb[0].mxu0 %v3859
        %v5238 = vpop.f32.mrb[0].mxu0
        %v5239 = vadd.f32 %v5078, %v5238
        %v5240 = vpop.f32.mrb[0].mxu0
        %v5241 = vpop.f32.mrb[0].mxu0
        %v5242 = vadd.f32 %v5081, %v5241
        %v5243 = vpop.f32.mrb[0].mxu0
        %5244 = vmatprep.mubr.bf16.mxu0 0
        %5245 = vmatmul.mubr.bf16.gmra.mrb[0].mxu0 %v3868
        %v5246 = vpop.f32.mrb[0].mxu0
        %v5247 = vadd.f32 %v5086, %v5246
        %v5248 = vpop.f32.mrb[0].mxu0
        %v5249 = vpop.f32.mrb[0].mxu0
        %v5250 = vadd.f32 %v5089, %v5249
        %v5251 = vpop.f32.mrb[0].mxu0
        %5252 = vmatprep.mubr.bf16.mxu0 0
        %5253 = vmatmul.mubr.bf16.gmra.mrb[0].mxu0 %v3877
        %v5254 = vpop.f32.mrb[0].mxu0
        %v5255 = vadd.f32 %v5094, %v5254
        %v5256 = vpop.f32.mrb[0].mxu0
        %v5257 = vpop.f32.mrb[0].mxu0
        %v5258 = vadd.f32 %v5097, %v5257
        %v5259 = vpop.f32.mrb[0].mxu0
        %5260 = vmatprep.mubr.bf16.mxu0 0
        %5261 = vmatmul.mubr.bf16.gmra.mrb[0].mxu0 %v3886
        %v5262 = vpop.f32.mrb[0].mxu0
        %v5263 = vadd.f32 %v5102, %v5262
        %v5264 = vpop.f32.mrb[0].mxu0
        %v5265 = vpop.f32.mrb[0].mxu0
        %v5266 = vadd.f32 %v5105, %v5265
        %v5267 = vpop.f32.mrb[0].mxu0
        %5268 = vmatprep.mubr.bf16.mxu0 0
        %5269 = vmatmul.mubr.bf16.gmra.mrb[0].mxu0 %v3895
        %v5270 = vpop.f32.mrb[0].mxu0
        %v5271 = vadd.f32 %v5110, %v5270
        %v5272 = vpop.f32.mrb[0].mxu0
        %v5273 = vpop.f32.mrb[0].mxu0
        %v5274 = vadd.f32 %v5113, %v5273
        %v5275 = vpop.f32.mrb[0].mxu0
        %5276 = vdwg.mxu0
        %v5277 = vadd.f32 %v5151, %v5154
        %v5278 = vadd.f32 %v5277, %v5159
        %v5279 = vadd.f32 %v5278, %v5162
        %v5280 = vadd.f32 %v5279, %v5167
        %v5281 = vadd.f32 %v5280, %v5170
        %v5282 = vadd.f32 %v5281, %v5175
        %v5283 = vadd.f32 %v5282, %v5178
        %v5284 = vadd.f32 %v5283, %v5183
        %v5285 = vadd.f32 %v5284, %v5186
        %v5286 = vadd.f32 %v5285, %v5191
        %v5287 = vadd.f32 %v5286, %v5194
        %v5288 = vadd.f32 %v5287, %v5199
        %v5289 = vadd.f32 %v5288, %v5202
        %v5290 = vadd.f32 %v5289, %v5207
        %v5291 = vadd.f32 %v5290, %v5210
        %v5292 = vadd.f32 %v5291, %v5215
        %v5293 = vadd.f32 %v5292, %v5218
        %v5294 = vadd.f32 %v5293, %v5223
        %v5295 = vadd.f32 %v5294, %v5226
        %v5296 = vadd.f32 %v5295, %v5231
        %v5297 = vadd.f32 %v5296, %v5234
        %v5298 = vadd.f32 %v5297, %v5239
        %v5299 = vadd.f32 %v5298, %v5242
        %v5300 = vadd.f32 %v5299, %v5247
        %v5301 = vadd.f32 %v5300, %v5250
        %v5302 = vadd.f32 %v5301, %v5255
        %v5303 = vadd.f32 %v5302, %v5258
        %v5304 = vadd.f32 %v5303, %v5263
        %v5305 = vadd.f32 %v5304, %v5266
        %v5306 = vadd.f32 %v5305, %v5271
        %v5307 = vadd.f32 %v5306, %v5274
        %v5308 = vrot.slane %v5307, 4
        %v5309 = vadd.f32 %v5307, %v5308
        %v5310 = vrot.slane %v5309, 2
        %v5311 = vadd.f32 %v5309, %v5310
        %v5312 = vrot.slane %v5311, 1
        %v5313 = vadd.f32 %v5311, %v5312
        %v5314 = vmul.f32 %v5151, %v5151
        %v5315 = vmul.f32 %v5154, %v5154
        %v5316 = vmul.f32 %v5159, %v5159
        %v5317 = vmul.f32 %v5162, %v5162
        %v5318 = vmul.f32 %v5167, %v5167
        %v5319 = vmul.f32 %v5170, %v5170
        %v5320 = vmul.f32 %v5175, %v5175
        %v5321 = vmul.f32 %v5178, %v5178
        %v5322 = vmul.f32 %v5183, %v5183
        %v5323 = vmul.f32 %v5186, %v5186
        %v5324 = vmul.f32 %v5191, %v5191
        %v5325 = vmul.f32 %v5194, %v5194
        %v5326 = vmul.f32 %v5199, %v5199
        %v5327 = vmul.f32 %v5202, %v5202
        %v5328 = vmul.f32 %v5207, %v5207
        %v5329 = vmul.f32 %v5210, %v5210
        %v5330 = vmul.f32 %v5215, %v5215
        %v5331 = vmul.f32 %v5218, %v5218
        %v5332 = vmul.f32 %v5223, %v5223
        %v5333 = vmul.f32 %v5226, %v5226
        %v5334 = vmul.f32 %v5231, %v5231
        %v5335 = vmul.f32 %v5234, %v5234
        %v5336 = vmul.f32 %v5239, %v5239
        %v5337 = vmul.f32 %v5242, %v5242
        %v5338 = vmul.f32 %v5247, %v5247
        %v5339 = vmul.f32 %v5250, %v5250
        %v5340 = vmul.f32 %v5255, %v5255
        %v5341 = vmul.f32 %v5258, %v5258
        %v5342 = vmul.f32 %v5263, %v5263
        %v5343 = vmul.f32 %v5266, %v5266
        %v5344 = vmul.f32 %v5271, %v5271
        %v5345 = vmul.f32 %v5274, %v5274
        %v5346 = vadd.f32 %v5314, %v5315
        %v5347 = vadd.f32 %v5346, %v5316
        %v5348 = vadd.f32 %v5347, %v5317
        %v5349 = vadd.f32 %v5348, %v5318
        %v5350 = vadd.f32 %v5349, %v5319
        %v5351 = vadd.f32 %v5350, %v5320
        %v5352 = vadd.f32 %v5351, %v5321
        %v5353 = vadd.f32 %v5352, %v5322
        %v5354 = vadd.f32 %v5353, %v5323
        %v5355 = vadd.f32 %v5354, %v5324
        %v5356 = vadd.f32 %v5355, %v5325
        %v5357 = vadd.f32 %v5356, %v5326
        %v5358 = vadd.f32 %v5357, %v5327
        %v5359 = vadd.f32 %v5358, %v5328
        %v5360 = vadd.f32 %v5359, %v5329
        %v5361 = vadd.f32 %v5360, %v5330
        %v5362 = vadd.f32 %v5361, %v5331
        %v5363 = vadd.f32 %v5362, %v5332
        %v5364 = vadd.f32 %v5363, %v5333
        %v5365 = vadd.f32 %v5364, %v5334
        %v5366 = vadd.f32 %v5365, %v5335
        %v5367 = vadd.f32 %v5366, %v5336
        %v5368 = vadd.f32 %v5367, %v5337
        %v5369 = vadd.f32 %v5368, %v5338
        %v5370 = vadd.f32 %v5369, %v5339
        %v5371 = vadd.f32 %v5370, %v5340
        %v5372 = vadd.f32 %v5371, %v5341
        %v5373 = vadd.f32 %v5372, %v5342
        %v5374 = vadd.f32 %v5373, %v5343
        %v5375 = vadd.f32 %v5374, %v5344
        %v5376 = vadd.f32 %v5375, %v5345
        %v5377 = vrot.slane %v5376, 4
        %v5378 = vadd.f32 %v5376, %v5377
        %v5379 = vrot.slane %v5378, 2
        %v5380 = vadd.f32 %v5378, %v5379
        %v5381 = vrot.slane %v5380, 1
        %v5382 = vadd.f32 %v5380, %v5381
        %v5383 = vmul.f32 %v5313, 0.00390625
        %v5384 = vmul.f32 %v5382, 0.00390625
        %v5385 = vmul.f32 %v5383, %v5383
        %v5386 = vsub.f32 %v5384, %v5385
        %v5387 = vmax.f32 %v5386, 0.0
        %v5388 = vsub.f32 %v5151, %v5383
        %v5389 = vsub.f32 %v5154, %v5383
        %v5390 = vsub.f32 %v5159, %v5383
        %v5391 = vsub.f32 %v5162, %v5383
        %v5392 = vsub.f32 %v5167, %v5383
        %v5393 = vsub.f32 %v5170, %v5383
        %v5394 = vsub.f32 %v5175, %v5383
        %v5395 = vsub.f32 %v5178, %v5383
        %v5396 = vsub.f32 %v5183, %v5383
        %v5397 = vsub.f32 %v5186, %v5383
        %v5398 = vsub.f32 %v5191, %v5383
        %v5399 = vsub.f32 %v5194, %v5383
        %v5400 = vsub.f32 %v5199, %v5383
        %v5401 = vsub.f32 %v5202, %v5383
        %v5402 = vsub.f32 %v5207, %v5383
        %v5403 = vsub.f32 %v5210, %v5383
        %v5404 = vsub.f32 %v5215, %v5383
        %v5405 = vsub.f32 %v5218, %v5383
        %v5406 = vsub.f32 %v5223, %v5383
        %v5407 = vsub.f32 %v5226, %v5383
        %v5408 = vsub.f32 %v5231, %v5383
        %v5409 = vsub.f32 %v5234, %v5383
        %v5410 = vsub.f32 %v5239, %v5383
        %v5411 = vsub.f32 %v5242, %v5383
        %v5412 = vsub.f32 %v5247, %v5383
        %v5413 = vsub.f32 %v5250, %v5383
        %v5414 = vsub.f32 %v5255, %v5383
        %v5415 = vsub.f32 %v5258, %v5383
        %v5416 = vsub.f32 %v5263, %v5383
        %v5417 = vsub.f32 %v5266, %v5383
        %v5418 = vsub.f32 %v5271, %v5383
        %v5419 = vsub.f32 %v5274, %v5383
        %v5420 = vadd.f32 %v5387, 1e-05
        %v5421 = vrsqrt.pop %v5420
        %v5422 = vmul.f32 %v5388, %v5421
        %v5423 = vmul.f32 %v5389, %v5421
        %v5424 = vmul.f32 %v5390, %v5421
        %v5425 = vmul.f32 %v5391, %v5421
        %v5426 = vmul.f32 %v5392, %v5421
        %v5427 = vmul.f32 %v5393, %v5421
        %v5428 = vmul.f32 %v5394, %v5421
        %v5429 = vmul.f32 %v5395, %v5421
        %v5430 = vmul.f32 %v5396, %v5421
        %v5431 = vmul.f32 %v5397, %v5421
        %v5432 = vmul.f32 %v5398, %v5421
        %v5433 = vmul.f32 %v5399, %v5421
        %v5434 = vmul.f32 %v5400, %v5421
        %v5435 = vmul.f32 %v5401, %v5421
        %v5436 = vmul.f32 %v5402, %v5421
        %v5437 = vmul.f32 %v5403, %v5421
        %v5438 = vmul.f32 %v5404, %v5421
        %v5439 = vmul.f32 %v5405, %v5421
        %v5440 = vmul.f32 %v5406, %v5421
        %v5441 = vmul.f32 %v5407, %v5421
        %v5442 = vmul.f32 %v5408, %v5421
        %v5443 = vmul.f32 %v5409, %v5421
        %v5444 = vmul.f32 %v5410, %v5421
        %v5445 = vmul.f32 %v5411, %v5421
        %v5446 = vmul.f32 %v5412, %v5421
        %v5447 = vmul.f32 %v5413, %v5421
        %v5448 = vmul.f32 %v5414, %v5421
        %v5449 = vmul.f32 %v5415, %v5421
        %v5450 = vmul.f32 %v5416, %v5421
        %v5451 = vmul.f32 %v5417, %v5421
        %v5452 = vmul.f32 %v5418, %v5421
        %v5453 = vmul.f32 %v5419, %v5421
        %v5454 = vadd.f32 %v219, %v5422
        %v5455 = vadd.f32 %v220, %v5423
        %v5456 = vadd.f32 %v221, %v5424
        %v5457 = vadd.f32 %v222, %v5425
        %v5458 = vadd.f32 %v223, %v5426
        %v5459 = vadd.f32 %v224, %v5427
        %v5460 = vadd.f32 %v225, %v5428
        %v5461 = vadd.f32 %v226, %v5429
        %v5462 = vadd.f32 %v227, %v5430
        %v5463 = vadd.f32 %v228, %v5431
        %v5464 = vadd.f32 %v229, %v5432
        %v5465 = vadd.f32 %v230, %v5433
        %v5466 = vadd.f32 %v231, %v5434
        %v5467 = vadd.f32 %v232, %v5435
        %v5468 = vadd.f32 %v233, %v5436
        %v5469 = vadd.f32 %v234, %v5437
        %v5470 = vadd.f32 %v235, %v5438
        %v5471 = vadd.f32 %v236, %v5439
        %v5472 = vadd.f32 %v237, %v5440
        %v5473 = vadd.f32 %v238, %v5441
        %v5474 = vadd.f32 %v239, %v5442
        %v5475 = vadd.f32 %v240, %v5443
        %v5476 = vadd.f32 %v241, %v5444
        %v5477 = vadd.f32 %v242, %v5445
        %v5478 = vadd.f32 %v243, %v5446
        %v5479 = vadd.f32 %v244, %v5447
        %v5480 = vadd.f32 %v245, %v5448
        %v5481 = vadd.f32 %v246, %v5449
        %v5482 = vadd.f32 %v247, %v5450
        %v5483 = vadd.f32 %v248, %v5451
        %v5484 = vadd.f32 %v249, %v5452
        %v5485 = vadd.f32 %v250, %v5453
        %5486 = vst [vmem:[%s217] sm:$0xff] %v5454
        %5487 = vst [vmem:[%s217 + $0x8] sm:$0xff] %v5455
        %5488 = vst [vmem:[%s217 + $0x10] sm:$0xff] %v5456
        %5489 = vst [vmem:[%s217 + $0x18] sm:$0xff] %v5457
        %5490 = vst [vmem:[%s217 + $0x20] sm:$0xff] %v5458
        %5491 = vst [vmem:[%s217 + $0x28] sm:$0xff] %v5459
        %5492 = vst [vmem:[%s217 + $0x30] sm:$0xff] %v5460
        %5493 = vst [vmem:[%s217 + $0x38] sm:$0xff] %v5461
        %5494 = vst [vmem:[%s217 + $0x40] sm:$0xff] %v5462
        %5495 = vst [vmem:[%s217 + $0x48] sm:$0xff] %v5463
        %5496 = vst [vmem:[%s217 + $0x50] sm:$0xff] %v5464
        %5497 = vst [vmem:[%s217 + $0x58] sm:$0xff] %v5465
        %5498 = vst [vmem:[%s217 + $0x60] sm:$0xff] %v5466
        %5499 = vst [vmem:[%s217 + $0x68] sm:$0xff] %v5467
        %5500 = vst [vmem:[%s217 + $0x70] sm:$0xff] %v5468
        %5501 = vst [vmem:[%s217 + $0x78] sm:$0xff] %v5469
        %5502 = vst [vmem:[%s217 + $0x80] sm:$0xff] %v5470
        %5503 = vst [vmem:[%s217 + $0x88] sm:$0xff] %v5471
        %5504 = vst [vmem:[%s217 + $0x90] sm:$0xff] %v5472
        %5505 = vst [vmem:[%s217 + $0x98] sm:$0xff] %v5473
        %5506 = vst [vmem:[%s217 + $0xa0] sm:$0xff] %v5474
        %5507 = vst [vmem:[%s217 + $0xa8] sm:$0xff] %v5475
        %5508 = vst [vmem:[%s217 + $0xb0] sm:$0xff] %v5476
        %5509 = vst [vmem:[%s217 + $0xb8] sm:$0xff] %v5477
        %5510 = vst [vmem:[%s217 + $0xc0] sm:$0xff] %v5478
        %5511 = vst [vmem:[%s217 + $0xc8] sm:$0xff] %v5479
        %5512 = vst [vmem:[%s217 + $0xd0] sm:$0xff] %v5480
        %5513 = vst [vmem:[%s217 + $0xd8] sm:$0xff] %v5481
        %5514 = vst [vmem:[%s217 + $0xe0] sm:$0xff] %v5482
        %5515 = vst [vmem:[%s217 + $0xe8] sm:$0xff] %v5483
        %5516 = vst [vmem:[%s217 + $0xf0] sm:$0xff] %v5484
        %5517 = vst [vmem:[%s217 + $0xf8] sm:$0xff] %v5485
        %s5518 = sand.u32 %s97, 1
        %s5519 = scalar_lea.sflag [#allocation4], %s5518
        %s5520 = sand.u32 %s97, 1
        %s5521 = smul.addr %s5520, 256
        %s5522 = scalar_lea.vmem [#allocation8], %s5521
        // Predicated region
        $region45: #{tpu_custom_call.1} parent=31 // pred_check
          %p5523 = pneg %p107
        $region46: #{tpu_custom_call.1} parent=31 // pred_check_branch
          %5525 = sbr.rel (%p5523) target = $region48
        $region47: #{tpu_custom_call.1} parent=31 // pred_region
          %s5527 = ssub.s32 4096, 4096
          %5528 = vsyncadd %s5519, %s5527
          %s5529 = smul.addr %s21, 32
          %s5530 = smul.addr %s5529, 128
          %s5531 = scalar_lea.hbm %s3, %s5530
          %s5532 = sshll.u32 %s5522, 4
          %s5533 = int_to_ptr.vmem [resolvable:$true] %s5532
          %5538 = dma.vmem_to_hbm [thread:$0]  %s5533, 4096, %s5531, %s5519, 128, 128, 8
        $region48: #{tpu_custom_call.1} parent=31 // pred_fallthru
          _
      $region32: #{tpu_custom_call.1} parent=5 // pred_fallthru
        _
      %p5539 = scmp.le.s32.totalorder 2, %s16
      // Predicated region
      $region49: #{tpu_custom_call.1} parent=5 // pred_check
        %p5540 = pneg %p5539
      $region50: #{tpu_custom_call.1} parent=5 // pred_check_branch
        %5542 = sbr.rel (%p5540) target = $region52
      $region51: #{tpu_custom_call.1} parent=5 // pred_region
        %s5543 = ssub.s32 %s16, 2
        // Predicated region
        $region53: #{tpu_custom_call.1} parent=51 // pred_check
          %p5544 = pneg %p113
        $region54: #{tpu_custom_call.1} parent=51 // pred_check_branch
          %5546 = sbr.rel (%p5544) target = $region56
        $region55: #{tpu_custom_call.1} parent=51 // pred_region
          %s5547 = sand.u32 %s98, 1
          %s5548 = scalar_lea.sflag [#allocation4], %s5547
          %s5549 = sand.u32 %s98, 1
          %s5550 = smul.addr %s5549, 256
          %s5551 = scalar_lea.vmem [#allocation8], %s5550
          %5552 = dma.done %s5548, 4096
        $region56: #{tpu_custom_call.1} parent=51 // pred_fallthru
          _
      $region52: #{tpu_custom_call.1} parent=5 // pred_fallthru
        _
    $region6: #{tpu_custom_call.1} parent=1 // loop_footer
      %s20 = sadd.s32 1, %s16
    $region7: #{tpu_custom_call.1} parent=1 // loop_footer_branch
      %15 = sbr.rel target = $region3
    $region8: #{tpu_custom_call.1} parent=1 // loop_exit
      _
    %5553 = vsyncpa [#allocation3], 1
    %s5554 = scalar_lea.sflag [#allocation3], 1
    %5555 = vsyncpa %s5554, 1
    %5556 = vsyncpa [#allocation6], 1
    %5557 = vsyncpa [#allocation4], 1
    %s5558 = scalar_lea.sflag [#allocation4], 1
    %5559 = vsyncpa %s5558, 1

</llo_original>
